<compile_context>
chip_gen: v6e
topology: v6e:2x2x1
jax: 0.10.0
libtpu: 0.0.40
codegen_flags: <defaults>
</compile_context>

<pallas_src>
import math

import jax
import jax.numpy as jnp
from jax.experimental import pallas as pl
from jax.experimental.pallas import tpu as pltpu

# ----------------- small test configuration (consistent with the module) ----
B = 2              # batch
N1 = 8             # image-feature sequence length
E = 32             # embedding_dim   (proj_in input width)
D = 64             # dim
DIM_HEAD = 16
HEADS = 4
INNER = DIM_HEAD * HEADS      # 64
L = 8              # num_queries
OUT = 64           # output_dim
FF_INNER = 4 * D   # ff_mult = 4
T = 32             # timestep_in_dim (sinusoidal embedding width, even)
DEPTH = 2
EPS = 1e-5
KV = N1 + L        # kv sequence length per batch

# ----- packed-slab layout constants ------------------------------------------------
# f32 "vec" slab rows (width D == OUT)
ROWS_GLOBAL = 6          # bt1, bt2, bp, bpo, gno, bno
ROWS_PER_LAYER = 10      # g1, b1, g2, b2, gf, bf, bada(4 rows)
# bf16 global-weight slab row offsets (width D)
RG_WT1 = 0
RG_WT2 = T
RG_WP = T + D
RG_WPO = T + D + E
# bf16 per-layer slab lane offsets (rows = D)
C_QKV0, C_QKV1 = 0, 3 * INNER
C_WO0, C_WO1 = C_QKV1, C_QKV1 + D
C_WF10, C_WF11 = C_WO1, C_WO1 + FF_INNER
C_WADA0, C_WADA1 = C_WF11, C_WF11 + 4 * D
LAYER_SLAB_COLS = C_WADA1


# --------------------------------------------------------------------------
# small in-kernel helpers
# --------------------------------------------------------------------------
def _layernorm(v, g, b):
    mu = jnp.mean(v, axis=-1, keepdims=True)
    var = jnp.mean((v - mu) ** 2, axis=-1, keepdims=True)
    return (v - mu) * jax.lax.rsqrt(var + EPS) * g + b


def _silu(v):
    return v * jax.nn.sigmoid(v)


def _mm(a, w):
    """2-D matmul on the MXU: bf16 inputs, f32 accumulation."""
    return jnp.dot(a.astype(jnp.bfloat16), w.astype(jnp.bfloat16),
                   preferred_element_type=jnp.float32)


# --------------------------------------------------------------------------
# Fused kernel: sinusoid + timestep MLP + proj_in
#               + DEPTH x (adaLN + PerceiverAttention + FF) + proj_out + norm_out
# --------------------------------------------------------------------------
def fused_kernel(ts_ref, x_ref, lat0_ref, wg_ref, wl_ref, wf2_ref, vec_ref,
                 out_ref, temb_ref):
    f32 = jnp.float32
    bf16 = jnp.bfloat16

    # ---- packed f32 gammas / betas / biases ----
    vec = vec_ref[...]                                    # (ROWS_GLOBAL + DEPTH*10, D)

    def vrow(r):
        return vec[r:r + 1, :]

    bt1, bt2, bp = vrow(0), vrow(1), vrow(2)
    bpo, gno, bno = vrow(3), vrow(4), vrow(5)

    # ---- packed global bf16 matmul weights ----
    wg = wg_ref[...]                                      # (T+D+E+D, D)
    wt1 = wg[RG_WT1:RG_WT1 + T]
    wt2 = wg[RG_WT2:RG_WT2 + D]
    wp = wg[RG_WP:RG_WP + E]
    wpo = wg[RG_WPO:RG_WPO + D]

    # ---- in-kernel sinusoidal timestep embedding (diffusers Timesteps,
    #      flip_sin_to_cos=True, freq_shift=0) ----
    half = T // 2
    ts = ts_ref[0]                                                        # scalar f32
    idx = jax.lax.broadcasted_iota(jnp.int32, (1, half), 1).astype(f32)
    freqs = jnp.exp(idx * (-math.log(10000.0) / half))
    arg = ts * freqs                                                      # (1, half)
    tsin = jnp.concatenate([jnp.cos(arg), jnp.sin(arg)], axis=-1)         # (1, T)

    # ---- timestep-embedding MLP (once: timestep is a broadcast scalar) ----
    e1 = _silu(_mm(tsin, wt1) + bt1)
    temb = _mm(e1, wt2) + bt2                                             # (1, D)
    temb_ref[...] = temb.astype(temb_ref.dtype)

    # ---- proj_in + timestep broadcast-add (batch flattened into sublanes) ----
    xp = _mm(x_ref[...], wp) + bp + temb                                  # (B*N1, D)
    lat = lat0_ref[...]                                                   # (B*L, D)

    # ---- cross-batch softmax mask, built once from iota comparisons ----
    # kv rows: [all image rows (batch-major), all latent rows (batch-major)]
    row = jax.lax.broadcasted_iota(jnp.int32, (B * L, B * KV), 0)
    col = jax.lax.broadcasted_iota(jnp.int32, (B * L, B * KV), 1)
    same = None
    for b in range(B):
        row_in = (row >= b * L) & (row < (b + 1) * L)
        col_in = ((col >= b * N1) & (col < (b + 1) * N1)) | \
                 ((col >= B * N1 + b * L) & (col < B * N1 + (b + 1) * L))
        term = row_in & col_in
        same = term if same is None else (same | term)
    neg_bias = jnp.where(same, 0.0, -1e30).astype(f32)                    # (B*L, B*KV)

    sm_scale = 1.0 / math.sqrt(DIM_HEAD)

    for d in range(DEPTH):        # statically unrolled; weights DMA'd into VMEM once
        base = ROWS_GLOBAL + d * ROWS_PER_LAYER
        g1, b1 = vrow(base + 0), vrow(base + 1)
        g2, b2 = vrow(base + 2), vrow(base + 3)
        gf, bf = vrow(base + 4), vrow(base + 5)

        wl = wl_ref[d]                                    # (D, LAYER_SLAB_COLS) bf16
        wqkv = wl[:, C_QKV0:C_QKV1]                       # (D, 3*INNER)
        wo = wl[:, C_WO0:C_WO1]                           # (INNER, D)  (INNER == D)
        wf1 = wl[:, C_WF10:C_WF11]                        # (D, FF_INNER)
        wada = wl[:, C_WADA0:C_WADA1]                     # (D, 4*D)

        # adaLN modulation: Sequential(SiLU, Linear(dim, 4*dim)) on timestep_emb
        ada = _mm(_silu(temb), wada)                      # (1, 4D)
        shift_msa = ada[:, 0 * D:1 * D] + vrow(base + 6)
        scale_msa = ada[:, 1 * D:2 * D] + vrow(base + 7)
        shift_mlp = ada[:, 2 * D:3 * D] + vrow(base + 8)
        scale_mlp = ada[:, 3 * D:4 * D] + vrow(base + 9)

        # ---- PerceiverAttention ----
        xh = _layernorm(xp, g1, b1)                       # norm1(x)       (B*N1, D)
        lath = _layernorm(lat, g2, b2)                    # norm2(latents) (B*L, D)
        lath = lath * (1.0 + scale_msa) + shift_msa       # MSA modulation

        kv_in = jnp.concatenate([xh, lath], axis=0)       # (B*KV, D)
        # single fused [Wq|Wk|Wv] projection (192 output lanes); q for the xh rows is
        # free padding on the 256-wide MXU and simply discarded.
        qkv = _mm(kv_in, wqkv)                            # (B*KV, 3*INNER)
        q = qkv[B * N1:, 0 * INNER:1 * INNER]             # (B*L, INNER)  latent rows
        k = qkv[:, 1 * INNER:2 * INNER]                   # (B*KV, INNER)
        v = qkv[:, 2 * INNER:3 * INNER]                   # (B*KV, INNER)

        # per-head scores / softmax / PV with static lane slices; heads rejoined by
        # lane concat so to_out is a single (INNER, D) matmul.
        o_heads = []
        for h in range(HEADS):
            sl = slice(h * DIM_HEAD, (h + 1) * DIM_HEAD)
            qh = q[:, sl].astype(bf16)
            kh = k[:, sl].astype(bf16)
            vh = v[:, sl].astype(bf16)
            s = jax.lax.dot_general(qh, kh, (((1,), (1,)), ((), ())),
                                    preferred_element_type=f32)           # (B*L, B*KV)
            s = s * sm_scale + neg_bias
            s = s - jnp.max(s, axis=-1, keepdims=True)
            p = jnp.exp(s)
            p = p * pl.reciprocal(jnp.sum(p, axis=-1, keepdims=True), approx=True)
            o_heads.append(jnp.dot(p.astype(bf16), vh,
                                   preferred_element_type=f32))           # (B*L, dh)
        attn_o = jnp.concatenate(o_heads, axis=-1)        # (B*L, INNER)
        lat = _mm(attn_o, wo) + lat                       # to_out + residual

        # ---- FeedForward with MLP modulation after its LayerNorm ----
        hdn = _layernorm(lat, gf, bf)
        hdn = hdn * (1.0 + scale_mlp) + shift_mlp
        hdn = _mm(hdn, wf1)                               # (B*L, FF_INNER)
        hdn = jax.nn.gelu(hdn, approximate=True)          # tanh GELU -> EUP
        hdn = _mm(hdn, wf2_ref[d])                        # (B*L, D)
        lat = lat + hdn                                   # residual

    # ---- proj_out + norm_out ----
    y = _mm(lat, wpo) + bpo                               # (B*L, OUT)
    y = _layernorm(y, gno, bno)
    out_ref[...] = y.astype(out_ref.dtype)


def fused_forward_call(ts, x2, w):
    # No grid: the whole working set (<~1 MiB) fits in VMEM; one kernel invocation.
    return pl.pallas_call(
        fused_kernel,
        out_shape=(jax.ShapeDtypeStruct((B * L, OUT), jnp.float32),
                   jax.ShapeDtypeStruct((1, D), jnp.float32)),
        in_specs=[
            pl.BlockSpec(memory_space=pltpu.MemorySpace.SMEM),   # timestep scalar
            pl.BlockSpec(memory_space=pltpu.MemorySpace.VMEM),   # x2
            pl.BlockSpec(memory_space=pltpu.MemorySpace.VMEM),   # lat0
            pl.BlockSpec(memory_space=pltpu.MemorySpace.VMEM),   # global weight slab
            pl.BlockSpec(memory_space=pltpu.MemorySpace.VMEM),   # per-layer weight slab
            pl.BlockSpec(memory_space=pltpu.MemorySpace.VMEM),   # per-layer FF down-proj
            pl.BlockSpec(memory_space=pltpu.MemorySpace.VMEM),   # f32 vec slab
        ],
        out_specs=(pl.BlockSpec(memory_space=pltpu.MemorySpace.VMEM),
                   pl.BlockSpec(memory_space=pltpu.MemorySpace.VMEM)),
        compiler_params=pltpu.CompilerParams(vmem_limit_bytes=8 * 1024 * 1024),
    )(ts, x2, w["lat0"], w["w_glob"], w["w_layer"], w["w_f2"], w["vec"])


# --------------------------------------------------------------------------
# Parameters (deterministic synthetic init — matches shapes of __init__)
# --------------------------------------------------------------------------
def init_params(key):
    keys = iter(jax.random.split(key, 64))

    def nrm(shape, scale=0.05):
        return scale * jax.random.normal(next(keys), shape, jnp.float32)

    p = {
        "latents": jax.random.normal(next(keys), (1, L, D), jnp.float32) / math.sqrt(D),
        # TimestepEmbedding(timestep_in_dim -> dim), act='silu'
        "wt1": nrm((T, D)), "bt1": nrm((1, D)),
        "wt2": nrm((D, D)), "bt2": nrm((1, D)),
        # proj_in: Linear(embedding_dim, dim)
        "wp": nrm((E, D)), "bp": nrm((1, D)),
        # proj_out: Linear(dim, output_dim); norm_out: LayerNorm(output_dim)
        "wpo": nrm((D, OUT)), "bpo": nrm((1, OUT)),
        "gno": jnp.ones((1, OUT), jnp.float32), "bno": jnp.zeros((1, OUT), jnp.float32),
        "layers": [],
    }
    for _ in range(DEPTH):
        p["layers"].append(dict(
            g1=jnp.ones((1, D), jnp.float32), b1=jnp.zeros((1, D), jnp.float32),
            g2=jnp.ones((1, D), jnp.float32), b2=jnp.zeros((1, D), jnp.float32),
            wq=nrm((D, INNER)), wkv=nrm((D, 2 * INNER)), wo=nrm((INNER, D)),
            gf=jnp.ones((1, D), jnp.float32), bf=jnp.zeros((1, D), jnp.float32),
            wf1=nrm((D, FF_INNER)), wf2=nrm((FF_INNER, D)),
            wada=nrm((D, 4 * D)), bada=nrm((1, 4 * D)),
        ))
    return p


# --------------------------------------------------------------------------
# Wrapper-side weight staging (done ONCE per parameter set, not per forward call):
# packs everything into 5 slabs so the kernel prologue is a handful of DMAs.
# --------------------------------------------------------------------------
def pack_params(p):
    assert INNER == D and OUT == D, "slab packing assumes inner_dim == dim == output_dim"
    bf16 = jnp.bfloat16
    ls = p["layers"]

    # global bf16 slab: rows [wt1 ; wt2 ; wp ; wpo], all D lanes wide
    w_glob = jnp.concatenate([p["wt1"], p["wt2"], p["wp"], p["wpo"]], axis=0).astype(bf16)

    # per-layer bf16 slab: lanes [Wq | Wk | Wv | Wo | Wf1 | Wada], all D rows deep
    def layer_slab(lp):
        wq = lp["wq"]
        wk = lp["wkv"][:, :INNER]
        wv = lp["wkv"][:, INNER:]
        return jnp.concatenate([wq, wk, wv, lp["wo"], lp["wf1"], lp["wada"]], axis=1)

    w_layer = jnp.stack([layer_slab(lp) for lp in ls]).astype(bf16)   # (DEPTH, D, 768)
    w_f2 = jnp.stack([lp["wf2"] for lp in ls]).astype(bf16)           # (DEPTH, FF_INNER, D)

    # f32 vec slab (width D): global biases then per-layer gammas/betas/adaLN biases
    vec_rows = [p["bt1"], p["bt2"], p["bp"], p["bpo"], p["gno"], p["bno"]]
    for lp in ls:
        vec_rows += [lp["g1"], lp["b1"], lp["g2"], lp["b2"], lp["gf"], lp["bf"],
                     lp["bada"].reshape(4, D)]
    vec = jnp.concatenate(vec_rows, axis=0).astype(jnp.float32)

    lat0 = jnp.broadcast_to(p["latents"], (B, L, D)).reshape(B * L, D)

    return {"w_glob": w_glob, "w_layer": w_layer, "w_f2": w_f2,
            "vec": vec, "lat0": lat0}


# --------------------------------------------------------------------------
# Full TimeResampler forward (packed params are precomputed constants)
# --------------------------------------------------------------------------
def time_resampler_forward(x, timestep, packed, need_temb=False):
    assert x.shape == (B, N1, E)
    # TODO(synk): per-sample timesteps collapse to the first element (timestep is treated
    # as a broadcast scalar, which matches the module's typical scalar-timestep usage).
    ts = jnp.asarray(timestep, jnp.float32).reshape(-1)[:1]               # (1,)
    x2 = x.reshape(B * N1, E)

    out2, temb1 = fused_forward_call(ts, x2, packed)
    out = out2.reshape(B, L, OUT)
    temb = jnp.broadcast_to(temb1, (B, D))
    if need_temb:
        return out, temb
    return out


if __name__ == "__main__":
    key = jax.random.PRNGKey(0)
    pkey, xkey = jax.random.split(key)
    params = init_params(pkey)
    packed = pack_params(params)          # hoisted: computed once per parameter set
    packed = jax.tree_util.tree_map(jax.block_until_ready, packed)

    x = jax.random.normal(xkey, (B, N1, E), jnp.float32)
    timestep = 500.0

    out, temb = time_resampler_forward(x, timestep, packed, need_temb=True)
    out = jax.block_until_ready(out)
    temb = jax.block_until_ready(temb)

    assert out.shape == (B, L, OUT) and out.dtype == jnp.float32
    assert temb.shape == (B, D)
    assert bool(jnp.all(jnp.isfinite(out))) and bool(jnp.all(jnp.isfinite(temb)))
    print("KERNEL_OK")
</pallas_src>

<mosaic_0001>
module attributes {stable_mosaic.version = 11 : i64} {
  func.func @fused_kernel(%arg0: memref<1xf32, #tpu.memory_space<smem>>, %arg1: memref<16x32xf32, #tpu.memory_space<vmem>>, %arg2: memref<16x64xf32, #tpu.memory_space<vmem>>, %arg3: memref<192x64xbf16, #tpu.memory_space<vmem>>, %arg4: memref<2x64x768xbf16, #tpu.memory_space<vmem>>, %arg5: memref<2x256x64xbf16, #tpu.memory_space<vmem>>, %arg6: memref<26x64xf32, #tpu.memory_space<vmem>>, %arg7: memref<16x64xf32, #tpu.memory_space<vmem>>, %arg8: memref<1x64xf32, #tpu.memory_space<vmem>>) attributes {dimension_semantics = [], scalar_prefetch = 0 : i64, scratch_operands = 0 : i64, tpu.core_type = #tpu.core_type<tc>} {
    %c0 = arith.constant 0 : index
    %c0_0 = arith.constant 0 : index
    %0 = vector.load %arg6[%c0, %c0_0] : memref<26x64xf32, #tpu.memory_space<vmem>>, vector<26x64xf32>
    %1 = vector.extract_strided_slice %0 {offsets = [0, 0], sizes = [1, 64], strides = [1, 1]} : vector<26x64xf32> to vector<1x64xf32>
    %2 = vector.extract_strided_slice %0 {offsets = [1, 0], sizes = [1, 64], strides = [1, 1]} : vector<26x64xf32> to vector<1x64xf32>
    %3 = vector.extract_strided_slice %0 {offsets = [2, 0], sizes = [1, 64], strides = [1, 1]} : vector<26x64xf32> to vector<1x64xf32>
    %4 = vector.extract_strided_slice %0 {offsets = [3, 0], sizes = [1, 64], strides = [1, 1]} : vector<26x64xf32> to vector<1x64xf32>
    %5 = vector.extract_strided_slice %0 {offsets = [4, 0], sizes = [1, 64], strides = [1, 1]} : vector<26x64xf32> to vector<1x64xf32>
    %6 = vector.extract_strided_slice %0 {offsets = [5, 0], sizes = [1, 64], strides = [1, 1]} : vector<26x64xf32> to vector<1x64xf32>
    %c0_1 = arith.constant 0 : index
    %c0_2 = arith.constant 0 : index
    %7 = vector.load %arg3[%c0_1, %c0_2] : memref<192x64xbf16, #tpu.memory_space<vmem>>, vector<192x64xbf16>
    %8 = vector.extract_strided_slice %7 {offsets = [0, 0], sizes = [32, 64], strides = [1, 1]} : vector<192x64xbf16> to vector<32x64xbf16>
    %9 = vector.extract_strided_slice %7 {offsets = [32, 0], sizes = [64, 64], strides = [1, 1]} : vector<192x64xbf16> to vector<64x64xbf16>
    %10 = vector.extract_strided_slice %7 {offsets = [96, 0], sizes = [32, 64], strides = [1, 1]} : vector<192x64xbf16> to vector<32x64xbf16>
    %11 = vector.extract_strided_slice %7 {offsets = [128, 0], sizes = [64, 64], strides = [1, 1]} : vector<192x64xbf16> to vector<64x64xbf16>
    %c0_3 = arith.constant 0 : index
    %12 = memref.load %arg0[%c0_3] : memref<1xf32, #tpu.memory_space<smem>>
    %13 = tpu.iota {dimensions = array<i32: 1>} : vector<1x16xi32>
    %14 = arith.sitofp %13 : vector<1x16xi32> to vector<1x16xf32>
    %cst = arith.constant -0.575646281 : f32
    %15 = vector.broadcast %cst : f32 to vector<1x16xf32>
    %16 = arith.mulf %14, %15 : vector<1x16xf32>
    %17 = math.exp %16 : vector<1x16xf32>
    %18 = vector.broadcast %12 : f32 to vector<1x16xf32>
    %19 = arith.mulf %18, %17 : vector<1x16xf32>
    %20 = math.cos %19 : vector<1x16xf32>
    %21 = math.sin %19 : vector<1x16xf32>
    %22 = tpu.concatenate %20, %21 in 1 : vector<1x16xf32>, vector<1x16xf32> -> vector<1x32xf32>
    %23 = arith.truncf %22 : vector<1x32xf32> to vector<1x32xbf16>
    %cst_4 = arith.constant dense<0.000000e+00> : vector<1x64xf32>
    %24 = tpu.matmul %23, %8, %cst_4 {dimension_numbers = #tpu.dot_dimension_numbers<[1], [0], [0], [1], [0, 0, 1, 1], [], []>} : vector<1x32xbf16>, vector<32x64xbf16>, vector<1x64xf32> -> vector<1x64xf32>
    %25 = arith.addf %24, %1 : vector<1x64xf32>
    %26 = arith.negf %25 : vector<1x64xf32>
    %27 = math.exp %26 : vector<1x64xf32>
    %cst_5 = arith.constant 1.000000e+00 : f32
    %28 = vector.broadcast %cst_5 : f32 to vector<1x64xf32>
    %29 = arith.addf %28, %27 : vector<1x64xf32>
    %30 = arith.divf %28, %29 : vector<1x64xf32>
    %31 = arith.mulf %25, %30 : vector<1x64xf32>
    %32 = arith.truncf %31 : vector<1x64xf32> to vector<1x64xbf16>
    %cst_6 = arith.constant dense<0.000000e+00> : vector<1x64xf32>
    %33 = tpu.matmul %32, %9, %cst_6 {dimension_numbers = #tpu.dot_dimension_numbers<[1], [0], [0], [1], [0, 0, 1, 1], [], []>} : vector<1x64xbf16>, vector<64x64xbf16>, vector<1x64xf32> -> vector<1x64xf32>
    %34 = arith.addf %33, %2 : vector<1x64xf32>
    %c0_7 = arith.constant 0 : index
    %c0_8 = arith.constant 0 : index
    %35 = vector.load %arg8[%c0_7, %c0_8] : memref<1x64xf32, #tpu.memory_space<vmem>>, vector<1x64xf32>
    tpu.vector_store %arg8[%c0_7, %c0_8], %34 {strides = array<i32>} : memref<1x64xf32, #tpu.memory_space<vmem>>, vector<1x64xf32>,
    %c0_9 = arith.constant 0 : index
    %c0_10 = arith.constant 0 : index
    %36 = vector.load %arg1[%c0_9, %c0_10] : memref<16x32xf32, #tpu.memory_space<vmem>>, vector<16x32xf32>
    %37 = arith.truncf %36 : vector<16x32xf32> to vector<16x32xbf16>
    %cst_11 = arith.constant dense<0.000000e+00> : vector<16x64xf32>
    %38 = tpu.matmul %37, %10, %cst_11 {dimension_numbers = #tpu.dot_dimension_numbers<[1], [0], [0], [1], [0, 0, 1, 1], [], []>} : vector<16x32xbf16>, vector<32x64xbf16>, vector<16x64xf32> -> vector<16x64xf32>
    %39 = vector.broadcast %3 : vector<1x64xf32> to vector<16x64xf32>
    %40 = arith.addf %38, %39 : vector<16x64xf32>
    %41 = vector.broadcast %34 : vector<1x64xf32> to vector<16x64xf32>
    %42 = arith.addf %40, %41 : vector<16x64xf32>
    %c0_12 = arith.constant 0 : index
    %c0_13 = arith.constant 0 : index
    %43 = vector.load %arg2[%c0_12, %c0_13] : memref<16x64xf32, #tpu.memory_space<vmem>>, vector<16x64xf32>
    %44 = tpu.iota {dimensions = array<i32: 0>} : vector<16x32xi32>
    %45 = tpu.iota {dimensions = array<i32: 1>} : vector<16x32xi32>
    %c0_i32 = arith.constant 0 : i32
    %46 = vector.broadcast %c0_i32 : i32 to vector<16x32xi32>
    %47 = arith.cmpi sge, %44, %46 : vector<16x32xi32>
    %c8_i32 = arith.constant 8 : i32
    %48 = vector.broadcast %c8_i32 : i32 to vector<16x32xi32>
    %49 = arith.cmpi slt, %44, %48 : vector<16x32xi32>
    %50 = arith.andi %47, %49 : vector<16x32xi1>
    %c0_i32_14 = arith.constant 0 : i32
    %51 = vector.broadcast %c0_i32_14 : i32 to vector<16x32xi32>
    %52 = arith.cmpi sge, %45, %51 : vector<16x32xi32>
    %c8_i32_15 = arith.constant 8 : i32
    %53 = vector.broadcast %c8_i32_15 : i32 to vector<16x32xi32>
    %54 = arith.cmpi slt, %45, %53 : vector<16x32xi32>
    %55 = arith.andi %52, %54 : vector<16x32xi1>
    %c16_i32 = arith.constant 16 : i32
    %56 = vector.broadcast %c16_i32 : i32 to vector<16x32xi32>
    %57 = arith.cmpi sge, %45, %56 : vector<16x32xi32>
    %c24_i32 = arith.constant 24 : i32
    %58 = vector.broadcast %c24_i32 : i32 to vector<16x32xi32>
    %59 = arith.cmpi slt, %45, %58 : vector<16x32xi32>
    %60 = arith.andi %57, %59 : vector<16x32xi1>
    %61 = arith.ori %55, %60 : vector<16x32xi1>
    %62 = arith.andi %50, %61 : vector<16x32xi1>
    %c8_i32_16 = arith.constant 8 : i32
    %63 = vector.broadcast %c8_i32_16 : i32 to vector<16x32xi32>
    %64 = arith.cmpi sge, %44, %63 : vector<16x32xi32>
    %c16_i32_17 = arith.constant 16 : i32
    %65 = vector.broadcast %c16_i32_17 : i32 to vector<16x32xi32>
    %66 = arith.cmpi slt, %44, %65 : vector<16x32xi32>
    %67 = arith.andi %64, %66 : vector<16x32xi1>
    %c8_i32_18 = arith.constant 8 : i32
    %68 = vector.broadcast %c8_i32_18 : i32 to vector<16x32xi32>
    %69 = arith.cmpi sge, %45, %68 : vector<16x32xi32>
    %c16_i32_19 = arith.constant 16 : i32
    %70 = vector.broadcast %c16_i32_19 : i32 to vector<16x32xi32>
    %71 = arith.cmpi slt, %45, %70 : vector<16x32xi32>
    %72 = arith.andi %69, %71 : vector<16x32xi1>
    %c24_i32_20 = arith.constant 24 : i32
    %73 = vector.broadcast %c24_i32_20 : i32 to vector<16x32xi32>
    %74 = arith.cmpi sge, %45, %73 : vector<16x32xi32>
    %c32_i32 = arith.constant 32 : i32
    %75 = vector.broadcast %c32_i32 : i32 to vector<16x32xi32>
    %76 = arith.cmpi slt, %45, %75 : vector<16x32xi32>
    %77 = arith.andi %74, %76 : vector<16x32xi1>
    %78 = arith.ori %72, %77 : vector<16x32xi1>
    %79 = arith.andi %67, %78 : vector<16x32xi1>
    %80 = arith.ori %62, %79 : vector<16x32xi1>
    %cst_21 = arith.constant 0.000000e+00 : f32
    %cst_22 = arith.constant -1.000000e+30 : f32
    %81 = vector.broadcast %cst_21 : f32 to vector<16x32xf32>
    %82 = vector.broadcast %cst_22 : f32 to vector<16x32xf32>
    %83 = arith.select %80, %81, %82 : vector<16x32xi1>, vector<16x32xf32>
    %84 = vector.extract_strided_slice %0 {offsets = [6, 0], sizes = [1, 64], strides = [1, 1]} : vector<26x64xf32> to vector<1x64xf32>
    %85 = vector.extract_strided_slice %0 {offsets = [7, 0], sizes = [1, 64], strides = [1, 1]} : vector<26x64xf32> to vector<1x64xf32>
    %86 = vector.extract_strided_slice %0 {offsets = [8, 0], sizes = [1, 64], strides = [1, 1]} : vector<26x64xf32> to vector<1x64xf32>
    %87 = vector.extract_strided_slice %0 {offsets = [9, 0], sizes = [1, 64], strides = [1, 1]} : vector<26x64xf32> to vector<1x64xf32>
    %88 = vector.extract_strided_slice %0 {offsets = [10, 0], sizes = [1, 64], strides = [1, 1]} : vector<26x64xf32> to vector<1x64xf32>
    %89 = vector.extract_strided_slice %0 {offsets = [11, 0], sizes = [1, 64], strides = [1, 1]} : vector<26x64xf32> to vector<1x64xf32>
    %c0_23 = arith.constant 0 : index
    %c0_24 = arith.constant 0 : index
    %c0_25 = arith.constant 0 : index
    %90 = vector.load %arg4[%c0_23, %c0_24, %c0_25] : memref<2x64x768xbf16, #tpu.memory_space<vmem>>, vector<1x64x768xbf16>
    %91 = vector.shape_cast %90 : vector<1x64x768xbf16> to vector<64x768xbf16>
    %92 = vector.extract_strided_slice %91 {offsets = [0, 0], sizes = [64, 192], strides = [1, 1]} : vector<64x768xbf16> to vector<64x192xbf16>
    %93 = vector.extract_strided_slice %91 {offsets = [0, 192], sizes = [64, 64], strides = [1, 1]} : vector<64x768xbf16> to vector<64x64xbf16>
    %94 = vector.extract_strided_slice %91 {offsets = [0, 256], sizes = [64, 256], strides = [1, 1]} : vector<64x768xbf16> to vector<64x256xbf16>
    %95 = vector.extract_strided_slice %91 {offsets = [0, 512], sizes = [64, 256], strides = [1, 1]} : vector<64x768xbf16> to vector<64x256xbf16>
    %96 = arith.negf %34 : vector<1x64xf32>
    %97 = math.exp %96 : vector<1x64xf32>
    %cst_26 = arith.constant 1.000000e+00 : f32
    %98 = vector.broadcast %cst_26 : f32 to vector<1x64xf32>
    %99 = arith.addf %98, %97 : vector<1x64xf32>
    %100 = arith.divf %98, %99 : vector<1x64xf32>
    %101 = arith.mulf %34, %100 : vector<1x64xf32>
    %102 = arith.truncf %101 : vector<1x64xf32> to vector<1x64xbf16>
    %cst_27 = arith.constant dense<0.000000e+00> : vector<1x256xf32>
    %103 = tpu.matmul %102, %95, %cst_27 {dimension_numbers = #tpu.dot_dimension_numbers<[1], [0], [0], [1], [0, 0, 1, 1], [], []>} : vector<1x64xbf16>, vector<64x256xbf16>, vector<1x256xf32> -> vector<1x256xf32>
    %104 = vector.extract_strided_slice %103 {offsets = [0, 0], sizes = [1, 64], strides = [1, 1]} : vector<1x256xf32> to vector<1x64xf32>
    %105 = vector.extract_strided_slice %0 {offsets = [12, 0], sizes = [1, 64], strides = [1, 1]} : vector<26x64xf32> to vector<1x64xf32>
    %106 = arith.addf %104, %105 : vector<1x64xf32>
    %107 = vector.extract_strided_slice %103 {offsets = [0, 64], sizes = [1, 64], strides = [1, 1]} : vector<1x256xf32> to vector<1x64xf32>
    %108 = vector.extract_strided_slice %0 {offsets = [13, 0], sizes = [1, 64], strides = [1, 1]} : vector<26x64xf32> to vector<1x64xf32>
    %109 = arith.addf %107, %108 : vector<1x64xf32>
    %110 = vector.extract_strided_slice %103 {offsets = [0, 128], sizes = [1, 64], strides = [1, 1]} : vector<1x256xf32> to vector<1x64xf32>
    %111 = vector.extract_strided_slice %0 {offsets = [14, 0], sizes = [1, 64], strides = [1, 1]} : vector<26x64xf32> to vector<1x64xf32>
    %112 = arith.addf %110, %111 : vector<1x64xf32>
    %113 = vector.extract_strided_slice %103 {offsets = [0, 192], sizes = [1, 64], strides = [1, 1]} : vector<1x256xf32> to vector<1x64xf32>
    %114 = vector.extract_strided_slice %0 {offsets = [15, 0], sizes = [1, 64], strides = [1, 1]} : vector<26x64xf32> to vector<1x64xf32>
    %115 = arith.addf %113, %114 : vector<1x64xf32>
    %cst_28 = arith.constant dense<0.000000e+00> : vector<16xf32>
    %116 = vector.multi_reduction <add>, %42, %cst_28 [1] : vector<16x64xf32> to vector<16xf32>
    %117 = vector.shape_cast %116 : vector<16xf32> to vector<16x1xf32>
    %cst_29 = arith.constant 6.400000e+01 : f32
    %118 = vector.broadcast %cst_29 : f32 to vector<16x1xf32>
    %119 = arith.divf %117, %118 : vector<16x1xf32>
    %120 = vector.broadcast %119 : vector<16x1xf32> to vector<16x64xf32>
    %121 = arith.subf %42, %120 : vector<16x64xf32>
    %122 = arith.mulf %121, %121 : vector<16x64xf32>
    %cst_30 = arith.constant dense<0.000000e+00> : vector<16xf32>
    %123 = vector.multi_reduction <add>, %122, %cst_30 [1] : vector<16x64xf32> to vector<16xf32>
    %124 = vector.shape_cast %123 : vector<16xf32> to vector<16x1xf32>
    %cst_31 = arith.constant 6.400000e+01 : f32
    %125 = vector.broadcast %cst_31 : f32 to vector<16x1xf32>
    %126 = arith.divf %124, %125 : vector<16x1xf32>
    %127 = vector.broadcast %119 : vector<16x1xf32> to vector<16x64xf32>
    %128 = arith.subf %42, %127 : vector<16x64xf32>
    %cst_32 = arith.constant 9.99999974E-6 : f32
    %129 = vector.broadcast %cst_32 : f32 to vector<16x1xf32>
    %130 = arith.addf %126, %129 : vector<16x1xf32>
    %131 = math.rsqrt %130 : vector<16x1xf32>
    %132 = vector.broadcast %131 : vector<16x1xf32> to vector<16x64xf32>
    %133 = arith.mulf %128, %132 : vector<16x64xf32>
    %134 = vector.broadcast %84 : vector<1x64xf32> to vector<16x64xf32>
    %135 = arith.mulf %133, %134 : vector<16x64xf32>
    %136 = vector.broadcast %85 : vector<1x64xf32> to vector<16x64xf32>
    %137 = arith.addf %135, %136 : vector<16x64xf32>
    %cst_33 = arith.constant dense<0.000000e+00> : vector<16xf32>
    %138 = vector.multi_reduction <add>, %43, %cst_33 [1] : vector<16x64xf32> to vector<16xf32>
    %139 = vector.shape_cast %138 : vector<16xf32> to vector<16x1xf32>
    %cst_34 = arith.constant 6.400000e+01 : f32
    %140 = vector.broadcast %cst_34 : f32 to vector<16x1xf32>
    %141 = arith.divf %139, %140 : vector<16x1xf32>
    %142 = vector.broadcast %141 : vector<16x1xf32> to vector<16x64xf32>
    %143 = arith.subf %43, %142 : vector<16x64xf32>
    %144 = arith.mulf %143, %143 : vector<16x64xf32>
    %cst_35 = arith.constant dense<0.000000e+00> : vector<16xf32>
    %145 = vector.multi_reduction <add>, %144, %cst_35 [1] : vector<16x64xf32> to vector<16xf32>
    %146 = vector.shape_cast %145 : vector<16xf32> to vector<16x1xf32>
    %cst_36 = arith.constant 6.400000e+01 : f32
    %147 = vector.broadcast %cst_36 : f32 to vector<16x1xf32>
    %148 = arith.divf %146, %147 : vector<16x1xf32>
    %149 = vector.broadcast %141 : vector<16x1xf32> to vector<16x64xf32>
    %150 = arith.subf %43, %149 : vector<16x64xf32>
    %cst_37 = arith.constant 9.99999974E-6 : f32
    %151 = vector.broadcast %cst_37 : f32 to vector<16x1xf32>
    %152 = arith.addf %148, %151 : vector<16x1xf32>
    %153 = math.rsqrt %152 : vector<16x1xf32>
    %154 = vector.broadcast %153 : vector<16x1xf32> to vector<16x64xf32>
    %155 = arith.mulf %150, %154 : vector<16x64xf32>
    %156 = vector.broadcast %86 : vector<1x64xf32> to vector<16x64xf32>
    %157 = arith.mulf %155, %156 : vector<16x64xf32>
    %158 = vector.broadcast %87 : vector<1x64xf32> to vector<16x64xf32>
    %159 = arith.addf %157, %158 : vector<16x64xf32>
    %cst_38 = arith.constant 1.000000e+00 : f32
    %160 = vector.broadcast %cst_38 : f32 to vector<1x64xf32>
    %161 = arith.addf %160, %109 : vector<1x64xf32>
    %162 = vector.broadcast %161 : vector<1x64xf32> to vector<16x64xf32>
    %163 = arith.mulf %159, %162 : vector<16x64xf32>
    %164 = vector.broadcast %106 : vector<1x64xf32> to vector<16x64xf32>
    %165 = arith.addf %163, %164 : vector<16x64xf32>
    %166 = tpu.concatenate %137, %165 in 0 : vector<16x64xf32>, vector<16x64xf32> -> vector<32x64xf32>
    %167 = arith.truncf %166 : vector<32x64xf32> to vector<32x64xbf16>
    %cst_39 = arith.constant dense<0.000000e+00> : vector<32x192xf32>
    %168 = tpu.matmul %167, %92, %cst_39 {dimension_numbers = #tpu.dot_dimension_numbers<[1], [0], [0], [1], [0, 0, 1, 1], [], []>} : vector<32x64xbf16>, vector<64x192xbf16>, vector<32x192xf32> -> vector<32x192xf32>
    %169 = vector.extract_strided_slice %168 {offsets = [16, 0], sizes = [16, 64], strides = [1, 1]} : vector<32x192xf32> to vector<16x64xf32>
    %170 = vector.extract_strided_slice %168 {offsets = [0, 64], sizes = [32, 64], strides = [1, 1]} : vector<32x192xf32> to vector<32x64xf32>
    %171 = vector.extract_strided_slice %168 {offsets = [0, 128], sizes = [32, 64], strides = [1, 1]} : vector<32x192xf32> to vector<32x64xf32>
    %172 = vector.extract_strided_slice %169 {offsets = [0, 0], sizes = [16, 16], strides = [1, 1]} : vector<16x64xf32> to vector<16x16xf32>
    %173 = arith.truncf %172 : vector<16x16xf32> to vector<16x16xbf16>
    %174 = vector.extract_strided_slice %170 {offsets = [0, 0], sizes = [32, 16], strides = [1, 1]} : vector<32x64xf32> to vector<32x16xf32>
    %175 = arith.truncf %174 : vector<32x16xf32> to vector<32x16xbf16>
    %176 = vector.extract_strided_slice %171 {offsets = [0, 0], sizes = [32, 16], strides = [1, 1]} : vector<32x64xf32> to vector<32x16xf32>
    %177 = arith.truncf %176 : vector<32x16xf32> to vector<32x16xbf16>
    %cst_40 = arith.constant dense<0.000000e+00> : vector<16x32xf32>
    %178 = tpu.matmul %173, %175, %cst_40 {dimension_numbers = #tpu.dot_dimension_numbers<[1], [1], [0], [0], [0, 0, 1, 0], [], []>} : vector<16x16xbf16>, vector<32x16xbf16>, vector<16x32xf32> -> vector<16x32xf32>
    %cst_41 = arith.constant 2.500000e-01 : f32
    %179 = vector.broadcast %cst_41 : f32 to vector<16x32xf32>
    %180 = arith.mulf %178, %179 : vector<16x32xf32>
    %181 = arith.addf %180, %83 : vector<16x32xf32>
    %cst_42 = arith.constant dense<0xFF800000> : vector<16xf32>
    %182 = vector.multi_reduction <maximumf>, %181, %cst_42 [1] : vector<16x32xf32> to vector<16xf32>
    %183 = vector.shape_cast %182 : vector<16xf32> to vector<16x1xf32>
    %184 = vector.broadcast %183 : vector<16x1xf32> to vector<16x32xf32>
    %185 = arith.subf %181, %184 : vector<16x32xf32>
    %186 = math.exp %185 : vector<16x32xf32>
    %cst_43 = arith.constant dense<0.000000e+00> : vector<16xf32>
    %187 = vector.multi_reduction <add>, %186, %cst_43 [1] : vector<16x32xf32> to vector<16xf32>
    %188 = vector.shape_cast %187 : vector<16xf32> to vector<16x1xf32>
    %189 = tpu.reciprocal %188 {approx = true} : vector<16x1xf32> -> vector<16x1xf32>
    %190 = vector.broadcast %189 : vector<16x1xf32> to vector<16x32xf32>
    %191 = arith.mulf %186, %190 : vector<16x32xf32>
    %192 = arith.truncf %191 : vector<16x32xf32> to vector<16x32xbf16>
    %cst_44 = arith.constant dense<0.000000e+00> : vector<16x16xf32>
    %193 = tpu.matmul %192, %177, %cst_44 {dimension_numbers = #tpu.dot_dimension_numbers<[1], [0], [0], [1], [0, 0, 1, 1], [], []>} : vector<16x32xbf16>, vector<32x16xbf16>, vector<16x16xf32> -> vector<16x16xf32>
    %194 = vector.extract_strided_slice %169 {offsets = [0, 16], sizes = [16, 16], strides = [1, 1]} : vector<16x64xf32> to vector<16x16xf32>
    %195 = arith.truncf %194 : vector<16x16xf32> to vector<16x16xbf16>
    %196 = vector.extract_strided_slice %170 {offsets = [0, 16], sizes = [32, 16], strides = [1, 1]} : vector<32x64xf32> to vector<32x16xf32>
    %197 = arith.truncf %196 : vector<32x16xf32> to vector<32x16xbf16>
    %198 = vector.extract_strided_slice %171 {offsets = [0, 16], sizes = [32, 16], strides = [1, 1]} : vector<32x64xf32> to vector<32x16xf32>
    %199 = arith.truncf %198 : vector<32x16xf32> to vector<32x16xbf16>
    %cst_45 = arith.constant dense<0.000000e+00> : vector<16x32xf32>
    %200 = tpu.matmul %195, %197, %cst_45 {dimension_numbers = #tpu.dot_dimension_numbers<[1], [1], [0], [0], [0, 0, 1, 0], [], []>} : vector<16x16xbf16>, vector<32x16xbf16>, vector<16x32xf32> -> vector<16x32xf32>
    %cst_46 = arith.constant 2.500000e-01 : f32
    %201 = vector.broadcast %cst_46 : f32 to vector<16x32xf32>
    %202 = arith.mulf %200, %201 : vector<16x32xf32>
    %203 = arith.addf %202, %83 : vector<16x32xf32>
    %cst_47 = arith.constant dense<0xFF800000> : vector<16xf32>
    %204 = vector.multi_reduction <maximumf>, %203, %cst_47 [1] : vector<16x32xf32> to vector<16xf32>
    %205 = vector.shape_cast %204 : vector<16xf32> to vector<16x1xf32>
    %206 = vector.broadcast %205 : vector<16x1xf32> to vector<16x32xf32>
    %207 = arith.subf %203, %206 : vector<16x32xf32>
    %208 = math.exp %207 : vector<16x32xf32>
    %cst_48 = arith.constant dense<0.000000e+00> : vector<16xf32>
    %209 = vector.multi_reduction <add>, %208, %cst_48 [1] : vector<16x32xf32> to vector<16xf32>
    %210 = vector.shape_cast %209 : vector<16xf32> to vector<16x1xf32>
    %211 = tpu.reciprocal %210 {approx = true} : vector<16x1xf32> -> vector<16x1xf32>
    %212 = vector.broadcast %211 : vector<16x1xf32> to vector<16x32xf32>
    %213 = arith.mulf %208, %212 : vector<16x32xf32>
    %214 = arith.truncf %213 : vector<16x32xf32> to vector<16x32xbf16>
    %cst_49 = arith.constant dense<0.000000e+00> : vector<16x16xf32>
    %215 = tpu.matmul %214, %199, %cst_49 {dimension_numbers = #tpu.dot_dimension_numbers<[1], [0], [0], [1], [0, 0, 1, 1], [], []>} : vector<16x32xbf16>, vector<32x16xbf16>, vector<16x16xf32> -> vector<16x16xf32>
    %216 = vector.extract_strided_slice %169 {offsets = [0, 32], sizes = [16, 16], strides = [1, 1]} : vector<16x64xf32> to vector<16x16xf32>
    %217 = arith.truncf %216 : vector<16x16xf32> to vector<16x16xbf16>
    %218 = vector.extract_strided_slice %170 {offsets = [0, 32], sizes = [32, 16], strides = [1, 1]} : vector<32x64xf32> to vector<32x16xf32>
    %219 = arith.truncf %218 : vector<32x16xf32> to vector<32x16xbf16>
    %220 = vector.extract_strided_slice %171 {offsets = [0, 32], sizes = [32, 16], strides = [1, 1]} : vector<32x64xf32> to vector<32x16xf32>
    %221 = arith.truncf %220 : vector<32x16xf32> to vector<32x16xbf16>
    %cst_50 = arith.constant dense<0.000000e+00> : vector<16x32xf32>
    %222 = tpu.matmul %217, %219, %cst_50 {dimension_numbers = #tpu.dot_dimension_numbers<[1], [1], [0], [0], [0, 0, 1, 0], [], []>} : vector<16x16xbf16>, vector<32x16xbf16>, vector<16x32xf32> -> vector<16x32xf32>
    %cst_51 = arith.constant 2.500000e-01 : f32
    %223 = vector.broadcast %cst_51 : f32 to vector<16x32xf32>
    %224 = arith.mulf %222, %223 : vector<16x32xf32>
    %225 = arith.addf %224, %83 : vector<16x32xf32>
    %cst_52 = arith.constant dense<0xFF800000> : vector<16xf32>
    %226 = vector.multi_reduction <maximumf>, %225, %cst_52 [1] : vector<16x32xf32> to vector<16xf32>
    %227 = vector.shape_cast %226 : vector<16xf32> to vector<16x1xf32>
    %228 = vector.broadcast %227 : vector<16x1xf32> to vector<16x32xf32>
    %229 = arith.subf %225, %228 : vector<16x32xf32>
    %230 = math.exp %229 : vector<16x32xf32>
    %cst_53 = arith.constant dense<0.000000e+00> : vector<16xf32>
    %231 = vector.multi_reduction <add>, %230, %cst_53 [1] : vector<16x32xf32> to vector<16xf32>
    %232 = vector.shape_cast %231 : vector<16xf32> to vector<16x1xf32>
    %233 = tpu.reciprocal %232 {approx = true} : vector<16x1xf32> -> vector<16x1xf32>
    %234 = vector.broadcast %233 : vector<16x1xf32> to vector<16x32xf32>
    %235 = arith.mulf %230, %234 : vector<16x32xf32>
    %236 = arith.truncf %235 : vector<16x32xf32> to vector<16x32xbf16>
    %cst_54 = arith.constant dense<0.000000e+00> : vector<16x16xf32>
    %237 = tpu.matmul %236, %221, %cst_54 {dimension_numbers = #tpu.dot_dimension_numbers<[1], [0], [0], [1], [0, 0, 1, 1], [], []>} : vector<16x32xbf16>, vector<32x16xbf16>, vector<16x16xf32> -> vector<16x16xf32>
    %238 = vector.extract_strided_slice %169 {offsets = [0, 48], sizes = [16, 16], strides = [1, 1]} : vector<16x64xf32> to vector<16x16xf32>
    %239 = arith.truncf %238 : vector<16x16xf32> to vector<16x16xbf16>
    %240 = vector.extract_strided_slice %170 {offsets = [0, 48], sizes = [32, 16], strides = [1, 1]} : vector<32x64xf32> to vector<32x16xf32>
    %241 = arith.truncf %240 : vector<32x16xf32> to vector<32x16xbf16>
    %242 = vector.extract_strided_slice %171 {offsets = [0, 48], sizes = [32, 16], strides = [1, 1]} : vector<32x64xf32> to vector<32x16xf32>
    %243 = arith.truncf %242 : vector<32x16xf32> to vector<32x16xbf16>
    %cst_55 = arith.constant dense<0.000000e+00> : vector<16x32xf32>
    %244 = tpu.matmul %239, %241, %cst_55 {dimension_numbers = #tpu.dot_dimension_numbers<[1], [1], [0], [0], [0, 0, 1, 0], [], []>} : vector<16x16xbf16>, vector<32x16xbf16>, vector<16x32xf32> -> vector<16x32xf32>
    %cst_56 = arith.constant 2.500000e-01 : f32
    %245 = vector.broadcast %cst_56 : f32 to vector<16x32xf32>
    %246 = arith.mulf %244, %245 : vector<16x32xf32>
    %247 = arith.addf %246, %83 : vector<16x32xf32>
    %cst_57 = arith.constant dense<0xFF800000> : vector<16xf32>
    %248 = vector.multi_reduction <maximumf>, %247, %cst_57 [1] : vector<16x32xf32> to vector<16xf32>
    %249 = vector.shape_cast %248 : vector<16xf32> to vector<16x1xf32>
    %250 = vector.broadcast %249 : vector<16x1xf32> to vector<16x32xf32>
    %251 = arith.subf %247, %250 : vector<16x32xf32>
    %252 = math.exp %251 : vector<16x32xf32>
    %cst_58 = arith.constant dense<0.000000e+00> : vector<16xf32>
    %253 = vector.multi_reduction <add>, %252, %cst_58 [1] : vector<16x32xf32> to vector<16xf32>
    %254 = vector.shape_cast %253 : vector<16xf32> to vector<16x1xf32>
    %255 = tpu.reciprocal %254 {approx = true} : vector<16x1xf32> -> vector<16x1xf32>
    %256 = vector.broadcast %255 : vector<16x1xf32> to vector<16x32xf32>
    %257 = arith.mulf %252, %256 : vector<16x32xf32>
    %258 = arith.truncf %257 : vector<16x32xf32> to vector<16x32xbf16>
    %cst_59 = arith.constant dense<0.000000e+00> : vector<16x16xf32>
    %259 = tpu.matmul %258, %243, %cst_59 {dimension_numbers = #tpu.dot_dimension_numbers<[1], [0], [0], [1], [0, 0, 1, 1], [], []>} : vector<16x32xbf16>, vector<32x16xbf16>, vector<16x16xf32> -> vector<16x16xf32>
    %260 = tpu.concatenate %193, %215, %237, %259 in 1 : vector<16x16xf32>, vector<16x16xf32>, vector<16x16xf32>, vector<16x16xf32> -> vector<16x64xf32>
    %261 = arith.truncf %260 : vector<16x64xf32> to vector<16x64xbf16>
    %cst_60 = arith.constant dense<0.000000e+00> : vector<16x64xf32>
    %262 = tpu.matmul %261, %93, %cst_60 {dimension_numbers = #tpu.dot_dimension_numbers<[1], [0], [0], [1], [0, 0, 1, 1], [], []>} : vector<16x64xbf16>, vector<64x64xbf16>, vector<16x64xf32> -> vector<16x64xf32>
    %263 = arith.addf %262, %43 : vector<16x64xf32>
    %cst_61 = arith.constant dense<0.000000e+00> : vector<16xf32>
    %264 = vector.multi_reduction <add>, %263, %cst_61 [1] : vector<16x64xf32> to vector<16xf32>
    %265 = vector.shape_cast %264 : vector<16xf32> to vector<16x1xf32>
    %cst_62 = arith.constant 6.400000e+01 : f32
    %266 = vector.broadcast %cst_62 : f32 to vector<16x1xf32>
    %267 = arith.divf %265, %266 : vector<16x1xf32>
    %268 = vector.broadcast %267 : vector<16x1xf32> to vector<16x64xf32>
    %269 = arith.subf %263, %268 : vector<16x64xf32>
    %270 = arith.mulf %269, %269 : vector<16x64xf32>
    %cst_63 = arith.constant dense<0.000000e+00> : vector<16xf32>
    %271 = vector.multi_reduction <add>, %270, %cst_63 [1] : vector<16x64xf32> to vector<16xf32>
    %272 = vector.shape_cast %271 : vector<16xf32> to vector<16x1xf32>
    %cst_64 = arith.constant 6.400000e+01 : f32
    %273 = vector.broadcast %cst_64 : f32 to vector<16x1xf32>
    %274 = arith.divf %272, %273 : vector<16x1xf32>
    %275 = vector.broadcast %267 : vector<16x1xf32> to vector<16x64xf32>
    %276 = arith.subf %263, %275 : vector<16x64xf32>
    %cst_65 = arith.constant 9.99999974E-6 : f32
    %277 = vector.broadcast %cst_65 : f32 to vector<16x1xf32>
    %278 = arith.addf %274, %277 : vector<16x1xf32>
    %279 = math.rsqrt %278 : vector<16x1xf32>
    %280 = vector.broadcast %279 : vector<16x1xf32> to vector<16x64xf32>
    %281 = arith.mulf %276, %280 : vector<16x64xf32>
    %282 = vector.broadcast %88 : vector<1x64xf32> to vector<16x64xf32>
    %283 = arith.mulf %281, %282 : vector<16x64xf32>
    %284 = vector.broadcast %89 : vector<1x64xf32> to vector<16x64xf32>
    %285 = arith.addf %283, %284 : vector<16x64xf32>
    %cst_66 = arith.constant 1.000000e+00 : f32
    %286 = vector.broadcast %cst_66 : f32 to vector<1x64xf32>
    %287 = arith.addf %286, %115 : vector<1x64xf32>
    %288 = vector.broadcast %287 : vector<1x64xf32> to vector<16x64xf32>
    %289 = arith.mulf %285, %288 : vector<16x64xf32>
    %290 = vector.broadcast %112 : vector<1x64xf32> to vector<16x64xf32>
    %291 = arith.addf %289, %290 : vector<16x64xf32>
    %292 = arith.truncf %291 : vector<16x64xf32> to vector<16x64xbf16>
    %cst_67 = arith.constant dense<0.000000e+00> : vector<16x256xf32>
    %293 = tpu.matmul %292, %94, %cst_67 {dimension_numbers = #tpu.dot_dimension_numbers<[1], [0], [0], [1], [0, 0, 1, 1], [], []>} : vector<16x64xbf16>, vector<64x256xbf16>, vector<16x256xf32> -> vector<16x256xf32>
    %294 = arith.mulf %293, %293 : vector<16x256xf32>
    %295 = arith.mulf %293, %294 : vector<16x256xf32>
    %cst_68 = arith.constant 4.471500e-02 : f32
    %296 = vector.broadcast %cst_68 : f32 to vector<16x256xf32>
    %297 = arith.mulf %296, %295 : vector<16x256xf32>
    %298 = arith.addf %293, %297 : vector<16x256xf32>
    %cst_69 = arith.constant 0.797884583 : f32
    %299 = vector.broadcast %cst_69 : f32 to vector<16x256xf32>
    %300 = arith.mulf %299, %298 : vector<16x256xf32>
    %301 = math.tanh %300 : vector<16x256xf32>
    %cst_70 = arith.constant 1.000000e+00 : f32
    %302 = vector.broadcast %cst_70 : f32 to vector<16x256xf32>
    %303 = arith.addf %302, %301 : vector<16x256xf32>
    %cst_71 = arith.constant 5.000000e-01 : f32
    %304 = vector.broadcast %cst_71 : f32 to vector<16x256xf32>
    %305 = arith.mulf %304, %303 : vector<16x256xf32>
    %306 = arith.mulf %293, %305 : vector<16x256xf32>
    %c0_72 = arith.constant 0 : index
    %c0_73 = arith.constant 0 : index
    %c0_74 = arith.constant 0 : index
    %307 = vector.load %arg5[%c0_72, %c0_73, %c0_74] : memref<2x256x64xbf16, #tpu.memory_space<vmem>>, vector<1x256x64xbf16>
    %308 = vector.shape_cast %307 : vector<1x256x64xbf16> to vector<256x64xbf16>
    %309 = arith.truncf %306 : vector<16x256xf32> to vector<16x256xbf16>
    %cst_75 = arith.constant dense<0.000000e+00> : vector<16x64xf32>
    %310 = tpu.matmul %309, %308, %cst_75 {dimension_numbers = #tpu.dot_dimension_numbers<[1], [0], [0], [1], [0, 0, 1, 1], [], []>} : vector<16x256xbf16>, vector<256x64xbf16>, vector<16x64xf32> -> vector<16x64xf32>
    %311 = arith.addf %263, %310 : vector<16x64xf32>
    %312 = vector.extract_strided_slice %0 {offsets = [16, 0], sizes = [1, 64], strides = [1, 1]} : vector<26x64xf32> to vector<1x64xf32>
    %313 = vector.extract_strided_slice %0 {offsets = [17, 0], sizes = [1, 64], strides = [1, 1]} : vector<26x64xf32> to vector<1x64xf32>
    %314 = vector.extract_strided_slice %0 {offsets = [18, 0], sizes = [1, 64], strides = [1, 1]} : vector<26x64xf32> to vector<1x64xf32>
    %315 = vector.extract_strided_slice %0 {offsets = [19, 0], sizes = [1, 64], strides = [1, 1]} : vector<26x64xf32> to vector<1x64xf32>
    %316 = vector.extract_strided_slice %0 {offsets = [20, 0], sizes = [1, 64], strides = [1, 1]} : vector<26x64xf32> to vector<1x64xf32>
    %317 = vector.extract_strided_slice %0 {offsets = [21, 0], sizes = [1, 64], strides = [1, 1]} : vector<26x64xf32> to vector<1x64xf32>
    %c1 = arith.constant 1 : index
    %c0_76 = arith.constant 0 : index
    %c0_77 = arith.constant 0 : index
    %318 = vector.load %arg4[%c1, %c0_76, %c0_77] : memref<2x64x768xbf16, #tpu.memory_space<vmem>>, vector<1x64x768xbf16>
    %319 = vector.shape_cast %318 : vector<1x64x768xbf16> to vector<64x768xbf16>
    %320 = vector.extract_strided_slice %319 {offsets = [0, 0], sizes = [64, 192], strides = [1, 1]} : vector<64x768xbf16> to vector<64x192xbf16>
    %321 = vector.extract_strided_slice %319 {offsets = [0, 192], sizes = [64, 64], strides = [1, 1]} : vector<64x768xbf16> to vector<64x64xbf16>
    %322 = vector.extract_strided_slice %319 {offsets = [0, 256], sizes = [64, 256], strides = [1, 1]} : vector<64x768xbf16> to vector<64x256xbf16>
    %323 = vector.extract_strided_slice %319 {offsets = [0, 512], sizes = [64, 256], strides = [1, 1]} : vector<64x768xbf16> to vector<64x256xbf16>
    %324 = arith.negf %34 : vector<1x64xf32>
    %325 = math.exp %324 : vector<1x64xf32>
    %cst_78 = arith.constant 1.000000e+00 : f32
    %326 = vector.broadcast %cst_78 : f32 to vector<1x64xf32>
    %327 = arith.addf %326, %325 : vector<1x64xf32>
    %328 = arith.divf %326, %327 : vector<1x64xf32>
    %329 = arith.mulf %34, %328 : vector<1x64xf32>
    %330 = arith.truncf %329 : vector<1x64xf32> to vector<1x64xbf16>
    %cst_79 = arith.constant dense<0.000000e+00> : vector<1x256xf32>
    %331 = tpu.matmul %330, %323, %cst_79 {dimension_numbers = #tpu.dot_dimension_numbers<[1], [0], [0], [1], [0, 0, 1, 1], [], []>} : vector<1x64xbf16>, vector<64x256xbf16>, vector<1x256xf32> -> vector<1x256xf32>
    %332 = vector.extract_strided_slice %331 {offsets = [0, 0], sizes = [1, 64], strides = [1, 1]} : vector<1x256xf32> to vector<1x64xf32>
    %333 = vector.extract_strided_slice %0 {offsets = [22, 0], sizes = [1, 64], strides = [1, 1]} : vector<26x64xf32> to vector<1x64xf32>
    %334 = arith.addf %332, %333 : vector<1x64xf32>
    %335 = vector.extract_strided_slice %331 {offsets = [0, 64], sizes = [1, 64], strides = [1, 1]} : vector<1x256xf32> to vector<1x64xf32>
    %336 = vector.extract_strided_slice %0 {offsets = [23, 0], sizes = [1, 64], strides = [1, 1]} : vector<26x64xf32> to vector<1x64xf32>
    %337 = arith.addf %335, %336 : vector<1x64xf32>
    %338 = vector.extract_strided_slice %331 {offsets = [0, 128], sizes = [1, 64], strides = [1, 1]} : vector<1x256xf32> to vector<1x64xf32>
    %339 = vector.extract_strided_slice %0 {offsets = [24, 0], sizes = [1, 64], strides = [1, 1]} : vector<26x64xf32> to vector<1x64xf32>
    %340 = arith.addf %338, %339 : vector<1x64xf32>
    %341 = vector.extract_strided_slice %331 {offsets = [0, 192], sizes = [1, 64], strides = [1, 1]} : vector<1x256xf32> to vector<1x64xf32>
    %342 = vector.extract_strided_slice %0 {offsets = [25, 0], sizes = [1, 64], strides = [1, 1]} : vector<26x64xf32> to vector<1x64xf32>
    %343 = arith.addf %341, %342 : vector<1x64xf32>
    %cst_80 = arith.constant dense<0.000000e+00> : vector<16xf32>
    %344 = vector.multi_reduction <add>, %42, %cst_80 [1] : vector<16x64xf32> to vector<16xf32>
    %345 = vector.shape_cast %344 : vector<16xf32> to vector<16x1xf32>
    %cst_81 = arith.constant 6.400000e+01 : f32
    %346 = vector.broadcast %cst_81 : f32 to vector<16x1xf32>
    %347 = arith.divf %345, %346 : vector<16x1xf32>
    %348 = vector.broadcast %347 : vector<16x1xf32> to vector<16x64xf32>
    %349 = arith.subf %42, %348 : vector<16x64xf32>
    %350 = arith.mulf %349, %349 : vector<16x64xf32>
    %cst_82 = arith.constant dense<0.000000e+00> : vector<16xf32>
    %351 = vector.multi_reduction <add>, %350, %cst_82 [1] : vector<16x64xf32> to vector<16xf32>
    %352 = vector.shape_cast %351 : vector<16xf32> to vector<16x1xf32>
    %cst_83 = arith.constant 6.400000e+01 : f32
    %353 = vector.broadcast %cst_83 : f32 to vector<16x1xf32>
    %354 = arith.divf %352, %353 : vector<16x1xf32>
    %355 = vector.broadcast %347 : vector<16x1xf32> to vector<16x64xf32>
    %356 = arith.subf %42, %355 : vector<16x64xf32>
    %cst_84 = arith.constant 9.99999974E-6 : f32
    %357 = vector.broadcast %cst_84 : f32 to vector<16x1xf32>
    %358 = arith.addf %354, %357 : vector<16x1xf32>
    %359 = math.rsqrt %358 : vector<16x1xf32>
    %360 = vector.broadcast %359 : vector<16x1xf32> to vector<16x64xf32>
    %361 = arith.mulf %356, %360 : vector<16x64xf32>
    %362 = vector.broadcast %312 : vector<1x64xf32> to vector<16x64xf32>
    %363 = arith.mulf %361, %362 : vector<16x64xf32>
    %364 = vector.broadcast %313 : vector<1x64xf32> to vector<16x64xf32>
    %365 = arith.addf %363, %364 : vector<16x64xf32>
    %cst_85 = arith.constant dense<0.000000e+00> : vector<16xf32>
    %366 = vector.multi_reduction <add>, %311, %cst_85 [1] : vector<16x64xf32> to vector<16xf32>
    %367 = vector.shape_cast %366 : vector<16xf32> to vector<16x1xf32>
    %cst_86 = arith.constant 6.400000e+01 : f32
    %368 = vector.broadcast %cst_86 : f32 to vector<16x1xf32>
    %369 = arith.divf %367, %368 : vector<16x1xf32>
    %370 = vector.broadcast %369 : vector<16x1xf32> to vector<16x64xf32>
    %371 = arith.subf %311, %370 : vector<16x64xf32>
    %372 = arith.mulf %371, %371 : vector<16x64xf32>
    %cst_87 = arith.constant dense<0.000000e+00> : vector<16xf32>
    %373 = vector.multi_reduction <add>, %372, %cst_87 [1] : vector<16x64xf32> to vector<16xf32>
    %374 = vector.shape_cast %373 : vector<16xf32> to vector<16x1xf32>
    %cst_88 = arith.constant 6.400000e+01 : f32
    %375 = vector.broadcast %cst_88 : f32 to vector<16x1xf32>
    %376 = arith.divf %374, %375 : vector<16x1xf32>
    %377 = vector.broadcast %369 : vector<16x1xf32> to vector<16x64xf32>
    %378 = arith.subf %311, %377 : vector<16x64xf32>
    %cst_89 = arith.constant 9.99999974E-6 : f32
    %379 = vector.broadcast %cst_89 : f32 to vector<16x1xf32>
    %380 = arith.addf %376, %379 : vector<16x1xf32>
    %381 = math.rsqrt %380 : vector<16x1xf32>
    %382 = vector.broadcast %381 : vector<16x1xf32> to vector<16x64xf32>
    %383 = arith.mulf %378, %382 : vector<16x64xf32>
    %384 = vector.broadcast %314 : vector<1x64xf32> to vector<16x64xf32>
    %385 = arith.mulf %383, %384 : vector<16x64xf32>
    %386 = vector.broadcast %315 : vector<1x64xf32> to vector<16x64xf32>
    %387 = arith.addf %385, %386 : vector<16x64xf32>
    %cst_90 = arith.constant 1.000000e+00 : f32
    %388 = vector.broadcast %cst_90 : f32 to vector<1x64xf32>
    %389 = arith.addf %388, %337 : vector<1x64xf32>
    %390 = vector.broadcast %389 : vector<1x64xf32> to vector<16x64xf32>
    %391 = arith.mulf %387, %390 : vector<16x64xf32>
    %392 = vector.broadcast %334 : vector<1x64xf32> to vector<16x64xf32>
    %393 = arith.addf %391, %392 : vector<16x64xf32>
    %394 = tpu.concatenate %365, %393 in 0 : vector<16x64xf32>, vector<16x64xf32> -> vector<32x64xf32>
    %395 = arith.truncf %394 : vector<32x64xf32> to vector<32x64xbf16>
    %cst_91 = arith.constant dense<0.000000e+00> : vector<32x192xf32>
    %396 = tpu.matmul %395, %320, %cst_91 {dimension_numbers = #tpu.dot_dimension_numbers<[1], [0], [0], [1], [0, 0, 1, 1], [], []>} : vector<32x64xbf16>, vector<64x192xbf16>, vector<32x192xf32> -> vector<32x192xf32>
    %397 = vector.extract_strided_slice %396 {offsets = [16, 0], sizes = [16, 64], strides = [1, 1]} : vector<32x192xf32> to vector<16x64xf32>
    %398 = vector.extract_strided_slice %396 {offsets = [0, 64], sizes = [32, 64], strides = [1, 1]} : vector<32x192xf32> to vector<32x64xf32>
    %399 = vector.extract_strided_slice %396 {offsets = [0, 128], sizes = [32, 64], strides = [1, 1]} : vector<32x192xf32> to vector<32x64xf32>
    %400 = vector.extract_strided_slice %397 {offsets = [0, 0], sizes = [16, 16], strides = [1, 1]} : vector<16x64xf32> to vector<16x16xf32>
    %401 = arith.truncf %400 : vector<16x16xf32> to vector<16x16xbf16>
    %402 = vector.extract_strided_slice %398 {offsets = [0, 0], sizes = [32, 16], strides = [1, 1]} : vector<32x64xf32> to vector<32x16xf32>
    %403 = arith.truncf %402 : vector<32x16xf32> to vector<32x16xbf16>
    %404 = vector.extract_strided_slice %399 {offsets = [0, 0], sizes = [32, 16], strides = [1, 1]} : vector<32x64xf32> to vector<32x16xf32>
    %405 = arith.truncf %404 : vector<32x16xf32> to vector<32x16xbf16>
    %cst_92 = arith.constant dense<0.000000e+00> : vector<16x32xf32>
    %406 = tpu.matmul %401, %403, %cst_92 {dimension_numbers = #tpu.dot_dimension_numbers<[1], [1], [0], [0], [0, 0, 1, 0], [], []>} : vector<16x16xbf16>, vector<32x16xbf16>, vector<16x32xf32> -> vector<16x32xf32>
    %cst_93 = arith.constant 2.500000e-01 : f32
    %407 = vector.broadcast %cst_93 : f32 to vector<16x32xf32>
    %408 = arith.mulf %406, %407 : vector<16x32xf32>
    %409 = arith.addf %408, %83 : vector<16x32xf32>
    %cst_94 = arith.constant dense<0xFF800000> : vector<16xf32>
    %410 = vector.multi_reduction <maximumf>, %409, %cst_94 [1] : vector<16x32xf32> to vector<16xf32>
    %411 = vector.shape_cast %410 : vector<16xf32> to vector<16x1xf32>
    %412 = vector.broadcast %411 : vector<16x1xf32> to vector<16x32xf32>
    %413 = arith.subf %409, %412 : vector<16x32xf32>
    %414 = math.exp %413 : vector<16x32xf32>
    %cst_95 = arith.constant dense<0.000000e+00> : vector<16xf32>
    %415 = vector.multi_reduction <add>, %414, %cst_95 [1] : vector<16x32xf32> to vector<16xf32>
    %416 = vector.shape_cast %415 : vector<16xf32> to vector<16x1xf32>
    %417 = tpu.reciprocal %416 {approx = true} : vector<16x1xf32> -> vector<16x1xf32>
    %418 = vector.broadcast %417 : vector<16x1xf32> to vector<16x32xf32>
    %419 = arith.mulf %414, %418 : vector<16x32xf32>
    %420 = arith.truncf %419 : vector<16x32xf32> to vector<16x32xbf16>
    %cst_96 = arith.constant dense<0.000000e+00> : vector<16x16xf32>
    %421 = tpu.matmul %420, %405, %cst_96 {dimension_numbers = #tpu.dot_dimension_numbers<[1], [0], [0], [1], [0, 0, 1, 1], [], []>} : vector<16x32xbf16>, vector<32x16xbf16>, vector<16x16xf32> -> vector<16x16xf32>
    %422 = vector.extract_strided_slice %397 {offsets = [0, 16], sizes = [16, 16], strides = [1, 1]} : vector<16x64xf32> to vector<16x16xf32>
    %423 = arith.truncf %422 : vector<16x16xf32> to vector<16x16xbf16>
    %424 = vector.extract_strided_slice %398 {offsets = [0, 16], sizes = [32, 16], strides = [1, 1]} : vector<32x64xf32> to vector<32x16xf32>
    %425 = arith.truncf %424 : vector<32x16xf32> to vector<32x16xbf16>
    %426 = vector.extract_strided_slice %399 {offsets = [0, 16], sizes = [32, 16], strides = [1, 1]} : vector<32x64xf32> to vector<32x16xf32>
    %427 = arith.truncf %426 : vector<32x16xf32> to vector<32x16xbf16>
    %cst_97 = arith.constant dense<0.000000e+00> : vector<16x32xf32>
    %428 = tpu.matmul %423, %425, %cst_97 {dimension_numbers = #tpu.dot_dimension_numbers<[1], [1], [0], [0], [0, 0, 1, 0], [], []>} : vector<16x16xbf16>, vector<32x16xbf16>, vector<16x32xf32> -> vector<16x32xf32>
    %cst_98 = arith.constant 2.500000e-01 : f32
    %429 = vector.broadcast %cst_98 : f32 to vector<16x32xf32>
    %430 = arith.mulf %428, %429 : vector<16x32xf32>
    %431 = arith.addf %430, %83 : vector<16x32xf32>
    %cst_99 = arith.constant dense<0xFF800000> : vector<16xf32>
    %432 = vector.multi_reduction <maximumf>, %431, %cst_99 [1] : vector<16x32xf32> to vector<16xf32>
    %433 = vector.shape_cast %432 : vector<16xf32> to vector<16x1xf32>
    %434 = vector.broadcast %433 : vector<16x1xf32> to vector<16x32xf32>
    %435 = arith.subf %431, %434 : vector<16x32xf32>
    %436 = math.exp %435 : vector<16x32xf32>
    %cst_100 = arith.constant dense<0.000000e+00> : vector<16xf32>
    %437 = vector.multi_reduction <add>, %436, %cst_100 [1] : vector<16x32xf32> to vector<16xf32>
    %438 = vector.shape_cast %437 : vector<16xf32> to vector<16x1xf32>
    %439 = tpu.reciprocal %438 {approx = true} : vector<16x1xf32> -> vector<16x1xf32>
    %440 = vector.broadcast %439 : vector<16x1xf32> to vector<16x32xf32>
    %441 = arith.mulf %436, %440 : vector<16x32xf32>
    %442 = arith.truncf %441 : vector<16x32xf32> to vector<16x32xbf16>
    %cst_101 = arith.constant dense<0.000000e+00> : vector<16x16xf32>
    %443 = tpu.matmul %442, %427, %cst_101 {dimension_numbers = #tpu.dot_dimension_numbers<[1], [0], [0], [1], [0, 0, 1, 1], [], []>} : vector<16x32xbf16>, vector<32x16xbf16>, vector<16x16xf32> -> vector<16x16xf32>
    %444 = vector.extract_strided_slice %397 {offsets = [0, 32], sizes = [16, 16], strides = [1, 1]} : vector<16x64xf32> to vector<16x16xf32>
    %445 = arith.truncf %444 : vector<16x16xf32> to vector<16x16xbf16>
    %446 = vector.extract_strided_slice %398 {offsets = [0, 32], sizes = [32, 16], strides = [1, 1]} : vector<32x64xf32> to vector<32x16xf32>
    %447 = arith.truncf %446 : vector<32x16xf32> to vector<32x16xbf16>
    %448 = vector.extract_strided_slice %399 {offsets = [0, 32], sizes = [32, 16], strides = [1, 1]} : vector<32x64xf32> to vector<32x16xf32>
    %449 = arith.truncf %448 : vector<32x16xf32> to vector<32x16xbf16>
    %cst_102 = arith.constant dense<0.000000e+00> : vector<16x32xf32>
    %450 = tpu.matmul %445, %447, %cst_102 {dimension_numbers = #tpu.dot_dimension_numbers<[1], [1], [0], [0], [0, 0, 1, 0], [], []>} : vector<16x16xbf16>, vector<32x16xbf16>, vector<16x32xf32> -> vector<16x32xf32>
    %cst_103 = arith.constant 2.500000e-01 : f32
    %451 = vector.broadcast %cst_103 : f32 to vector<16x32xf32>
    %452 = arith.mulf %450, %451 : vector<16x32xf32>
    %453 = arith.addf %452, %83 : vector<16x32xf32>
    %cst_104 = arith.constant dense<0xFF800000> : vector<16xf32>
    %454 = vector.multi_reduction <maximumf>, %453, %cst_104 [1] : vector<16x32xf32> to vector<16xf32>
    %455 = vector.shape_cast %454 : vector<16xf32> to vector<16x1xf32>
    %456 = vector.broadcast %455 : vector<16x1xf32> to vector<16x32xf32>
    %457 = arith.subf %453, %456 : vector<16x32xf32>
    %458 = math.exp %457 : vector<16x32xf32>
    %cst_105 = arith.constant dense<0.000000e+00> : vector<16xf32>
    %459 = vector.multi_reduction <add>, %458, %cst_105 [1] : vector<16x32xf32> to vector<16xf32>
    %460 = vector.shape_cast %459 : vector<16xf32> to vector<16x1xf32>
    %461 = tpu.reciprocal %460 {approx = true} : vector<16x1xf32> -> vector<16x1xf32>
    %462 = vector.broadcast %461 : vector<16x1xf32> to vector<16x32xf32>
    %463 = arith.mulf %458, %462 : vector<16x32xf32>
    %464 = arith.truncf %463 : vector<16x32xf32> to vector<16x32xbf16>
    %cst_106 = arith.constant dense<0.000000e+00> : vector<16x16xf32>
    %465 = tpu.matmul %464, %449, %cst_106 {dimension_numbers = #tpu.dot_dimension_numbers<[1], [0], [0], [1], [0, 0, 1, 1], [], []>} : vector<16x32xbf16>, vector<32x16xbf16>, vector<16x16xf32> -> vector<16x16xf32>
    %466 = vector.extract_strided_slice %397 {offsets = [0, 48], sizes = [16, 16], strides = [1, 1]} : vector<16x64xf32> to vector<16x16xf32>
    %467 = arith.truncf %466 : vector<16x16xf32> to vector<16x16xbf16>
    %468 = vector.extract_strided_slice %398 {offsets = [0, 48], sizes = [32, 16], strides = [1, 1]} : vector<32x64xf32> to vector<32x16xf32>
    %469 = arith.truncf %468 : vector<32x16xf32> to vector<32x16xbf16>
    %470 = vector.extract_strided_slice %399 {offsets = [0, 48], sizes = [32, 16], strides = [1, 1]} : vector<32x64xf32> to vector<32x16xf32>
    %471 = arith.truncf %470 : vector<32x16xf32> to vector<32x16xbf16>
    %cst_107 = arith.constant dense<0.000000e+00> : vector<16x32xf32>
    %472 = tpu.matmul %467, %469, %cst_107 {dimension_numbers = #tpu.dot_dimension_numbers<[1], [1], [0], [0], [0, 0, 1, 0], [], []>} : vector<16x16xbf16>, vector<32x16xbf16>, vector<16x32xf32> -> vector<16x32xf32>
    %cst_108 = arith.constant 2.500000e-01 : f32
    %473 = vector.broadcast %cst_108 : f32 to vector<16x32xf32>
    %474 = arith.mulf %472, %473 : vector<16x32xf32>
    %475 = arith.addf %474, %83 : vector<16x32xf32>
    %cst_109 = arith.constant dense<0xFF800000> : vector<16xf32>
    %476 = vector.multi_reduction <maximumf>, %475, %cst_109 [1] : vector<16x32xf32> to vector<16xf32>
    %477 = vector.shape_cast %476 : vector<16xf32> to vector<16x1xf32>
    %478 = vector.broadcast %477 : vector<16x1xf32> to vector<16x32xf32>
    %479 = arith.subf %475, %478 : vector<16x32xf32>
    %480 = math.exp %479 : vector<16x32xf32>
    %cst_110 = arith.constant dense<0.000000e+00> : vector<16xf32>
    %481 = vector.multi_reduction <add>, %480, %cst_110 [1] : vector<16x32xf32> to vector<16xf32>
    %482 = vector.shape_cast %481 : vector<16xf32> to vector<16x1xf32>
    %483 = tpu.reciprocal %482 {approx = true} : vector<16x1xf32> -> vector<16x1xf32>
    %484 = vector.broadcast %483 : vector<16x1xf32> to vector<16x32xf32>
    %485 = arith.mulf %480, %484 : vector<16x32xf32>
    %486 = arith.truncf %485 : vector<16x32xf32> to vector<16x32xbf16>
    %cst_111 = arith.constant dense<0.000000e+00> : vector<16x16xf32>
    %487 = tpu.matmul %486, %471, %cst_111 {dimension_numbers = #tpu.dot_dimension_numbers<[1], [0], [0], [1], [0, 0, 1, 1], [], []>} : vector<16x32xbf16>, vector<32x16xbf16>, vector<16x16xf32> -> vector<16x16xf32>
    %488 = tpu.concatenate %421, %443, %465, %487 in 1 : vector<16x16xf32>, vector<16x16xf32>, vector<16x16xf32>, vector<16x16xf32> -> vector<16x64xf32>
    %489 = arith.truncf %488 : vector<16x64xf32> to vector<16x64xbf16>
    %cst_112 = arith.constant dense<0.000000e+00> : vector<16x64xf32>
    %490 = tpu.matmul %489, %321, %cst_112 {dimension_numbers = #tpu.dot_dimension_numbers<[1], [0], [0], [1], [0, 0, 1, 1], [], []>} : vector<16x64xbf16>, vector<64x64xbf16>, vector<16x64xf32> -> vector<16x64xf32>
    %491 = arith.addf %490, %311 : vector<16x64xf32>
    %cst_113 = arith.constant dense<0.000000e+00> : vector<16xf32>
    %492 = vector.multi_reduction <add>, %491, %cst_113 [1] : vector<16x64xf32> to vector<16xf32>
    %493 = vector.shape_cast %492 : vector<16xf32> to vector<16x1xf32>
    %cst_114 = arith.constant 6.400000e+01 : f32
    %494 = vector.broadcast %cst_114 : f32 to vector<16x1xf32>
    %495 = arith.divf %493, %494 : vector<16x1xf32>
    %496 = vector.broadcast %495 : vector<16x1xf32> to vector<16x64xf32>
    %497 = arith.subf %491, %496 : vector<16x64xf32>
    %498 = arith.mulf %497, %497 : vector<16x64xf32>
    %cst_115 = arith.constant dense<0.000000e+00> : vector<16xf32>
    %499 = vector.multi_reduction <add>, %498, %cst_115 [1] : vector<16x64xf32> to vector<16xf32>
    %500 = vector.shape_cast %499 : vector<16xf32> to vector<16x1xf32>
    %cst_116 = arith.constant 6.400000e+01 : f32
    %501 = vector.broadcast %cst_116 : f32 to vector<16x1xf32>
    %502 = arith.divf %500, %501 : vector<16x1xf32>
    %503 = vector.broadcast %495 : vector<16x1xf32> to vector<16x64xf32>
    %504 = arith.subf %491, %503 : vector<16x64xf32>
    %cst_117 = arith.constant 9.99999974E-6 : f32
    %505 = vector.broadcast %cst_117 : f32 to vector<16x1xf32>
    %506 = arith.addf %502, %505 : vector<16x1xf32>
    %507 = math.rsqrt %506 : vector<16x1xf32>
    %508 = vector.broadcast %507 : vector<16x1xf32> to vector<16x64xf32>
    %509 = arith.mulf %504, %508 : vector<16x64xf32>
    %510 = vector.broadcast %316 : vector<1x64xf32> to vector<16x64xf32>
    %511 = arith.mulf %509, %510 : vector<16x64xf32>
    %512 = vector.broadcast %317 : vector<1x64xf32> to vector<16x64xf32>
    %513 = arith.addf %511, %512 : vector<16x64xf32>
    %cst_118 = arith.constant 1.000000e+00 : f32
    %514 = vector.broadcast %cst_118 : f32 to vector<1x64xf32>
    %515 = arith.addf %514, %343 : vector<1x64xf32>
    %516 = vector.broadcast %515 : vector<1x64xf32> to vector<16x64xf32>
    %517 = arith.mulf %513, %516 : vector<16x64xf32>
    %518 = vector.broadcast %340 : vector<1x64xf32> to vector<16x64xf32>
    %519 = arith.addf %517, %518 : vector<16x64xf32>
    %520 = arith.truncf %519 : vector<16x64xf32> to vector<16x64xbf16>
    %cst_119 = arith.constant dense<0.000000e+00> : vector<16x256xf32>
    %521 = tpu.matmul %520, %322, %cst_119 {dimension_numbers = #tpu.dot_dimension_numbers<[1], [0], [0], [1], [0, 0, 1, 1], [], []>} : vector<16x64xbf16>, vector<64x256xbf16>, vector<16x256xf32> -> vector<16x256xf32>
    %522 = arith.mulf %521, %521 : vector<16x256xf32>
    %523 = arith.mulf %521, %522 : vector<16x256xf32>
    %cst_120 = arith.constant 4.471500e-02 : f32
    %524 = vector.broadcast %cst_120 : f32 to vector<16x256xf32>
    %525 = arith.mulf %524, %523 : vector<16x256xf32>
    %526 = arith.addf %521, %525 : vector<16x256xf32>
    %cst_121 = arith.constant 0.797884583 : f32
    %527 = vector.broadcast %cst_121 : f32 to vector<16x256xf32>
    %528 = arith.mulf %527, %526 : vector<16x256xf32>
    %529 = math.tanh %528 : vector<16x256xf32>
    %cst_122 = arith.constant 1.000000e+00 : f32
    %530 = vector.broadcast %cst_122 : f32 to vector<16x256xf32>
    %531 = arith.addf %530, %529 : vector<16x256xf32>
    %cst_123 = arith.constant 5.000000e-01 : f32
    %532 = vector.broadcast %cst_123 : f32 to vector<16x256xf32>
    %533 = arith.mulf %532, %531 : vector<16x256xf32>
    %534 = arith.mulf %521, %533 : vector<16x256xf32>
    %c1_124 = arith.constant 1 : index
    %c0_125 = arith.constant 0 : index
    %c0_126 = arith.constant 0 : index
    %535 = vector.load %arg5[%c1_124, %c0_125, %c0_126] : memref<2x256x64xbf16, #tpu.memory_space<vmem>>, vector<1x256x64xbf16>
    %536 = vector.shape_cast %535 : vector<1x256x64xbf16> to vector<256x64xbf16>
    %537 = arith.truncf %534 : vector<16x256xf32> to vector<16x256xbf16>
    %cst_127 = arith.constant dense<0.000000e+00> : vector<16x64xf32>
    %538 = tpu.matmul %537, %536, %cst_127 {dimension_numbers = #tpu.dot_dimension_numbers<[1], [0], [0], [1], [0, 0, 1, 1], [], []>} : vector<16x256xbf16>, vector<256x64xbf16>, vector<16x64xf32> -> vector<16x64xf32>
    %539 = arith.addf %491, %538 : vector<16x64xf32>
    %540 = arith.truncf %539 : vector<16x64xf32> to vector<16x64xbf16>
    %cst_128 = arith.constant dense<0.000000e+00> : vector<16x64xf32>
    %541 = tpu.matmul %540, %11, %cst_128 {dimension_numbers = #tpu.dot_dimension_numbers<[1], [0], [0], [1], [0, 0, 1, 1], [], []>} : vector<16x64xbf16>, vector<64x64xbf16>, vector<16x64xf32> -> vector<16x64xf32>
    %542 = vector.broadcast %4 : vector<1x64xf32> to vector<16x64xf32>
    %543 = arith.addf %541, %542 : vector<16x64xf32>
    %cst_129 = arith.constant dense<0.000000e+00> : vector<16xf32>
    %544 = vector.multi_reduction <add>, %543, %cst_129 [1] : vector<16x64xf32> to vector<16xf32>
    %545 = vector.shape_cast %544 : vector<16xf32> to vector<16x1xf32>
    %cst_130 = arith.constant 6.400000e+01 : f32
    %546 = vector.broadcast %cst_130 : f32 to vector<16x1xf32>
    %547 = arith.divf %545, %546 : vector<16x1xf32>
    %548 = vector.broadcast %547 : vector<16x1xf32> to vector<16x64xf32>
    %549 = arith.subf %543, %548 : vector<16x64xf32>
    %550 = arith.mulf %549, %549 : vector<16x64xf32>
    %cst_131 = arith.constant dense<0.000000e+00> : vector<16xf32>
    %551 = vector.multi_reduction <add>, %550, %cst_131 [1] : vector<16x64xf32> to vector<16xf32>
    %552 = vector.shape_cast %551 : vector<16xf32> to vector<16x1xf32>
    %cst_132 = arith.constant 6.400000e+01 : f32
    %553 = vector.broadcast %cst_132 : f32 to vector<16x1xf32>
    %554 = arith.divf %552, %553 : vector<16x1xf32>
    %555 = vector.broadcast %547 : vector<16x1xf32> to vector<16x64xf32>
    %556 = arith.subf %543, %555 : vector<16x64xf32>
    %cst_133 = arith.constant 9.99999974E-6 : f32
    %557 = vector.broadcast %cst_133 : f32 to vector<16x1xf32>
    %558 = arith.addf %554, %557 : vector<16x1xf32>
    %559 = math.rsqrt %558 : vector<16x1xf32>
    %560 = vector.broadcast %559 : vector<16x1xf32> to vector<16x64xf32>
    %561 = arith.mulf %556, %560 : vector<16x64xf32>
    %562 = vector.broadcast %5 : vector<1x64xf32> to vector<16x64xf32>
    %563 = arith.mulf %561, %562 : vector<16x64xf32>
    %564 = vector.broadcast %6 : vector<1x64xf32> to vector<16x64xf32>
    %565 = arith.addf %563, %564 : vector<16x64xf32>
    %c0_134 = arith.constant 0 : index
    %c0_135 = arith.constant 0 : index
    %566 = vector.load %arg7[%c0_134, %c0_135] : memref<16x64xf32, #tpu.memory_space<vmem>>, vector<16x64xf32>
    tpu.vector_store %arg7[%c0_134, %c0_135], %565 {strides = array<i32>} : memref<16x64xf32, #tpu.memory_space<vmem>>, vector<16x64xf32>,
    return
  }
}

</mosaic_0001>

<llo_original>
// kernel: tpu_custom_call.1
$region0: #{tpu_custom_call.1}
  #allocation0 [shape = 'u32[]', space=smem, size = 0x4, offset = 0x4, fixed_abs, tag = 'smem constant byte address 0x4 - core index']
  #allocation1 [shape = 'u32[144,128]{1,0:T(1,128)}', space=vmem, size = 0x12000, scoped, tag = 'internal scratch']
  #allocation2 [shape = 'f32[1]{0:T(128)S(6)}', space=smem, size = 0x200, scoped, tag = 'scoped memory for tpu_custom_call.1']
  %s0 = inlined_call_operand.<no memory space> [shape: f32[1], index: 0, kind: input, shape index: {}]
  %s1 = inlined_call_operand.hbm [shape: f32[16,32], index: 1, kind: input, shape index: {}]
  %s2 = inlined_call_operand.hbm [shape: f32[16,64], index: 2, kind: input, shape index: {}]
  %s3 = inlined_call_operand.vmem [shape: bf16[192,64], index: 3, kind: input, shape index: {}]
  %s4 = inlined_call_operand.vmem [shape: bf16[2,64,768], index: 4, kind: input, shape index: {}]
  %s5 = inlined_call_operand.vmem [shape: bf16[2,256,64], index: 5, kind: input, shape index: {}]
  %s6 = inlined_call_operand.vmem [shape: f32[26,64], index: 6, kind: input, shape index: {}]
  %s7 = inlined_call_operand.hbm [shape: f32[16,64], index: 7, kind: output, shape index: {0}]
  %s8 = inlined_call_operand.hbm [shape: f32[1,64], index: 8, kind: output, shape index: {1}]
  %9 = xla_tuple %s7, %s8
  %s10 = sld [smem:[#allocation0]]
  $region54: #{tpu_custom_call.1} parent=0
    _
  %s12 = ssub.s32 1, %s10
  %s13 = scalar_select 0, %s12, %s10
  %14 = sst [smem:[#allocation2]] %s0
  $region1: #{tpu_custom_call.1} parent=0
    #allocation3 [shape = 'u8[8192]{0}', space=vmem, size = 0x2000, scoped, tag = 'input window, operand 1, single buffered']
    #allocation4 [shape = 's32[1]{0}', space=sflag, size = 0x4, scoped, tag = 'scoped memory for tpu_custom_call.1']
    #allocation5 [shape = 's32[1]{0}', space=sflag, size = 0x4, scoped, tag = 'scoped memory for tpu_custom_call.1']
    #allocation6 [shape = 'u8[8192]{0}', space=vmem, size = 0x2000, scoped, tag = 'input window, operand 2, single buffered']
    #allocation7 [shape = 's32[1]{0}', space=sflag, size = 0x4, scoped, tag = 'scoped memory for tpu_custom_call.1']
    #allocation8 [shape = 'u8[8192]{0}', space=vmem, size = 0x2000, scoped, tag = 'output window, operand 0, single buffered']
    #allocation9 [shape = 'u8[512]{0}', space=vmem, size = 0x400, scoped, tag = 'output window, operand 1, single buffered']
    #allocation10 [shape = 's32[1]{0}', space=sflag, size = 0x4, scoped, tag = 'scoped memory for tpu_custom_call.1']
    %15 = vsyncpa [#allocation4], 0
    %16 = vsyncpa [#allocation7], 0
    %17 = vsyncpa [#allocation5], 0
    %18 = vsyncpa [#allocation10], 0
    // Predicated region
    $region2: #{tpu_custom_call.1} parent=1 // pred_check
      _
    $region3: #{tpu_custom_call.1} parent=1 // pred_check_branch
      %20 = sbr.rel (0) target = $region5
    $region4: #{tpu_custom_call.1} parent=1 // pred_region
      _
    $region5: #{tpu_custom_call.1} parent=1 // pred_fallthru
      _
    // Predicated region
    $region6: #{tpu_custom_call.1} parent=1 // pred_check
      _
    $region7: #{tpu_custom_call.1} parent=1 // pred_check_branch
      %22 = sbr.rel (0) target = $region9
    $region8: #{tpu_custom_call.1} parent=1 // pred_region
      %s24 = ssub.s32 256, 256
      %25 = vsyncadd [#allocation4], %s24
      %s26 = sshll.u32 [#allocation3], 4
      %s27 = int_to_ptr.vmem [resolvable:$true] %s26
      %32 = dma.hbm_to_vmem [thread:$0]  %s1, 256, %s27, [#allocation4], 128, 128, 8
    $region9: #{tpu_custom_call.1} parent=1 // pred_fallthru
      _
    // Predicated region
    $region10: #{tpu_custom_call.1} parent=1 // pred_check
      _
    $region11: #{tpu_custom_call.1} parent=1 // pred_check_branch
      %34 = sbr.rel (0) target = $region13
    $region12: #{tpu_custom_call.1} parent=1 // pred_region
      %s36 = ssub.s32 256, 256
      %37 = vsyncadd [#allocation7], %s36
      %s38 = sshll.u32 [#allocation6], 4
      %s39 = int_to_ptr.vmem [resolvable:$true] %s38
      %44 = dma.hbm_to_vmem [thread:$0]  %s2, 256, %s39, [#allocation7], 128, 128, 8
    $region13: #{tpu_custom_call.1} parent=1 // pred_fallthru
      _
    // Predicated region
    $region14: #{tpu_custom_call.1} parent=1 // pred_check
      _
    $region15: #{tpu_custom_call.1} parent=1 // pred_check_branch
      %46 = sbr.rel (0) target = $region17
    $region16: #{tpu_custom_call.1} parent=1 // pred_region
      _
    $region17: #{tpu_custom_call.1} parent=1 // pred_fallthru
      _
    // Predicated region
    $region18: #{tpu_custom_call.1} parent=1 // pred_check
      _
    $region19: #{tpu_custom_call.1} parent=1 // pred_check_branch
      %48 = sbr.rel (0) target = $region21
    $region20: #{tpu_custom_call.1} parent=1 // pred_region
      _
    $region21: #{tpu_custom_call.1} parent=1 // pred_fallthru
      _
    // Predicated region
    $region22: #{tpu_custom_call.1} parent=1 // pred_check
      _
    $region23: #{tpu_custom_call.1} parent=1 // pred_check_branch
      %50 = sbr.rel (0) target = $region25
    $region24: #{tpu_custom_call.1} parent=1 // pred_region
      _
    $region25: #{tpu_custom_call.1} parent=1 // pred_fallthru
      _
    // Predicated region
    $region26: #{tpu_custom_call.1} parent=1 // pred_check
      _
    $region27: #{tpu_custom_call.1} parent=1 // pred_check_branch
      %52 = sbr.rel (0) target = $region29
    $region28: #{tpu_custom_call.1} parent=1 // pred_region
      _
    $region29: #{tpu_custom_call.1} parent=1 // pred_fallthru
      _
    // Predicated region
    $region30: #{tpu_custom_call.1} parent=1 // pred_check
      _
    $region31: #{tpu_custom_call.1} parent=1 // pred_check_branch
      %54 = sbr.rel (0) target = $region33
    $region32: #{tpu_custom_call.1} parent=1 // pred_region
      %55 = dma.done [#allocation4], 256
    $region33: #{tpu_custom_call.1} parent=1 // pred_fallthru
      _
    // Predicated region
    $region34: #{tpu_custom_call.1} parent=1 // pred_check
      _
    $region35: #{tpu_custom_call.1} parent=1 // pred_check_branch
      %57 = sbr.rel (0) target = $region37
    $region36: #{tpu_custom_call.1} parent=1 // pred_region
      %58 = dma.done [#allocation7], 256
    $region37: #{tpu_custom_call.1} parent=1 // pred_fallthru
      _
    %v60 = vld [vmem:[%s6] sm:$0xff]
    %v61 = vld [vmem:[%s6 + $0x8] sm:$0xff]
    %v62 = vld [vmem:[%s6 + $0x10] sm:$0xff]
    %v63 = vld [vmem:[%s6 + $0x18] sm:$0x3]
    %v64 = vld [vmem:[%s3] sm:$0xf]
    %v65 = vld [vmem:[%s3 + $0x4] sm:$0xf]
    %v66 = vld [vmem:[%s3 + $0x8] sm:$0xf]
    %v67 = vld [vmem:[%s3 + $0xc] sm:$0xf]
    %v68 = vld [vmem:[%s3 + $0x10] sm:$0xf]
    %v69 = vld [vmem:[%s3 + $0x14] sm:$0xf]
    %v70 = vld [vmem:[%s3 + $0x18] sm:$0xf]
    %v71 = vld [vmem:[%s3 + $0x1c] sm:$0xf]
    %v72 = vld [vmem:[%s3 + $0x20] sm:$0xf]
    %v73 = vld [vmem:[%s3 + $0x24] sm:$0xf]
    %v74 = vld [vmem:[%s3 + $0x28] sm:$0xf]
    %v75 = vld [vmem:[%s3 + $0x2c] sm:$0xf]
    %v76 = vld [vmem:[%s3 + $0x30] sm:$0xf]
    %v77 = vld [vmem:[%s3 + $0x34] sm:$0xf]
    %v78 = vld [vmem:[%s3 + $0x38] sm:$0xf]
    %v79 = vld [vmem:[%s3 + $0x3c] sm:$0xf]
    %v80 = vld [vmem:[%s3 + $0x40] sm:$0xf]
    %v81 = vld [vmem:[%s3 + $0x44] sm:$0xf]
    %v82 = vld [vmem:[%s3 + $0x48] sm:$0xf]
    %v83 = vld [vmem:[%s3 + $0x4c] sm:$0xf]
    %v84 = vld [vmem:[%s3 + $0x50] sm:$0xf]
    %v85 = vld [vmem:[%s3 + $0x54] sm:$0xf]
    %v86 = vld [vmem:[%s3 + $0x58] sm:$0xf]
    %v87 = vld [vmem:[%s3 + $0x5c] sm:$0xf]
    %s88 = sld [smem:[#allocation2]]
    %v89 = vlaneseq
    %v90 = vand.u32 %v89, 127
    %v91 = vcvt.s32.f32 %v90
    %v92 = vmul.f32 %v91, -0.5756463
    %v93 = vmul.f32 %v92, 1.442695
    %v94 = vpow.pop %v93
    %v95 = vstv %s88
    %v96 = vmul.f32 %v95, %v94
    %v97 = vand.u32 2147483647, %v96
    %vm98 = vcmp.le.f32.partialorder %v97, 0.7853982
    %vm99 = vcmp.lt.s32.totalorder %v96, 0
    %v100 = vand.u32 %v96, 2139095040
    %v101 = vshrl.u32 %v100, 23
    %v102 = vsub.s32 %v101, 127
    %v103 = vand.u32 2147483647, %v96
    %v104 = vand.u32 %v103, 8388607
    %v105 = vor.u32 %v104, 8388608
    %v106 = vsub.s32 0, %v105
    %v107 = vadd.s32 %v102, 1
    %vm108 = vcmp.gt.s32.totalorder %v107, 0
    %v109 = vsel %vm108, %v107, 0
    %v110 = vshrl.u32 %v109, 5
    %v111 = vand.u32 %v109, 31
    %v112 = vsub.s32 32, %v111
    %v113 = vshrl.u32 683565275, %v112
    %v114 = vshll.u32 683565275, %v111
    %v115 = vshrl.u32 2475754826, %v112
    %v116 = vor.u32 %v114, %v115
    %v117 = vshll.u32 2475754826, %v111
    %v118 = vshrl.u32 2131351028, %v112
    %v119 = vor.u32 %v117, %v118
    %v120 = vshll.u32 2131351028, %v111
    %v121 = vshrl.u32 2102212464, %v112
    %v122 = vor.u32 %v120, %v121
    %v123 = vshll.u32 2102212464, %v111
    %v124 = vshrl.u32 920167782, %v112
    %v125 = vor.u32 %v123, %v124
    %v126 = vshll.u32 920167782, %v111
    %v127 = vshrl.u32 1326507024, %v112
    %v128 = vor.u32 %v126, %v127
    %vm129 = vcmp.lt.s32.totalorder %v110, 1
    %vm130 = vcmp.lt.s32.totalorder %v110, 2
    %vm131 = vcmp.lt.s32.totalorder %v110, 3
    %vm132 = vcmp.lt.s32.totalorder %v110, 4
    %v133 = vsel %vm129, %v113, %v116
    %v134 = vsel %vm132, %v122, 2102212464
    %v135 = vsel %vm131, %v119, %v134
    %v136 = vsel %vm130, %v133, %v135
    %v137 = vsel %vm129, %v116, %v119
    %v138 = vsel %vm132, %v125, 920167782
    %v139 = vsel %vm131, %v122, %v138
    %v140 = vsel %vm130, %v137, %v139
    %v141 = vsel %vm129, %v119, %v122
    %v142 = vsel %vm132, %v128, 1326507024
    %v143 = vsel %vm131, %v125, %v142
    %v144 = vsel %vm130, %v141, %v143
    %v145 = vshll.u32 %v105, 8
    %v146 = vmul.u32.u64.compose %v145, %v144
    %v147 = vextract.low.u32 %v146
    %v148 = vextract.high.u32 %v146
    %v149 = vmul.u32.u64.compose %v145, %v140
    %v150 = vextract.low.u32 %v149
    %v151 = vextract.high.u32 %v149
    %v152 = vmul.u32 %v145, %v136
    %v153 = vadd.s32 %v148, %v150
    %vm154 = vc.u32 %v148, %v150
    %v155 = vadd.s32 %v151, 1
    %v156 = vsel %vm154, %v155, %v151
    %v157 = vadd.s32 %v152, %v156
    %v158 = vadd.s32 %v157, 536870912
    %v159 = vshrl.u32 %v158, 30
    %v160 = vshll.u32 %v159, 30
    %v161 = vsub.s32 %v157, %v160
    %vm162 = vcmp.lt.s32.totalorder %v161, 0
    %v163 = vsub.s32 0, %v161
    %v164 = vsel %vm162, %v163, %v161
    %v165 = vclz %v164
    %v166 = vsub.s32 %v165, 2
    %vm167 = vcmp.gt.s32.totalorder 0, %v166
    %v168 = vsel %vm167, 0, %v166
    %v169 = vsub.s32 32, %v168
    %v170 = vshll.u32 %v161, %v168
    %v171 = vshrl.u32 %v153, %v169
    %v172 = vor.u32 %v170, %v171
    %v173 = vsub.s32 4294967266, %v168
    %v174 = vadd.s32 %v173, 127
    %v175 = vshll.u32 %v174, 23
    %v176 = vor.u32 4788187, %v175
    %v177 = vand.u32 2147483647, %v176
    %v179 = vcvt.s32.f32 %v172
    %v180 = vmul.f32 %v179, %v177
    %v181 = vxor.u32 %v180, 2147483648
    %v182 = vsel %vm99, %v181, %v180
    %v183 = vsub.s32 4, %v159
    %v184 = vsel %vm99, %v183, %v159
    %v185 = vsel %vm98, %v96, %v182
    %v186 = vsel %vm98, 0, %v184
    %v187 = vcosq.f32.pop %v185
    %v188 = vsinq.f32.pop %v185
    %vm189 = vweird.f32 %v96
    %v190 = vand.u32 %v186, 3
    %vm191 = vcmp.lt.s32.totalorder %v190, 2
    %vm192 = vcmp.eq.s32.totalorder %v190, 0
    %v193 = vxor.u32 %v188, 2147483648
    %v194 = vsel %vm192, %v187, %v193
    %vm195 = vcmp.eq.s32.totalorder %v190, 2
    %v196 = vxor.u32 %v187, 2147483648
    %v197 = vsel %vm195, %v196, %v188
    %v198 = vsel %vm191, %v194, %v197
    %v199 = vsel %vm189, nan, %v198
    %v200 = vand.u32 2147483647, %v96
    %vm201 = vcmp.le.f32.partialorder %v200, 0.7853982
    %vm202 = vcmp.lt.s32.totalorder %v96, 0
    %v203 = vand.u32 %v96, 2139095040
    %v204 = vshrl.u32 %v203, 23
    %v205 = vsub.s32 %v204, 127
    %v206 = vand.u32 2147483647, %v96
    %v207 = vand.u32 %v206, 8388607
    %v208 = vor.u32 %v207, 8388608
    %v209 = vsub.s32 0, %v208
    %v210 = vadd.s32 %v205, 1
    %vm211 = vcmp.gt.s32.totalorder %v210, 0
    %v212 = vsel %vm211, %v210, 0
    %v213 = vshrl.u32 %v212, 5
    %v214 = vand.u32 %v212, 31
    %v215 = vsub.s32 32, %v214
    %v216 = vshrl.u32 683565275, %v215
    %v217 = vshll.u32 683565275, %v214
    %v218 = vshrl.u32 2475754826, %v215
    %v219 = vor.u32 %v217, %v218
    %v220 = vshll.u32 2475754826, %v214
    %v221 = vshrl.u32 2131351028, %v215
    %v222 = vor.u32 %v220, %v221
    %v223 = vshll.u32 2131351028, %v214
    %v224 = vshrl.u32 2102212464, %v215
    %v225 = vor.u32 %v223, %v224
    %v226 = vshll.u32 2102212464, %v214
    %v227 = vshrl.u32 920167782, %v215
    %v228 = vor.u32 %v226, %v227
    %v229 = vshll.u32 920167782, %v214
    %v230 = vshrl.u32 1326507024, %v215
    %v231 = vor.u32 %v229, %v230
    %vm232 = vcmp.lt.s32.totalorder %v213, 1
    %vm233 = vcmp.lt.s32.totalorder %v213, 2
    %vm234 = vcmp.lt.s32.totalorder %v213, 3
    %vm235 = vcmp.lt.s32.totalorder %v213, 4
    %v236 = vsel %vm232, %v216, %v219
    %v237 = vsel %vm235, %v225, 2102212464
    %v238 = vsel %vm234, %v222, %v237
    %v239 = vsel %vm233, %v236, %v238
    %v240 = vsel %vm232, %v219, %v222
    %v241 = vsel %vm235, %v228, 920167782
    %v242 = vsel %vm234, %v225, %v241
    %v243 = vsel %vm233, %v240, %v242
    %v244 = vsel %vm232, %v222, %v225
    %v245 = vsel %vm235, %v231, 1326507024
    %v246 = vsel %vm234, %v228, %v245
    %v247 = vsel %vm233, %v244, %v246
    %v248 = vshll.u32 %v208, 8
    %v249 = vmul.u32.u64.compose %v248, %v247
    %v250 = vextract.low.u32 %v249
    %v251 = vextract.high.u32 %v249
    %v252 = vmul.u32.u64.compose %v248, %v243
    %v253 = vextract.low.u32 %v252
    %v254 = vextract.high.u32 %v252
    %v255 = vmul.u32 %v248, %v239
    %v256 = vadd.s32 %v251, %v253
    %vm257 = vc.u32 %v251, %v253
    %v258 = vadd.s32 %v254, 1
    %v259 = vsel %vm257, %v258, %v254
    %v260 = vadd.s32 %v255, %v259
    %v261 = vadd.s32 %v260, 536870912
    %v262 = vshrl.u32 %v261, 30
    %v263 = vshll.u32 %v262, 30
    %v264 = vsub.s32 %v260, %v263
    %vm265 = vcmp.lt.s32.totalorder %v264, 0
    %v266 = vsub.s32 0, %v264
    %v267 = vsel %vm265, %v266, %v264
    %v268 = vclz %v267
    %v269 = vsub.s32 %v268, 2
    %vm270 = vcmp.gt.s32.totalorder 0, %v269
    %v271 = vsel %vm270, 0, %v269
    %v272 = vsub.s32 32, %v271
    %v273 = vshll.u32 %v264, %v271
    %v274 = vshrl.u32 %v256, %v272
    %v275 = vor.u32 %v273, %v274
    %v276 = vsub.s32 4294967266, %v271
    %v277 = vadd.s32 %v276, 127
    %v278 = vshll.u32 %v277, 23
    %v279 = vor.u32 4788187, %v278
    %v280 = vand.u32 2147483647, %v279
    %v282 = vcvt.s32.f32 %v275
    %v283 = vmul.f32 %v282, %v280
    %v284 = vxor.u32 %v283, 2147483648
    %v285 = vsel %vm202, %v284, %v283
    %v286 = vsub.s32 4, %v262
    %v287 = vsel %vm202, %v286, %v262
    %v288 = vsel %vm201, %v96, %v285
    %v289 = vsel %vm201, 0, %v287
    %v290 = vcosq.f32.pop %v288
    %v291 = vsinq.f32.pop %v288
    %vm292 = vweird.f32 %v96
    %v293 = vadd.s32 %v289, 3
    %v294 = vand.u32 %v293, 3
    %vm295 = vcmp.lt.s32.totalorder %v294, 2
    %vm296 = vcmp.eq.s32.totalorder %v294, 0
    %v297 = vxor.u32 %v291, 2147483648
    %v298 = vsel %vm296, %v290, %v297
    %vm299 = vcmp.eq.s32.totalorder %v294, 2
    %v300 = vxor.u32 %v290, 2147483648
    %v301 = vsel %vm299, %v300, %v291
    %v302 = vsel %vm295, %v298, %v301
    %v303 = vsel %vm292, nan, %v302
    %305 = vrot.lane.b32.xlu0 %v303, 16
    %v306 = vpop.permute.xlu0 %305
    %vm308 = vcmask 130048
    %v309 = vsel %vm308, %v199, %v306
    %v310 = vpack.c.bf16 %v309, %v309
    %v315 = vunpack.c.l.b16 %v64
    %v316 = vunpack.c.l.b16 %v65
    %v317 = vunpack.c.l.b16 %v66
    %v318 = vunpack.c.l.b16 %v67
    %v319 = vpack.c.b16 %v316, %v315
    %v320 = vpack.c.b16 %v318, %v317
    %vm323 = vcmask 261120
    %v325 = vsel %vm323, %v310, 0
    %327 = vmatprep.subr.bf16.mxu0 0
    %328 = vmatpush1.bf16.msra.mxu0 0
    %329 = vmatprep.subr.bf16.mxu0 0
    %330 = vmatpush1.bf16.msra.mxu0 0
    %331 = vmatprep.subr.bf16.mxu0 0
    %332 = vmatpush1.bf16.msra.mxu0 0
    %333 = vmatprep.subr.bf16.mxu0 0
    %334 = vmatpush1.bf16.msra.mxu0 0
    %335 = vmatprep.subr.bf16.mxu0 0
    %336 = vmatpush1.bf16.msra.mxu0 0
    %337 = vmatprep.subr.bf16.mxu0 0
    %338 = vmatpush1.bf16.msra.mxu0 0
    %339 = vmatprep.subr.bf16.mxu0 0
    %340 = vmatpush1.bf16.msra.mxu0 %v320
    %341 = vmatprep.subr.bf16.mxu0 0
    %342 = vmatpush1.bf16.msra.mxu0 %v319
    %343 = vmatprep.subr.bf16.mxu0 0
    %344 = vmatpush2.bf16.msra.mxu0 0
    %345 = vmatprep.subr.bf16.mxu0 0
    %346 = vmatpush2.bf16.msra.mxu0 0
    %347 = vmatprep.subr.bf16.mxu0 0
    %348 = vmatpush2.bf16.msra.mxu0 0
    %349 = vmatprep.subr.bf16.mxu0 0
    %350 = vmatpush2.bf16.msra.mxu0 0
    %351 = vmatprep.subr.bf16.mxu0 0
    %352 = vmatpush2.bf16.msra.mxu0 0
    %353 = vmatprep.subr.bf16.mxu0 0
    %354 = vmatpush2.bf16.msra.mxu0 0
    %355 = vmatprep.subr.bf16.mxu0 0
    %356 = vmatpush2.bf16.msra.mxu0 0
    %357 = vmatprep.subr.bf16.mxu0 0
    %358 = vmatpush2.bf16.msra.mxu0 0
    %359 = vmatprep.mubr.bf16.mxu0 0
    %360 = vmatmul.mubr.bf16.gmra.mxu0 %v325
    %v361 = vpop.f32.mrf.mxu0
    %v362 = vadd.f32 %v60, %v361
    %v363 = vpop.f32.mrf.mxu0
    %v364 = vpop.f32.mrf.mxu0
    %v365 = vpop.f32.mrf.mxu0
    %366 = vdwg.mxu0
    %v367 = vxor.u32 %v362, 2147483648
    %v368 = vmul.f32 %v367, 1.442695
    %v369 = vpow.pop %v368
    %v370 = vadd.f32 %v369, 1.0
    %v371 = vrcp.pop %v370
    %v372 = vmul.f32 1.0, %v371
    %v373 = vmul.f32 %v362, %v372
    %v374 = vpack.c.bf16 %v373, %v373
    %v383 = vunpack.c.l.b16 %v68
    %v384 = vunpack.c.l.b16 %v69
    %v385 = vunpack.c.l.b16 %v70
    %v386 = vunpack.c.l.b16 %v71
    %v387 = vunpack.c.l.b16 %v72
    %v388 = vunpack.c.l.b16 %v73
    %v389 = vunpack.c.l.b16 %v74
    %v390 = vunpack.c.l.b16 %v75
    %v391 = vpack.c.b16 %v384, %v383
    %v392 = vpack.c.b16 %v386, %v385
    %v393 = vpack.c.b16 %v388, %v387
    %v394 = vpack.c.b16 %v390, %v389
    %v400 = vrot.slane %v60, 1
    %vm402 = vcmask 523264
    %v404 = vsel %vm402, %v374, 0
    %406 = vmatprep.subr.bf16.mxu0 0
    %407 = vmatpush1.bf16.msra.mxu0 0
    %408 = vmatprep.subr.bf16.mxu0 0
    %409 = vmatpush1.bf16.msra.mxu0 0
    %410 = vmatprep.subr.bf16.mxu0 0
    %411 = vmatpush1.bf16.msra.mxu0 0
    %412 = vmatprep.subr.bf16.mxu0 0
    %413 = vmatpush1.bf16.msra.mxu0 0
    %414 = vmatprep.subr.bf16.mxu0 0
    %415 = vmatpush1.bf16.msra.mxu0 %v394
    %416 = vmatprep.subr.bf16.mxu0 0
    %417 = vmatpush1.bf16.msra.mxu0 %v393
    %418 = vmatprep.subr.bf16.mxu0 0
    %419 = vmatpush1.bf16.msra.mxu0 %v392
    %420 = vmatprep.subr.bf16.mxu0 0
    %421 = vmatpush1.bf16.msra.mxu0 %v391
    %422 = vmatprep.subr.bf16.mxu0 0
    %423 = vmatpush2.bf16.msra.mxu0 0
    %424 = vmatprep.subr.bf16.mxu0 0
    %425 = vmatpush2.bf16.msra.mxu0 0
    %426 = vmatprep.subr.bf16.mxu0 0
    %427 = vmatpush2.bf16.msra.mxu0 0
    %428 = vmatprep.subr.bf16.mxu0 0
    %429 = vmatpush2.bf16.msra.mxu0 0
    %430 = vmatprep.subr.bf16.mxu0 0
    %431 = vmatpush2.bf16.msra.mxu0 0
    %432 = vmatprep.subr.bf16.mxu0 0
    %433 = vmatpush2.bf16.msra.mxu0 0
    %434 = vmatprep.subr.bf16.mxu0 0
    %435 = vmatpush2.bf16.msra.mxu0 0
    %436 = vmatprep.subr.bf16.mxu0 0
    %437 = vmatpush2.bf16.msra.mxu0 0
    %438 = vmatprep.mubr.bf16.mxu0 0
    %439 = vmatmul.mubr.bf16.gmra.mxu0 %v404
    %v440 = vpop.f32.mrf.mxu0
    %v441 = vadd.f32 %v400, %v440
    %v442 = vpop.f32.mrf.mxu0
    %v443 = vpop.f32.mrf.mxu0
    %v444 = vpop.f32.mrf.mxu0
    %445 = vdwg.mxu0
    %vm446 = vcmask 516096
    %447 = vst.msk [vmem:[#allocation9] sm:$0x1] %vm446, %v441
    %v448 = vld [vmem:[#allocation3] sm:$0xff]
    %v449 = vld [vmem:[#allocation3 + $0x8] sm:$0xff]
    %v450 = vpack.c.bf16 %v449, %v448
    %v451 = vlaneseq
    %v452 = vshrl.u32 %v451, 7
    %v453 = vsub.s32 2, %v452
    %v454 = vrot.slane %v60, %v453
    %v459 = vunpack.c.l.b16 %v76
    %v460 = vunpack.c.l.b16 %v77
    %v461 = vunpack.c.l.b16 %v78
    %v462 = vunpack.c.l.b16 %v79
    %v463 = vpack.c.b16 %v460, %v459
    %v464 = vpack.c.b16 %v462, %v461
    %v468 = vsel %vm323, %v450, 0
    %470 = vmatprep.subr.bf16.mxu0 0
    %471 = vmatpush1.bf16.msra.mxu0 0
    %472 = vmatprep.subr.bf16.mxu0 0
    %473 = vmatpush1.bf16.msra.mxu0 0
    %474 = vmatprep.subr.bf16.mxu0 0
    %475 = vmatpush1.bf16.msra.mxu0 0
    %476 = vmatprep.subr.bf16.mxu0 0
    %477 = vmatpush1.bf16.msra.mxu0 0
    %478 = vmatprep.subr.bf16.mxu0 0
    %479 = vmatpush1.bf16.msra.mxu0 0
    %480 = vmatprep.subr.bf16.mxu0 0
    %481 = vmatpush1.bf16.msra.mxu0 0
    %482 = vmatprep.subr.bf16.mxu0 0
    %483 = vmatpush1.bf16.msra.mxu0 %v464
    %484 = vmatprep.subr.bf16.mxu0 0
    %485 = vmatpush1.bf16.msra.mxu0 %v463
    %486 = vmatprep.subr.bf16.mxu0 0
    %487 = vmatpush2.bf16.msra.mxu0 0
    %488 = vmatprep.subr.bf16.mxu0 0
    %489 = vmatpush2.bf16.msra.mxu0 0
    %490 = vmatprep.subr.bf16.mxu0 0
    %491 = vmatpush2.bf16.msra.mxu0 0
    %492 = vmatprep.subr.bf16.mxu0 0
    %493 = vmatpush2.bf16.msra.mxu0 0
    %494 = vmatprep.subr.bf16.mxu0 0
    %495 = vmatpush2.bf16.msra.mxu0 0
    %496 = vmatprep.subr.bf16.mxu0 0
    %497 = vmatpush2.bf16.msra.mxu0 0
    %498 = vmatprep.subr.bf16.mxu0 0
    %499 = vmatpush2.bf16.msra.mxu0 0
    %500 = vmatprep.subr.bf16.mxu0 0
    %501 = vmatpush2.bf16.msra.mxu0 0
    %502 = vmatprep.mubr.bf16.mxu0 0
    %503 = vmatmul.mubr.bf16.gmra.mxu0 %v468
    %v504 = vpop.f32.mrf.mxu0
    %v505 = vadd.f32 %v454, %v504
    %v506 = vpop.f32.mrf.mxu0
    %v507 = vpop.f32.mrf.mxu0
    %v508 = vadd.f32 %v454, %v507
    %v509 = vpop.f32.mrf.mxu0
    %510 = vdwg.mxu0
    %v511 = vlaneseq
    %v512 = vshrl.u32 %v511, 7
    %v513 = vsub.s32 0, %v512
    %v514 = vrot.slane %v441, %v513
    %v515 = vadd.f32 %v505, %v514
    %v516 = vadd.f32 %v508, %v514
    %v517 = vld [vmem:[#allocation6] sm:$0xff]
    %v518 = vld [vmem:[#allocation6 + $0x8] sm:$0xff]
    %v519 = vlaneseq
    %v520 = vshrl.u32 %v519, 7
    %v521 = vadd.s32 %v520, 8
    %vm522 = vcmp.ge.s32.totalorder %v520, 0
    %vm523 = vcmp.ge.s32.totalorder %v521, 0
    %vm524 = vcmp.lt.s32.totalorder %v520, 8
    %vm525 = vcmp.lt.s32.totalorder %v521, 8
    %vm526 = vmand %vm522, %vm524
    %vm527 = vmand %vm523, %vm525
    %vm528 = vcmp.ge.s32.totalorder %v90, 0
    %vm529 = vcmp.lt.s32.totalorder %v90, 8
    %vm530 = vmand %vm528, %vm529
    %vm531 = vcmp.ge.s32.totalorder %v90, 16
    %vm532 = vcmp.lt.s32.totalorder %v90, 24
    %vm533 = vmand %vm531, %vm532
    %vm534 = vmor %vm530, %vm533
    %vm535 = vmand %vm526, %vm534
    %vm536 = vmand %vm527, %vm534
    %vm537 = vcmp.ge.s32.totalorder %v520, 8
    %vm538 = vcmp.ge.s32.totalorder %v521, 8
    %vm539 = vcmp.lt.s32.totalorder %v520, 16
    %vm540 = vcmp.lt.s32.totalorder %v521, 16
    %vm541 = vmand %vm537, %vm539
    %vm542 = vmand %vm538, %vm540
    %vm543 = vcmp.ge.s32.totalorder %v90, 8
    %vm544 = vcmp.lt.s32.totalorder %v90, 16
    %vm545 = vmand %vm543, %vm544
    %vm546 = vcmp.ge.s32.totalorder %v90, 24
    %vm547 = vcmp.lt.s32.totalorder %v90, 32
    %vm548 = vmand %vm546, %vm547
    %vm549 = vmor %vm545, %vm548
    %vm550 = vmand %vm541, %vm549
    %vm551 = vmand %vm542, %vm549
    %vm552 = vmor %vm535, %vm550
    %vm553 = vmor %vm536, %vm551
    %v554 = vsel %vm552, 0.0, -1e+30
    %v555 = vsel %vm553, 0.0, -1e+30
    %v556 = vld [vmem:[%s4] sm:$0xff]
    %v557 = vld [vmem:[%s4 + $0x8] sm:$0xff]
    %v558 = vld [vmem:[%s4 + $0x10] sm:$0xff]
    %v559 = vld [vmem:[%s4 + $0x18] sm:$0xff]
    %v560 = vld [vmem:[%s4 + $0x20] sm:$0xff]
    %v561 = vld [vmem:[%s4 + $0x28] sm:$0xff]
    %v562 = vld [vmem:[%s4 + $0x30] sm:$0xff]
    %v563 = vld [vmem:[%s4 + $0x38] sm:$0xff]
    %v564 = vld [vmem:[%s4 + $0x40] sm:$0xff]
    %v565 = vld [vmem:[%s4 + $0x48] sm:$0xff]
    %v566 = vld [vmem:[%s4 + $0x50] sm:$0xff]
    %v567 = vld [vmem:[%s4 + $0x58] sm:$0xff]
    %v568 = vld [vmem:[%s4 + $0x60] sm:$0xff]
    %v569 = vld [vmem:[%s4 + $0x68] sm:$0xff]
    %v570 = vld [vmem:[%s4 + $0x70] sm:$0xff]
    %v571 = vld [vmem:[%s4 + $0x78] sm:$0xff]
    %v572 = vld [vmem:[%s4 + $0x80] sm:$0xff]
    %v573 = vld [vmem:[%s4 + $0x88] sm:$0xff]
    %v574 = vld [vmem:[%s4 + $0x90] sm:$0xff]
    %v575 = vld [vmem:[%s4 + $0x98] sm:$0xff]
    %v576 = vld [vmem:[%s4 + $0xa0] sm:$0xff]
    %v577 = vld [vmem:[%s4 + $0xa8] sm:$0xff]
    %v578 = vld [vmem:[%s4 + $0xb0] sm:$0xff]
    %v579 = vld [vmem:[%s4 + $0xb8] sm:$0xff]
    %v580 = vxor.u32 %v441, 2147483648
    %v581 = vmul.f32 %v580, 1.442695
    %v582 = vpow.pop %v581
    %v583 = vadd.f32 %v582, 1.0
    %v584 = vrcp.pop %v583
    %v585 = vmul.f32 1.0, %v584
    %v586 = vmul.f32 %v441, %v585
    %v587 = vpack.c.bf16 %v586, %v586
    %v596 = vunpack.c.l.b16 %v558
    %v597 = vunpack.c.h.b16 %v558
    %v598 = vunpack.c.l.b16 %v561
    %v599 = vunpack.c.h.b16 %v561
    %v600 = vunpack.c.l.b16 %v564
    %v601 = vunpack.c.h.b16 %v564
    %v602 = vunpack.c.l.b16 %v567
    %v603 = vunpack.c.h.b16 %v567
    %v604 = vunpack.c.l.b16 %v570
    %v605 = vunpack.c.h.b16 %v570
    %v606 = vunpack.c.l.b16 %v573
    %v607 = vunpack.c.h.b16 %v573
    %v608 = vunpack.c.l.b16 %v576
    %v609 = vunpack.c.h.b16 %v576
    %v610 = vunpack.c.l.b16 %v579
    %v611 = vunpack.c.h.b16 %v579
    %v612 = vpack.c.b16 %v598, %v596
    %v613 = vpack.c.b16 %v599, %v597
    %v614 = vpack.c.b16 %v602, %v600
    %v615 = vpack.c.b16 %v603, %v601
    %v616 = vpack.c.b16 %v606, %v604
    %v617 = vpack.c.b16 %v607, %v605
    %v618 = vpack.c.b16 %v610, %v608
    %v619 = vpack.c.b16 %v611, %v609
    %v629 = vsel %vm402, %v587, 0
    %631 = vmatprep.subr.bf16.mxu0 0
    %632 = vmatpush1.bf16.msra.mxu0 0
    %633 = vmatprep.subr.bf16.mxu0 0
    %634 = vmatpush1.bf16.msra.mxu0 0
    %635 = vmatprep.subr.bf16.mxu0 0
    %636 = vmatpush1.bf16.msra.mxu0 0
    %637 = vmatprep.subr.bf16.mxu0 0
    %638 = vmatpush1.bf16.msra.mxu0 0
    %639 = vmatprep.subr.bf16.mxu0 %v619
    %640 = vmatpush1.bf16.msra.mxu0 %v618
    %641 = vmatprep.subr.bf16.mxu0 %v617
    %642 = vmatpush1.bf16.msra.mxu0 %v616
    %643 = vmatprep.subr.bf16.mxu0 %v615
    %644 = vmatpush1.bf16.msra.mxu0 %v614
    %645 = vmatprep.subr.bf16.mxu0 %v613
    %646 = vmatpush1.bf16.msra.mxu0 %v612
    %647 = vmatprep.subr.bf16.mxu0 0
    %648 = vmatpush2.bf16.msra.mxu0 0
    %649 = vmatprep.subr.bf16.mxu0 0
    %650 = vmatpush2.bf16.msra.mxu0 0
    %651 = vmatprep.subr.bf16.mxu0 0
    %652 = vmatpush2.bf16.msra.mxu0 0
    %653 = vmatprep.subr.bf16.mxu0 0
    %654 = vmatpush2.bf16.msra.mxu0 0
    %655 = vmatprep.subr.bf16.mxu0 0
    %656 = vmatpush2.bf16.msra.mxu0 0
    %657 = vmatprep.subr.bf16.mxu0 0
    %658 = vmatpush2.bf16.msra.mxu0 0
    %659 = vmatprep.subr.bf16.mxu0 0
    %660 = vmatpush2.bf16.msra.mxu0 0
    %661 = vmatprep.subr.bf16.mxu0 0
    %662 = vmatpush2.bf16.msra.mxu0 0
    %663 = vmatprep.mubr.bf16.mxu0 0
    %664 = vmatmul.mubr.bf16.gmra.mxu0 %v629
    %v665 = vpop.f32.mrf.mxu0
    %v666 = vadd.f32 0.0, %v665
    %v667 = vpop.f32.mrf.mxu0
    %v668 = vadd.f32 0.0, %v667
    %v669 = vpop.f32.mrf.mxu0
    %v670 = vpop.f32.mrf.mxu0
    %671 = vdwg.mxu0
    %v673 = vrot.slane %v61, 4
    %v675 = vadd.f32 %v666, %v673
    %v676 = vrot.slane %v61, 5
    %677 = vrot.lane.b32.xlu0 %v676, 64
    %v678 = vpop.permute.xlu0 %677
    %v680 = vadd.f32 %v666, %v678
    %v681 = vrot.slane %v61, 6
    %v683 = vadd.f32 %v668, %v681
    %v684 = vrot.slane %v61, 7
    %685 = vrot.lane.b32.xlu0 %v684, 64
    %v686 = vpop.permute.xlu0 %685
    %v688 = vadd.f32 %v668, %v686
    %v689 = vsel %vm402, %v515, 0.0
    %690 = vadd.xlane.f32.xlu0 %v689
    %v691 = vpop.xlane.xlu0 %690
    %v692 = vsel %vm402, %v516, 0.0
    %693 = vadd.xlane.f32.xlu0 %v692
    %v694 = vpop.xlane.xlu0 %693
    %v695 = vrcp.pop 64.0
    %v696 = vmul.f32 %v691, %v695
    %v697 = vmul.f32 %v694, %v695
    %v698 = vsub.f32 %v515, %v696
    %v699 = vsub.f32 %v516, %v697
    %v700 = vmul.f32 %v698, %v698
    %v701 = vmul.f32 %v699, %v699
    %v702 = vsel %vm402, %v700, 0.0
    %703 = vadd.xlane.f32.xlu0 %v702
    %v704 = vpop.xlane.xlu0 %703
    %v705 = vsel %vm402, %v701, 0.0
    %706 = vadd.xlane.f32.xlu0 %v705
    %v707 = vpop.xlane.xlu0 %706
    %v708 = vmul.f32 %v704, %v695
    %v709 = vmul.f32 %v707, %v695
    %v710 = vadd.f32 %v708, 1e-05
    %v711 = vadd.f32 %v709, 1e-05
    %v712 = vrsqrt.pop %v710
    %v713 = vrsqrt.pop %v711
    %v714 = vmul.f32 %v698, %v712
    %v715 = vmul.f32 %v699, %v713
    %v716 = vlaneseq
    %v717 = vshrl.u32 %v716, 7
    %v718 = vsub.s32 6, %v717
    %v719 = vrot.slane %v60, %v718
    %v720 = vmul.f32 %v714, %v719
    %v721 = vmul.f32 %v715, %v719
    %v722 = vlaneseq
    %v723 = vshrl.u32 %v722, 7
    %v724 = vsub.s32 7, %v723
    %v725 = vrot.slane %v60, %v724
    %v726 = vadd.f32 %v720, %v725
    %v727 = vadd.f32 %v721, %v725
    %v728 = vsel %vm402, %v517, 0.0
    %729 = vadd.xlane.f32.xlu0 %v728
    %v730 = vpop.xlane.xlu0 %729
    %v731 = vsel %vm402, %v518, 0.0
    %732 = vadd.xlane.f32.xlu0 %v731
    %v733 = vpop.xlane.xlu0 %732
    %v734 = vmul.f32 %v730, %v695
    %v735 = vmul.f32 %v733, %v695
    %v736 = vsub.f32 %v517, %v734
    %v737 = vsub.f32 %v518, %v735
    %v738 = vmul.f32 %v736, %v736
    %v739 = vmul.f32 %v737, %v737
    %v740 = vsel %vm402, %v738, 0.0
    %741 = vadd.xlane.f32.xlu0 %v740
    %v742 = vpop.xlane.xlu0 %741
    %v743 = vsel %vm402, %v739, 0.0
    %744 = vadd.xlane.f32.xlu0 %v743
    %v745 = vpop.xlane.xlu0 %744
    %v746 = vmul.f32 %v742, %v695
    %v747 = vmul.f32 %v745, %v695
    %v748 = vadd.f32 %v746, 1e-05
    %v749 = vadd.f32 %v747, 1e-05
    %v750 = vrsqrt.pop %v748
    %v751 = vrsqrt.pop %v749
    %v752 = vmul.f32 %v736, %v750
    %v753 = vmul.f32 %v737, %v751
    %v754 = vlaneseq
    %v755 = vshrl.u32 %v754, 7
    %v756 = vsub.s32 0, %v755
    %v757 = vrot.slane %v61, %v756
    %v758 = vmul.f32 %v752, %v757
    %v759 = vmul.f32 %v753, %v757
    %v760 = vlaneseq
    %v761 = vshrl.u32 %v760, 7
    %v762 = vsub.s32 1, %v761
    %v763 = vrot.slane %v61, %v762
    %v764 = vadd.f32 %v758, %v763
    %v765 = vadd.f32 %v759, %v763
    %v766 = vadd.f32 %v680, 1.0
    %v767 = vlaneseq
    %v768 = vshrl.u32 %v767, 7
    %v769 = vsub.s32 0, %v768
    %v770 = vrot.slane %v766, %v769
    %772 = vrot.lane.b32.xlu0 %v770, 64
    %v773 = vpop.permute.xlu0 %772
    %v775 = vmul.f32 %v764, %v773
    %v776 = vmul.f32 %v765, %v773
    %v777 = vlaneseq
    %v778 = vshrl.u32 %v777, 7
    %v779 = vsub.s32 0, %v778
    %v780 = vrot.slane %v675, %v779
    %v781 = vadd.f32 %v775, %v780
    %v782 = vadd.f32 %v776, %v780
    %v783 = vpack.c.bf16 %v727, %v726
    %v784 = vpack.c.bf16 %v782, %v781
    %v793 = vunpack.c.l.b16 %v556
    %v794 = vunpack.c.h.b16 %v556
    %v795 = vunpack.c.l.b16 %v559
    %v796 = vunpack.c.h.b16 %v559
    %v797 = vunpack.c.l.b16 %v562
    %v798 = vunpack.c.h.b16 %v562
    %v799 = vunpack.c.l.b16 %v565
    %v800 = vunpack.c.h.b16 %v565
    %v801 = vunpack.c.l.b16 %v568
    %v802 = vunpack.c.h.b16 %v568
    %v803 = vunpack.c.l.b16 %v571
    %v804 = vunpack.c.h.b16 %v571
    %v805 = vunpack.c.l.b16 %v574
    %v806 = vunpack.c.h.b16 %v574
    %v807 = vunpack.c.l.b16 %v577
    %v808 = vunpack.c.h.b16 %v577
    %v809 = vpack.c.b16 %v795, %v793
    %v810 = vpack.c.b16 %v796, %v794
    %v811 = vpack.c.b16 %v799, %v797
    %v812 = vpack.c.b16 %v800, %v798
    %v813 = vpack.c.b16 %v803, %v801
    %v814 = vpack.c.b16 %v804, %v802
    %v815 = vpack.c.b16 %v807, %v805
    %v816 = vpack.c.b16 %v808, %v806
    %v826 = vsel %vm402, %v783, 0
    %v829 = vsel %vm402, %v784, 0
    %831 = vmatprep.subr.bf16.mxu0 0
    %832 = vmatpush1.bf16.msra.mxu0 0
    %833 = vmatprep.subr.bf16.mxu0 0
    %834 = vmatpush1.bf16.msra.mxu0 0
    %835 = vmatprep.subr.bf16.mxu0 0
    %836 = vmatpush1.bf16.msra.mxu0 0
    %837 = vmatprep.subr.bf16.mxu0 0
    %838 = vmatpush1.bf16.msra.mxu0 0
    %839 = vmatprep.subr.bf16.mxu0 %v816
    %840 = vmatpush1.bf16.msra.mxu0 %v815
    %841 = vmatprep.subr.bf16.mxu0 %v814
    %842 = vmatpush1.bf16.msra.mxu0 %v813
    %843 = vmatprep.subr.bf16.mxu0 %v812
    %844 = vmatpush1.bf16.msra.mxu0 %v811
    %845 = vmatprep.subr.bf16.mxu0 %v810
    %846 = vmatpush1.bf16.msra.mxu0 %v809
    %847 = vmatprep.subr.bf16.mxu0 0
    %848 = vmatpush2.bf16.msra.mxu0 0
    %849 = vmatprep.subr.bf16.mxu0 0
    %850 = vmatpush2.bf16.msra.mxu0 0
    %851 = vmatprep.subr.bf16.mxu0 0
    %852 = vmatpush2.bf16.msra.mxu0 0
    %853 = vmatprep.subr.bf16.mxu0 0
    %854 = vmatpush2.bf16.msra.mxu0 0
    %855 = vmatprep.subr.bf16.mxu0 0
    %856 = vmatpush2.bf16.msra.mxu0 0
    %857 = vmatprep.subr.bf16.mxu0 0
    %858 = vmatpush2.bf16.msra.mxu0 0
    %859 = vmatprep.subr.bf16.mxu0 0
    %860 = vmatpush2.bf16.msra.mxu0 0
    %861 = vmatprep.subr.bf16.mxu0 0
    %862 = vmatpush2.bf16.msra.mxu0 0
    %863 = vmatprep.mubr.bf16.mxu0 0
    %864 = vmatmul.mubr.bf16.gmra.mxu0 %v826
    %v865 = vpop.f32.mrf.mxu0
    %v866 = vadd.f32 0.0, %v865
    %v867 = vpop.f32.mrf.mxu0
    %v868 = vadd.f32 0.0, %v867
    %v869 = vpop.f32.mrf.mxu0
    %v870 = vadd.f32 0.0, %v869
    %v871 = vpop.f32.mrf.mxu0
    %v872 = vadd.f32 0.0, %v871
    %873 = vmatprep.mubr.bf16.mxu0 0
    %874 = vmatmul.mubr.bf16.gmra.mxu0 %v829
    %v875 = vpop.f32.mrf.mxu0
    %v876 = vadd.f32 0.0, %v875
    %v877 = vpop.f32.mrf.mxu0
    %v878 = vadd.f32 0.0, %v877
    %v879 = vpop.f32.mrf.mxu0
    %v880 = vadd.f32 0.0, %v879
    %v881 = vpop.f32.mrf.mxu0
    %v882 = vadd.f32 0.0, %v881
    %883 = vdwg.mxu0
    %v884 = vpack.c.bf16 %v880, %v876
    %v885 = vpack.c.bf16 %v870, %v866
    %v886 = vpack.c.bf16 %v872, %v868
    %v887 = vpack.c.bf16 %v882, %v878
    %890 = vrot.lane.b32.xlu0 %v885, 64
    %v891 = vpop.permute.xlu0 %890
    %892 = vrot.lane.b32.xlu0 %v884, 64
    %v893 = vpop.permute.xlu0 %892
    %v895 = vsel %vm308, %v884, 0
    %v898 = vsel %vm308, %v891, 0
    %v901 = vsel %vm308, %v893, 0
    %903 = vmatprep.subr.bf16.mxu0 0
    %904 = vmatpush1.bf16.xpose.msra.mxu0 0
    %905 = vmatprep.subr.bf16.mxu0 0
    %906 = vmatpush1.bf16.xpose.msra.mxu0 0
    %907 = vmatprep.subr.bf16.mxu0 0
    %908 = vmatpush1.bf16.xpose.msra.mxu0 0
    %909 = vmatprep.subr.bf16.mxu0 0
    %910 = vmatpush1.bf16.xpose.msra.mxu0 0
    %911 = vmatprep.subr.bf16.mxu0 0
    %912 = vmatpush1.bf16.xpose.msra.mxu0 0
    %913 = vmatprep.subr.bf16.mxu0 0
    %914 = vmatpush1.bf16.xpose.msra.mxu0 0
    %915 = vmatprep.subr.bf16.mxu0 0
    %916 = vmatpush1.bf16.xpose.msra.mxu0 %v901
    %917 = vmatprep.subr.bf16.mxu0 0
    %918 = vmatpush1.bf16.xpose.msra.mxu0 %v898
    %919 = vmatprep.subr.bf16.mxu0 0
    %920 = vmatpush2.bf16.xpose.msra.mxu0 0
    %921 = vmatprep.subr.bf16.mxu0 0
    %922 = vmatpush2.bf16.xpose.msra.mxu0 0
    %923 = vmatprep.subr.bf16.mxu0 0
    %924 = vmatpush2.bf16.xpose.msra.mxu0 0
    %925 = vmatprep.subr.bf16.mxu0 0
    %926 = vmatpush2.bf16.xpose.msra.mxu0 0
    %927 = vmatprep.subr.bf16.mxu0 0
    %928 = vmatpush2.bf16.xpose.msra.mxu0 0
    %929 = vmatprep.subr.bf16.mxu0 0
    %930 = vmatpush2.bf16.xpose.msra.mxu0 0
    %931 = vmatprep.subr.bf16.mxu0 0
    %932 = vmatpush2.bf16.xpose.msra.mxu0 0
    %933 = vmatprep.subr.bf16.mxu0 0
    %934 = vmatpush2.bf16.xpose.msra.mxu0 0
    %935 = vmatprep.mubr.bf16.mxu0 0
    %936 = vmatmul.mubr.bf16.gmra.mxu0 %v895
    %v937 = vpop.f32.mrf.mxu0
    %v938 = vadd.f32 0.0, %v937
    %v939 = vpop.f32.mrf.mxu0
    %v940 = vpop.f32.mrf.mxu0
    %v941 = vadd.f32 0.0, %v940
    %v942 = vpop.f32.mrf.mxu0
    %943 = vdwg.mxu0
    %v944 = vmul.f32 %v938, 0.25
    %v945 = vmul.f32 %v941, 0.25
    %v946 = vadd.f32 %v944, %v554
    %v947 = vadd.f32 %v945, %v555
    %v948 = vsel %vm323, %v946, -inf
    %949 = vmax.xlane.f32.xlu0 %v948
    %v950 = vpop.xlane.xlu0 %949
    %v951 = vsel %vm323, %v947, -inf
    %952 = vmax.xlane.f32.xlu0 %v951
    %v953 = vpop.xlane.xlu0 %952
    %v954 = vsub.f32 %v946, %v950
    %v955 = vsub.f32 %v947, %v953
    %v956 = vmul.f32 %v954, 1.442695
    %v957 = vpow.pop %v956
    %v958 = vmul.f32 %v955, 1.442695
    %v959 = vpow.pop %v958
    %v960 = vsel %vm323, %v957, 0.0
    %961 = vadd.xlane.f32.xlu0 %v960
    %v962 = vpop.xlane.xlu0 %961
    %v963 = vsel %vm323, %v959, 0.0
    %964 = vadd.xlane.f32.xlu0 %v963
    %v965 = vpop.xlane.xlu0 %964
    %v966 = vrcp.pop %v962
    %v967 = vrcp.pop %v965
    %v968 = vmul.f32 %v957, %v966
    %v969 = vmul.f32 %v959, %v967
    %v970 = vpack.c.bf16 %v969, %v968
    %v972 = vsel %vm323, %v970, 0
    %974 = vmatprep.subr.bf16.mxu0 0
    %975 = vmatpush1.bf16.msra.mxu0 0
    %976 = vmatprep.subr.bf16.mxu0 0
    %977 = vmatpush1.bf16.msra.mxu0 0
    %978 = vmatprep.subr.bf16.mxu0 0
    %979 = vmatpush1.bf16.msra.mxu0 0
    %980 = vmatprep.subr.bf16.mxu0 0
    %981 = vmatpush1.bf16.msra.mxu0 0
    %982 = vmatprep.subr.bf16.mxu0 0
    %983 = vmatpush1.bf16.msra.mxu0 0
    %984 = vmatprep.subr.bf16.mxu0 0
    %985 = vmatpush1.bf16.msra.mxu0 0
    %986 = vmatprep.subr.bf16.mxu0 0
    %987 = vmatpush1.bf16.msra.mxu0 %v887
    %988 = vmatprep.subr.bf16.mxu0 0
    %989 = vmatpush1.bf16.msra.mxu0 %v886
    %990 = vmatprep.subr.bf16.mxu0 0
    %991 = vmatpush2.bf16.msra.mxu0 0
    %992 = vmatprep.subr.bf16.mxu0 0
    %993 = vmatpush2.bf16.msra.mxu0 0
    %994 = vmatprep.subr.bf16.mxu0 0
    %995 = vmatpush2.bf16.msra.mxu0 0
    %996 = vmatprep.subr.bf16.mxu0 0
    %997 = vmatpush2.bf16.msra.mxu0 0
    %998 = vmatprep.subr.bf16.mxu0 0
    %999 = vmatpush2.bf16.msra.mxu0 0
    %1000 = vmatprep.subr.bf16.mxu0 0
    %1001 = vmatpush2.bf16.msra.mxu0 0
    %1002 = vmatprep.subr.bf16.mxu0 0
    %1003 = vmatpush2.bf16.msra.mxu0 0
    %1004 = vmatprep.subr.bf16.mxu0 0
    %1005 = vmatpush2.bf16.msra.mxu0 0
    %1006 = vmatprep.mubr.bf16.mxu0 0
    %1007 = vmatmul.mubr.bf16.gmra.mxu0 %v972
    %v1008 = vpop.f32.mrf.mxu0
    %v1009 = vadd.f32 0.0, %v1008
    %v1010 = vpop.f32.mrf.mxu0
    %v1011 = vpop.f32.mrf.mxu0
    %v1012 = vadd.f32 0.0, %v1011
    %v1013 = vpop.f32.mrf.mxu0
    %1014 = vdwg.mxu0
    %1015 = vrot.lane.b32.xlu0 %v884, 112
    %v1016 = vpop.permute.xlu0 %1015
    %1017 = vrot.lane.b32.xlu0 %v885, 48
    %v1018 = vpop.permute.xlu0 %1017
    %1019 = vrot.lane.b32.xlu0 %v884, 48
    %v1020 = vpop.permute.xlu0 %1019
    %v1022 = vsel %vm308, %v1016, 0
    %v1025 = vsel %vm308, %v1018, 0
    %v1028 = vsel %vm308, %v1020, 0
    %1030 = vmatprep.subr.bf16.mxu0 0
    %1031 = vmatpush1.bf16.xpose.msra.mxu0 0
    %1032 = vmatprep.subr.bf16.mxu0 0
    %1033 = vmatpush1.bf16.xpose.msra.mxu0 0
    %1034 = vmatprep.subr.bf16.mxu0 0
    %1035 = vmatpush1.bf16.xpose.msra.mxu0 0
    %1036 = vmatprep.subr.bf16.mxu0 0
    %1037 = vmatpush1.bf16.xpose.msra.mxu0 0
    %1038 = vmatprep.subr.bf16.mxu0 0
    %1039 = vmatpush1.bf16.xpose.msra.mxu0 0
    %1040 = vmatprep.subr.bf16.mxu0 0
    %1041 = vmatpush1.bf16.xpose.msra.mxu0 0
    %1042 = vmatprep.subr.bf16.mxu0 0
    %1043 = vmatpush1.bf16.xpose.msra.mxu0 %v1028
    %1044 = vmatprep.subr.bf16.mxu0 0
    %1045 = vmatpush1.bf16.xpose.msra.mxu0 %v1025
    %1046 = vmatprep.subr.bf16.mxu0 0
    %1047 = vmatpush2.bf16.xpose.msra.mxu0 0
    %1048 = vmatprep.subr.bf16.mxu0 0
    %1049 = vmatpush2.bf16.xpose.msra.mxu0 0
    %1050 = vmatprep.subr.bf16.mxu0 0
    %1051 = vmatpush2.bf16.xpose.msra.mxu0 0
    %1052 = vmatprep.subr.bf16.mxu0 0
    %1053 = vmatpush2.bf16.xpose.msra.mxu0 0
    %1054 = vmatprep.subr.bf16.mxu0 0
    %1055 = vmatpush2.bf16.xpose.msra.mxu0 0
    %1056 = vmatprep.subr.bf16.mxu0 0
    %1057 = vmatpush2.bf16.xpose.msra.mxu0 0
    %1058 = vmatprep.subr.bf16.mxu0 0
    %1059 = vmatpush2.bf16.xpose.msra.mxu0 0
    %1060 = vmatprep.subr.bf16.mxu0 0
    %1061 = vmatpush2.bf16.xpose.msra.mxu0 0
    %1062 = vmatprep.mubr.bf16.mxu0 0
    %1063 = vmatmul.mubr.bf16.gmra.mxu0 %v1022
    %v1064 = vpop.f32.mrf.mxu0
    %v1065 = vadd.f32 0.0, %v1064
    %v1066 = vpop.f32.mrf.mxu0
    %v1067 = vpop.f32.mrf.mxu0
    %v1068 = vadd.f32 0.0, %v1067
    %v1069 = vpop.f32.mrf.mxu0
    %1070 = vdwg.mxu0
    %v1071 = vmul.f32 %v1065, 0.25
    %v1072 = vmul.f32 %v1068, 0.25
    %v1073 = vadd.f32 %v1071, %v554
    %v1074 = vadd.f32 %v1072, %v555
    %v1075 = vsel %vm323, %v1073, -inf
    %1076 = vmax.xlane.f32.xlu0 %v1075
    %v1077 = vpop.xlane.xlu0 %1076
    %v1078 = vsel %vm323, %v1074, -inf
    %1079 = vmax.xlane.f32.xlu0 %v1078
    %v1080 = vpop.xlane.xlu0 %1079
    %v1081 = vsub.f32 %v1073, %v1077
    %v1082 = vsub.f32 %v1074, %v1080
    %v1083 = vmul.f32 %v1081, 1.442695
    %v1084 = vpow.pop %v1083
    %v1085 = vmul.f32 %v1082, 1.442695
    %v1086 = vpow.pop %v1085
    %v1087 = vsel %vm323, %v1084, 0.0
    %1088 = vadd.xlane.f32.xlu0 %v1087
    %v1089 = vpop.xlane.xlu0 %1088
    %v1090 = vsel %vm323, %v1086, 0.0
    %1091 = vadd.xlane.f32.xlu0 %v1090
    %v1092 = vpop.xlane.xlu0 %1091
    %v1093 = vrcp.pop %v1089
    %v1094 = vrcp.pop %v1092
    %v1095 = vmul.f32 %v1084, %v1093
    %v1096 = vmul.f32 %v1086, %v1094
    %v1097 = vpack.c.bf16 %v1096, %v1095
    %1100 = vrot.lane.b32.xlu0 %v886, 112
    %v1101 = vpop.permute.xlu0 %1100
    %1102 = vrot.lane.b32.xlu0 %v887, 112
    %v1103 = vpop.permute.xlu0 %1102
    %v1107 = vsel %vm323, %v1097, 0
    %1109 = vmatprep.subr.bf16.mxu0 0
    %1110 = vmatpush1.bf16.msra.mxu0 0
    %1111 = vmatprep.subr.bf16.mxu0 0
    %1112 = vmatpush1.bf16.msra.mxu0 0
    %1113 = vmatprep.subr.bf16.mxu0 0
    %1114 = vmatpush1.bf16.msra.mxu0 0
    %1115 = vmatprep.subr.bf16.mxu0 0
    %1116 = vmatpush1.bf16.msra.mxu0 0
    %1117 = vmatprep.subr.bf16.mxu0 0
    %1118 = vmatpush1.bf16.msra.mxu0 0
    %1119 = vmatprep.subr.bf16.mxu0 0
    %1120 = vmatpush1.bf16.msra.mxu0 0
    %1121 = vmatprep.subr.bf16.mxu0 0
    %1122 = vmatpush1.bf16.msra.mxu0 %v1103
    %1123 = vmatprep.subr.bf16.mxu0 0
    %1124 = vmatpush1.bf16.msra.mxu0 %v1101
    %1125 = vmatprep.subr.bf16.mxu0 0
    %1126 = vmatpush2.bf16.msra.mxu0 0
    %1127 = vmatprep.subr.bf16.mxu0 0
    %1128 = vmatpush2.bf16.msra.mxu0 0
    %1129 = vmatprep.subr.bf16.mxu0 0
    %1130 = vmatpush2.bf16.msra.mxu0 0
    %1131 = vmatprep.subr.bf16.mxu0 0
    %1132 = vmatpush2.bf16.msra.mxu0 0
    %1133 = vmatprep.subr.bf16.mxu0 0
    %1134 = vmatpush2.bf16.msra.mxu0 0
    %1135 = vmatprep.subr.bf16.mxu0 0
    %1136 = vmatpush2.bf16.msra.mxu0 0
    %1137 = vmatprep.subr.bf16.mxu0 0
    %1138 = vmatpush2.bf16.msra.mxu0 0
    %1139 = vmatprep.subr.bf16.mxu0 0
    %1140 = vmatpush2.bf16.msra.mxu0 0
    %1141 = vmatprep.mubr.bf16.mxu0 0
    %1142 = vmatmul.mubr.bf16.gmra.mxu0 %v1107
    %v1143 = vpop.f32.mrf.mxu0
    %v1144 = vadd.f32 0.0, %v1143
    %v1145 = vpop.f32.mrf.mxu0
    %v1146 = vpop.f32.mrf.mxu0
    %v1147 = vadd.f32 0.0, %v1146
    %v1148 = vpop.f32.mrf.mxu0
    %1149 = vdwg.mxu0
    %1150 = vrot.lane.b32.xlu0 %v884, 96
    %v1151 = vpop.permute.xlu0 %1150
    %1152 = vrot.lane.b32.xlu0 %v885, 32
    %v1153 = vpop.permute.xlu0 %1152
    %1154 = vrot.lane.b32.xlu0 %v884, 32
    %v1155 = vpop.permute.xlu0 %1154
    %v1157 = vsel %vm308, %v1151, 0
    %v1160 = vsel %vm308, %v1153, 0
    %v1163 = vsel %vm308, %v1155, 0
    %1165 = vmatprep.subr.bf16.mxu0 0
    %1166 = vmatpush1.bf16.xpose.msra.mxu0 0
    %1167 = vmatprep.subr.bf16.mxu0 0
    %1168 = vmatpush1.bf16.xpose.msra.mxu0 0
    %1169 = vmatprep.subr.bf16.mxu0 0
    %1170 = vmatpush1.bf16.xpose.msra.mxu0 0
    %1171 = vmatprep.subr.bf16.mxu0 0
    %1172 = vmatpush1.bf16.xpose.msra.mxu0 0
    %1173 = vmatprep.subr.bf16.mxu0 0
    %1174 = vmatpush1.bf16.xpose.msra.mxu0 0
    %1175 = vmatprep.subr.bf16.mxu0 0
    %1176 = vmatpush1.bf16.xpose.msra.mxu0 0
    %1177 = vmatprep.subr.bf16.mxu0 0
    %1178 = vmatpush1.bf16.xpose.msra.mxu0 %v1163
    %1179 = vmatprep.subr.bf16.mxu0 0
    %1180 = vmatpush1.bf16.xpose.msra.mxu0 %v1160
    %1181 = vmatprep.subr.bf16.mxu0 0
    %1182 = vmatpush2.bf16.xpose.msra.mxu0 0
    %1183 = vmatprep.subr.bf16.mxu0 0
    %1184 = vmatpush2.bf16.xpose.msra.mxu0 0
    %1185 = vmatprep.subr.bf16.mxu0 0
    %1186 = vmatpush2.bf16.xpose.msra.mxu0 0
    %1187 = vmatprep.subr.bf16.mxu0 0
    %1188 = vmatpush2.bf16.xpose.msra.mxu0 0
    %1189 = vmatprep.subr.bf16.mxu0 0
    %1190 = vmatpush2.bf16.xpose.msra.mxu0 0
    %1191 = vmatprep.subr.bf16.mxu0 0
    %1192 = vmatpush2.bf16.xpose.msra.mxu0 0
    %1193 = vmatprep.subr.bf16.mxu0 0
    %1194 = vmatpush2.bf16.xpose.msra.mxu0 0
    %1195 = vmatprep.subr.bf16.mxu0 0
    %1196 = vmatpush2.bf16.xpose.msra.mxu0 0
    %1197 = vmatprep.mubr.bf16.mxu0 0
    %1198 = vmatmul.mubr.bf16.gmra.mxu0 %v1157
    %v1199 = vpop.f32.mrf.mxu0
    %v1200 = vadd.f32 0.0, %v1199
    %v1201 = vpop.f32.mrf.mxu0
    %v1202 = vpop.f32.mrf.mxu0
    %v1203 = vadd.f32 0.0, %v1202
    %v1204 = vpop.f32.mrf.mxu0
    %1205 = vdwg.mxu0
    %v1206 = vmul.f32 %v1200, 0.25
    %v1207 = vmul.f32 %v1203, 0.25
    %v1208 = vadd.f32 %v1206, %v554
    %v1209 = vadd.f32 %v1207, %v555
    %v1210 = vsel %vm323, %v1208, -inf
    %1211 = vmax.xlane.f32.xlu0 %v1210
    %v1212 = vpop.xlane.xlu0 %1211
    %v1213 = vsel %vm323, %v1209, -inf
    %1214 = vmax.xlane.f32.xlu0 %v1213
    %v1215 = vpop.xlane.xlu0 %1214
    %v1216 = vsub.f32 %v1208, %v1212
    %v1217 = vsub.f32 %v1209, %v1215
    %v1218 = vmul.f32 %v1216, 1.442695
    %v1219 = vpow.pop %v1218
    %v1220 = vmul.f32 %v1217, 1.442695
    %v1221 = vpow.pop %v1220
    %v1222 = vsel %vm323, %v1219, 0.0
    %1223 = vadd.xlane.f32.xlu0 %v1222
    %v1224 = vpop.xlane.xlu0 %1223
    %v1225 = vsel %vm323, %v1221, 0.0
    %1226 = vadd.xlane.f32.xlu0 %v1225
    %v1227 = vpop.xlane.xlu0 %1226
    %v1228 = vrcp.pop %v1224
    %v1229 = vrcp.pop %v1227
    %v1230 = vmul.f32 %v1219, %v1228
    %v1231 = vmul.f32 %v1221, %v1229
    %v1232 = vpack.c.bf16 %v1231, %v1230
    %1233 = vrot.lane.b32.xlu0 %v886, 96
    %v1234 = vpop.permute.xlu0 %1233
    %1235 = vrot.lane.b32.xlu0 %v887, 96
    %v1236 = vpop.permute.xlu0 %1235
    %v1240 = vsel %vm323, %v1232, 0
    %1242 = vmatprep.subr.bf16.mxu0 0
    %1243 = vmatpush1.bf16.msra.mxu0 0
    %1244 = vmatprep.subr.bf16.mxu0 0
    %1245 = vmatpush1.bf16.msra.mxu0 0
    %1246 = vmatprep.subr.bf16.mxu0 0
    %1247 = vmatpush1.bf16.msra.mxu0 0
    %1248 = vmatprep.subr.bf16.mxu0 0
    %1249 = vmatpush1.bf16.msra.mxu0 0
    %1250 = vmatprep.subr.bf16.mxu0 0
    %1251 = vmatpush1.bf16.msra.mxu0 0
    %1252 = vmatprep.subr.bf16.mxu0 0
    %1253 = vmatpush1.bf16.msra.mxu0 0
    %1254 = vmatprep.subr.bf16.mxu0 0
    %1255 = vmatpush1.bf16.msra.mxu0 %v1236
    %1256 = vmatprep.subr.bf16.mxu0 0
    %1257 = vmatpush1.bf16.msra.mxu0 %v1234
    %1258 = vmatprep.subr.bf16.mxu0 0
    %1259 = vmatpush2.bf16.msra.mxu0 0
    %1260 = vmatprep.subr.bf16.mxu0 0
    %1261 = vmatpush2.bf16.msra.mxu0 0
    %1262 = vmatprep.subr.bf16.mxu0 0
    %1263 = vmatpush2.bf16.msra.mxu0 0
    %1264 = vmatprep.subr.bf16.mxu0 0
    %1265 = vmatpush2.bf16.msra.mxu0 0
    %1266 = vmatprep.subr.bf16.mxu0 0
    %1267 = vmatpush2.bf16.msra.mxu0 0
    %1268 = vmatprep.subr.bf16.mxu0 0
    %1269 = vmatpush2.bf16.msra.mxu0 0
    %1270 = vmatprep.subr.bf16.mxu0 0
    %1271 = vmatpush2.bf16.msra.mxu0 0
    %1272 = vmatprep.subr.bf16.mxu0 0
    %1273 = vmatpush2.bf16.msra.mxu0 0
    %1274 = vmatprep.mubr.bf16.mxu0 0
    %1275 = vmatmul.mubr.bf16.gmra.mxu0 %v1240
    %v1276 = vpop.f32.mrf.mxu0
    %v1277 = vadd.f32 0.0, %v1276
    %v1278 = vpop.f32.mrf.mxu0
    %v1279 = vpop.f32.mrf.mxu0
    %v1280 = vadd.f32 0.0, %v1279
    %v1281 = vpop.f32.mrf.mxu0
    %1282 = vdwg.mxu0
    %1283 = vrot.lane.b32.xlu0 %v884, 80
    %v1284 = vpop.permute.xlu0 %1283
    %1285 = vrot.lane.b32.xlu0 %v885, 16
    %v1286 = vpop.permute.xlu0 %1285
    %1287 = vrot.lane.b32.xlu0 %v884, 16
    %v1288 = vpop.permute.xlu0 %1287
    %v1290 = vsel %vm308, %v1284, 0
    %v1293 = vsel %vm308, %v1286, 0
    %v1296 = vsel %vm308, %v1288, 0
    %1298 = vmatprep.subr.bf16.mxu0 0
    %1299 = vmatpush1.bf16.xpose.msra.mxu0 0
    %1300 = vmatprep.subr.bf16.mxu0 0
    %1301 = vmatpush1.bf16.xpose.msra.mxu0 0
    %1302 = vmatprep.subr.bf16.mxu0 0
    %1303 = vmatpush1.bf16.xpose.msra.mxu0 0
    %1304 = vmatprep.subr.bf16.mxu0 0
    %1305 = vmatpush1.bf16.xpose.msra.mxu0 0
    %1306 = vmatprep.subr.bf16.mxu0 0
    %1307 = vmatpush1.bf16.xpose.msra.mxu0 0
    %1308 = vmatprep.subr.bf16.mxu0 0
    %1309 = vmatpush1.bf16.xpose.msra.mxu0 0
    %1310 = vmatprep.subr.bf16.mxu0 0
    %1311 = vmatpush1.bf16.xpose.msra.mxu0 %v1296
    %1312 = vmatprep.subr.bf16.mxu0 0
    %1313 = vmatpush1.bf16.xpose.msra.mxu0 %v1293
    %1314 = vmatprep.subr.bf16.mxu0 0
    %1315 = vmatpush2.bf16.xpose.msra.mxu0 0
    %1316 = vmatprep.subr.bf16.mxu0 0
    %1317 = vmatpush2.bf16.xpose.msra.mxu0 0
    %1318 = vmatprep.subr.bf16.mxu0 0
    %1319 = vmatpush2.bf16.xpose.msra.mxu0 0
    %1320 = vmatprep.subr.bf16.mxu0 0
    %1321 = vmatpush2.bf16.xpose.msra.mxu0 0
    %1322 = vmatprep.subr.bf16.mxu0 0
    %1323 = vmatpush2.bf16.xpose.msra.mxu0 0
    %1324 = vmatprep.subr.bf16.mxu0 0
    %1325 = vmatpush2.bf16.xpose.msra.mxu0 0
    %1326 = vmatprep.subr.bf16.mxu0 0
    %1327 = vmatpush2.bf16.xpose.msra.mxu0 0
    %1328 = vmatprep.subr.bf16.mxu0 0
    %1329 = vmatpush2.bf16.xpose.msra.mxu0 0
    %1330 = vmatprep.mubr.bf16.mxu0 0
    %1331 = vmatmul.mubr.bf16.gmra.mxu0 %v1290
    %v1332 = vpop.f32.mrf.mxu0
    %v1333 = vadd.f32 0.0, %v1332
    %v1334 = vpop.f32.mrf.mxu0
    %v1335 = vpop.f32.mrf.mxu0
    %v1336 = vadd.f32 0.0, %v1335
    %v1337 = vpop.f32.mrf.mxu0
    %1338 = vdwg.mxu0
    %v1339 = vmul.f32 %v1333, 0.25
    %v1340 = vmul.f32 %v1336, 0.25
    %v1341 = vadd.f32 %v1339, %v554
    %v1342 = vadd.f32 %v1340, %v555
    %v1343 = vsel %vm323, %v1341, -inf
    %1344 = vmax.xlane.f32.xlu0 %v1343
    %v1345 = vpop.xlane.xlu0 %1344
    %v1346 = vsel %vm323, %v1342, -inf
    %1347 = vmax.xlane.f32.xlu0 %v1346
    %v1348 = vpop.xlane.xlu0 %1347
    %v1349 = vsub.f32 %v1341, %v1345
    %v1350 = vsub.f32 %v1342, %v1348
    %v1351 = vmul.f32 %v1349, 1.442695
    %v1352 = vpow.pop %v1351
    %v1353 = vmul.f32 %v1350, 1.442695
    %v1354 = vpow.pop %v1353
    %v1355 = vsel %vm323, %v1352, 0.0
    %1356 = vadd.xlane.f32.xlu0 %v1355
    %v1357 = vpop.xlane.xlu0 %1356
    %v1358 = vsel %vm323, %v1354, 0.0
    %1359 = vadd.xlane.f32.xlu0 %v1358
    %v1360 = vpop.xlane.xlu0 %1359
    %v1361 = vrcp.pop %v1357
    %v1362 = vrcp.pop %v1360
    %v1363 = vmul.f32 %v1352, %v1361
    %v1364 = vmul.f32 %v1354, %v1362
    %v1365 = vpack.c.bf16 %v1364, %v1363
    %1366 = vrot.lane.b32.xlu0 %v886, 80
    %v1367 = vpop.permute.xlu0 %1366
    %1368 = vrot.lane.b32.xlu0 %v887, 80
    %v1369 = vpop.permute.xlu0 %1368
    %v1373 = vsel %vm323, %v1365, 0
    %1375 = vmatprep.subr.bf16.mxu0 0
    %1376 = vmatpush1.bf16.msra.mxu0 0
    %1377 = vmatprep.subr.bf16.mxu0 0
    %1378 = vmatpush1.bf16.msra.mxu0 0
    %1379 = vmatprep.subr.bf16.mxu0 0
    %1380 = vmatpush1.bf16.msra.mxu0 0
    %1381 = vmatprep.subr.bf16.mxu0 0
    %1382 = vmatpush1.bf16.msra.mxu0 0
    %1383 = vmatprep.subr.bf16.mxu0 0
    %1384 = vmatpush1.bf16.msra.mxu0 0
    %1385 = vmatprep.subr.bf16.mxu0 0
    %1386 = vmatpush1.bf16.msra.mxu0 0
    %1387 = vmatprep.subr.bf16.mxu0 0
    %1388 = vmatpush1.bf16.msra.mxu0 %v1369
    %1389 = vmatprep.subr.bf16.mxu0 0
    %1390 = vmatpush1.bf16.msra.mxu0 %v1367
    %1391 = vmatprep.subr.bf16.mxu0 0
    %1392 = vmatpush2.bf16.msra.mxu0 0
    %1393 = vmatprep.subr.bf16.mxu0 0
    %1394 = vmatpush2.bf16.msra.mxu0 0
    %1395 = vmatprep.subr.bf16.mxu0 0
    %1396 = vmatpush2.bf16.msra.mxu0 0
    %1397 = vmatprep.subr.bf16.mxu0 0
    %1398 = vmatpush2.bf16.msra.mxu0 0
    %1399 = vmatprep.subr.bf16.mxu0 0
    %1400 = vmatpush2.bf16.msra.mxu0 0
    %1401 = vmatprep.subr.bf16.mxu0 0
    %1402 = vmatpush2.bf16.msra.mxu0 0
    %1403 = vmatprep.subr.bf16.mxu0 0
    %1404 = vmatpush2.bf16.msra.mxu0 0
    %1405 = vmatprep.subr.bf16.mxu0 0
    %1406 = vmatpush2.bf16.msra.mxu0 0
    %1407 = vmatprep.mubr.bf16.mxu0 0
    %1408 = vmatmul.mubr.bf16.gmra.mxu0 %v1373
    %v1409 = vpop.f32.mrf.mxu0
    %v1410 = vadd.f32 0.0, %v1409
    %v1411 = vpop.f32.mrf.mxu0
    %v1412 = vpop.f32.mrf.mxu0
    %v1413 = vadd.f32 0.0, %v1412
    %v1414 = vpop.f32.mrf.mxu0
    %1415 = vdwg.mxu0
    %1418 = vrot.lane.b32.xlu0 %v1144, 16
    %v1419 = vpop.permute.xlu0 %1418
    %1420 = vrot.lane.b32.xlu0 %v1147, 16
    %v1421 = vpop.permute.xlu0 %1420
    %1426 = vrot.lane.b32.xlu0 %v1277, 32
    %v1427 = vpop.permute.xlu0 %1426
    %1428 = vrot.lane.b32.xlu0 %v1280, 32
    %v1429 = vpop.permute.xlu0 %1428
    %1434 = vrot.lane.b32.xlu0 %v1410, 48
    %v1435 = vpop.permute.xlu0 %1434
    %1436 = vrot.lane.b32.xlu0 %v1413, 48
    %v1437 = vpop.permute.xlu0 %1436
    %v1440 = vsel %vm308, %v1009, %v1419
    %v1441 = vsel %vm308, %v1012, %v1421
    %v1442 = vsel %vm323, %v1440, %v1427
    %v1443 = vsel %vm323, %v1441, %v1429
    %vm1444 = vcmask 392192
    %v1445 = vsel %vm1444, %v1442, %v1435
    %v1446 = vsel %vm1444, %v1443, %v1437
    %v1447 = vpack.c.bf16 %v1446, %v1445
    %1448 = vrot.lane.b32.xlu0 %v810, 64
    %v1449 = vpop.permute.xlu0 %1448
    %1450 = vrot.lane.b32.xlu0 %v812, 64
    %v1451 = vpop.permute.xlu0 %1450
    %1452 = vrot.lane.b32.xlu0 %v814, 64
    %v1453 = vpop.permute.xlu0 %1452
    %1454 = vrot.lane.b32.xlu0 %v816, 64
    %v1455 = vpop.permute.xlu0 %1454
    %v1461 = vsel %vm402, %v1447, 0
    %1463 = vmatprep.subr.bf16.mxu0 0
    %1464 = vmatpush1.bf16.msra.mxu0 0
    %1465 = vmatprep.subr.bf16.mxu0 0
    %1466 = vmatpush1.bf16.msra.mxu0 0
    %1467 = vmatprep.subr.bf16.mxu0 0
    %1468 = vmatpush1.bf16.msra.mxu0 0
    %1469 = vmatprep.subr.bf16.mxu0 0
    %1470 = vmatpush1.bf16.msra.mxu0 0
    %1471 = vmatprep.subr.bf16.mxu0 0
    %1472 = vmatpush1.bf16.msra.mxu0 %v1455
    %1473 = vmatprep.subr.bf16.mxu0 0
    %1474 = vmatpush1.bf16.msra.mxu0 %v1453
    %1475 = vmatprep.subr.bf16.mxu0 0
    %1476 = vmatpush1.bf16.msra.mxu0 %v1451
    %1477 = vmatprep.subr.bf16.mxu0 0
    %1478 = vmatpush1.bf16.msra.mxu0 %v1449
    %1479 = vmatprep.subr.bf16.mxu0 0
    %1480 = vmatpush2.bf16.msra.mxu0 0
    %1481 = vmatprep.subr.bf16.mxu0 0
    %1482 = vmatpush2.bf16.msra.mxu0 0
    %1483 = vmatprep.subr.bf16.mxu0 0
    %1484 = vmatpush2.bf16.msra.mxu0 0
    %1485 = vmatprep.subr.bf16.mxu0 0
    %1486 = vmatpush2.bf16.msra.mxu0 0
    %1487 = vmatprep.subr.bf16.mxu0 0
    %1488 = vmatpush2.bf16.msra.mxu0 0
    %1489 = vmatprep.subr.bf16.mxu0 0
    %1490 = vmatpush2.bf16.msra.mxu0 0
    %1491 = vmatprep.subr.bf16.mxu0 0
    %1492 = vmatpush2.bf16.msra.mxu0 0
    %1493 = vmatprep.subr.bf16.mxu0 0
    %1494 = vmatpush2.bf16.msra.mxu0 0
    %1495 = vmatprep.mubr.bf16.mxu0 0
    %1496 = vmatmul.mubr.bf16.gmra.mxu0 %v1461
    %v1497 = vpop.f32.mrf.mxu0
    %v1498 = vadd.f32 %v517, %v1497
    %v1499 = vpop.f32.mrf.mxu0
    %v1500 = vpop.f32.mrf.mxu0
    %v1501 = vadd.f32 %v518, %v1500
    %v1502 = vpop.f32.mrf.mxu0
    %1503 = vdwg.mxu0
    %v1504 = vsel %vm402, %v1498, 0.0
    %1505 = vadd.xlane.f32.xlu0 %v1504
    %v1506 = vpop.xlane.xlu0 %1505
    %v1507 = vsel %vm402, %v1501, 0.0
    %1508 = vadd.xlane.f32.xlu0 %v1507
    %v1509 = vpop.xlane.xlu0 %1508
    %v1510 = vmul.f32 %v1506, %v695
    %v1511 = vmul.f32 %v1509, %v695
    %v1512 = vsub.f32 %v1498, %v1510
    %v1513 = vsub.f32 %v1501, %v1511
    %v1514 = vmul.f32 %v1512, %v1512
    %v1515 = vmul.f32 %v1513, %v1513
    %v1516 = vsel %vm402, %v1514, 0.0
    %1517 = vadd.xlane.f32.xlu0 %v1516
    %v1518 = vpop.xlane.xlu0 %1517
    %v1519 = vsel %vm402, %v1515, 0.0
    %1520 = vadd.xlane.f32.xlu0 %v1519
    %v1521 = vpop.xlane.xlu0 %1520
    %v1522 = vmul.f32 %v1518, %v695
    %v1523 = vmul.f32 %v1521, %v695
    %v1524 = vadd.f32 %v1522, 1e-05
    %v1525 = vadd.f32 %v1523, 1e-05
    %v1526 = vrsqrt.pop %v1524
    %v1527 = vrsqrt.pop %v1525
    %v1528 = vmul.f32 %v1512, %v1526
    %v1529 = vmul.f32 %v1513, %v1527
    %v1530 = vlaneseq
    %v1531 = vshrl.u32 %v1530, 7
    %v1532 = vsub.s32 2, %v1531
    %v1533 = vrot.slane %v61, %v1532
    %v1534 = vmul.f32 %v1528, %v1533
    %v1535 = vmul.f32 %v1529, %v1533
    %v1536 = vlaneseq
    %v1537 = vshrl.u32 %v1536, 7
    %v1538 = vsub.s32 3, %v1537
    %v1539 = vrot.slane %v61, %v1538
    %v1540 = vadd.f32 %v1534, %v1539
    %v1541 = vadd.f32 %v1535, %v1539
    %v1542 = vadd.f32 %v688, 1.0
    %v1543 = vlaneseq
    %v1544 = vshrl.u32 %v1543, 7
    %v1545 = vsub.s32 0, %v1544
    %v1546 = vrot.slane %v1542, %v1545
    %1548 = vrot.lane.b32.xlu0 %v1546, 64
    %v1549 = vpop.permute.xlu0 %1548
    %v1551 = vmul.f32 %v1540, %v1549
    %v1552 = vmul.f32 %v1541, %v1549
    %v1553 = vlaneseq
    %v1554 = vshrl.u32 %v1553, 7
    %v1555 = vsub.s32 0, %v1554
    %v1556 = vrot.slane %v683, %v1555
    %v1557 = vadd.f32 %v1551, %v1556
    %v1558 = vadd.f32 %v1552, %v1556
    %v1559 = vpack.c.bf16 %v1558, %v1557
    %v1568 = vunpack.c.l.b16 %v557
    %v1569 = vunpack.c.h.b16 %v557
    %v1570 = vunpack.c.l.b16 %v560
    %v1571 = vunpack.c.h.b16 %v560
    %v1572 = vunpack.c.l.b16 %v563
    %v1573 = vunpack.c.h.b16 %v563
    %v1574 = vunpack.c.l.b16 %v566
    %v1575 = vunpack.c.h.b16 %v566
    %v1576 = vunpack.c.l.b16 %v569
    %v1577 = vunpack.c.h.b16 %v569
    %v1578 = vunpack.c.l.b16 %v572
    %v1579 = vunpack.c.h.b16 %v572
    %v1580 = vunpack.c.l.b16 %v575
    %v1581 = vunpack.c.h.b16 %v575
    %v1582 = vunpack.c.l.b16 %v578
    %v1583 = vunpack.c.h.b16 %v578
    %v1584 = vpack.c.b16 %v1570, %v1568
    %v1585 = vpack.c.b16 %v1571, %v1569
    %v1586 = vpack.c.b16 %v1574, %v1572
    %v1587 = vpack.c.b16 %v1575, %v1573
    %v1588 = vpack.c.b16 %v1578, %v1576
    %v1589 = vpack.c.b16 %v1579, %v1577
    %v1590 = vpack.c.b16 %v1582, %v1580
    %v1591 = vpack.c.b16 %v1583, %v1581
    %v1601 = vsel %vm402, %v1559, 0
    %1603 = vmatprep.subr.bf16.mxu0 0
    %1604 = vmatpush1.bf16.msra.mxu0 0
    %1605 = vmatprep.subr.bf16.mxu0 0
    %1606 = vmatpush1.bf16.msra.mxu0 0
    %1607 = vmatprep.subr.bf16.mxu0 0
    %1608 = vmatpush1.bf16.msra.mxu0 0
    %1609 = vmatprep.subr.bf16.mxu0 0
    %1610 = vmatpush1.bf16.msra.mxu0 0
    %1611 = vmatprep.subr.bf16.mxu0 %v1591
    %1612 = vmatpush1.bf16.msra.mxu0 %v1590
    %1613 = vmatprep.subr.bf16.mxu0 %v1589
    %1614 = vmatpush1.bf16.msra.mxu0 %v1588
    %1615 = vmatprep.subr.bf16.mxu0 %v1587
    %1616 = vmatpush1.bf16.msra.mxu0 %v1586
    %1617 = vmatprep.subr.bf16.mxu0 %v1585
    %1618 = vmatpush1.bf16.msra.mxu0 %v1584
    %1619 = vmatprep.subr.bf16.mxu0 0
    %1620 = vmatpush2.bf16.msra.mxu0 0
    %1621 = vmatprep.subr.bf16.mxu0 0
    %1622 = vmatpush2.bf16.msra.mxu0 0
    %1623 = vmatprep.subr.bf16.mxu0 0
    %1624 = vmatpush2.bf16.msra.mxu0 0
    %1625 = vmatprep.subr.bf16.mxu0 0
    %1626 = vmatpush2.bf16.msra.mxu0 0
    %1627 = vmatprep.subr.bf16.mxu0 0
    %1628 = vmatpush2.bf16.msra.mxu0 0
    %1629 = vmatprep.subr.bf16.mxu0 0
    %1630 = vmatpush2.bf16.msra.mxu0 0
    %1631 = vmatprep.subr.bf16.mxu0 0
    %1632 = vmatpush2.bf16.msra.mxu0 0
    %1633 = vmatprep.subr.bf16.mxu0 0
    %1634 = vmatpush2.bf16.msra.mxu0 0
    %1635 = vmatprep.mubr.bf16.mxu0 0
    %1636 = vmatmul.mubr.bf16.gmra.mxu0 %v1601
    %v1637 = vpop.f32.mrf.mxu0
    %v1638 = vadd.f32 0.0, %v1637
    %v1639 = vpop.f32.mrf.mxu0
    %v1640 = vadd.f32 0.0, %v1639
    %v1641 = vpop.f32.mrf.mxu0
    %v1642 = vadd.f32 0.0, %v1641
    %v1643 = vpop.f32.mrf.mxu0
    %v1644 = vadd.f32 0.0, %v1643
    %1645 = vdwg.mxu0
    %v1646 = vmul.f32 %v1638, %v1638
    %v1647 = vmul.f32 %v1640, %v1640
    %v1648 = vmul.f32 %v1642, %v1642
    %v1649 = vmul.f32 %v1644, %v1644
    %v1650 = vmul.f32 %v1638, %v1646
    %v1651 = vmul.f32 %v1640, %v1647
    %v1652 = vmul.f32 %v1642, %v1648
    %v1653 = vmul.f32 %v1644, %v1649
    %v1654 = vmul.f32 %v1650, 0.044715
    %v1655 = vmul.f32 %v1651, 0.044715
    %v1656 = vmul.f32 %v1652, 0.044715
    %v1657 = vmul.f32 %v1653, 0.044715
    %v1658 = vadd.f32 %v1638, %v1654
    %v1659 = vadd.f32 %v1640, %v1655
    %v1660 = vadd.f32 %v1642, %v1656
    %v1661 = vadd.f32 %v1644, %v1657
    %v1662 = vmul.f32 %v1658, 0.7978846
    %v1663 = vmul.f32 %v1659, 0.7978846
    %v1664 = vmul.f32 %v1660, 0.7978846
    %v1665 = vmul.f32 %v1661, 0.7978846
    %v1666 = vtanh.pop %v1662
    %v1667 = vtanh.pop %v1663
    %v1668 = vtanh.pop %v1664
    %v1669 = vtanh.pop %v1665
    %v1670 = vadd.f32 %v1666, 1.0
    %v1671 = vadd.f32 %v1667, 1.0
    %v1672 = vadd.f32 %v1668, 1.0
    %v1673 = vadd.f32 %v1669, 1.0
    %v1674 = vmul.f32 %v1670, 0.5
    %v1675 = vmul.f32 %v1671, 0.5
    %v1676 = vmul.f32 %v1672, 0.5
    %v1677 = vmul.f32 %v1673, 0.5
    %v1678 = vmul.f32 %v1638, %v1674
    %v1679 = vmul.f32 %v1640, %v1675
    %v1680 = vmul.f32 %v1642, %v1676
    %v1681 = vmul.f32 %v1644, %v1677
    %v1682 = vld [vmem:[%s5] sm:$0xf]
    %v1683 = vld [vmem:[%s5 + $0x4] sm:$0xf]
    %v1684 = vld [vmem:[%s5 + $0x8] sm:$0xf]
    %v1685 = vld [vmem:[%s5 + $0xc] sm:$0xf]
    %v1686 = vld [vmem:[%s5 + $0x10] sm:$0xf]
    %v1687 = vld [vmem:[%s5 + $0x14] sm:$0xf]
    %v1688 = vld [vmem:[%s5 + $0x18] sm:$0xf]
    %v1689 = vld [vmem:[%s5 + $0x1c] sm:$0xf]
    %v1690 = vld [vmem:[%s5 + $0x20] sm:$0xf]
    %v1691 = vld [vmem:[%s5 + $0x24] sm:$0xf]
    %v1692 = vld [vmem:[%s5 + $0x28] sm:$0xf]
    %v1693 = vld [vmem:[%s5 + $0x2c] sm:$0xf]
    %v1694 = vld [vmem:[%s5 + $0x30] sm:$0xf]
    %v1695 = vld [vmem:[%s5 + $0x34] sm:$0xf]
    %v1696 = vld [vmem:[%s5 + $0x38] sm:$0xf]
    %v1697 = vld [vmem:[%s5 + $0x3c] sm:$0xf]
    %v1698 = vld [vmem:[%s5 + $0x40] sm:$0xf]
    %v1699 = vld [vmem:[%s5 + $0x44] sm:$0xf]
    %v1700 = vld [vmem:[%s5 + $0x48] sm:$0xf]
    %v1701 = vld [vmem:[%s5 + $0x4c] sm:$0xf]
    %v1702 = vld [vmem:[%s5 + $0x50] sm:$0xf]
    %v1703 = vld [vmem:[%s5 + $0x54] sm:$0xf]
    %v1704 = vld [vmem:[%s5 + $0x58] sm:$0xf]
    %v1705 = vld [vmem:[%s5 + $0x5c] sm:$0xf]
    %v1706 = vld [vmem:[%s5 + $0x60] sm:$0xf]
    %v1707 = vld [vmem:[%s5 + $0x64] sm:$0xf]
    %v1708 = vld [vmem:[%s5 + $0x68] sm:$0xf]
    %v1709 = vld [vmem:[%s5 + $0x6c] sm:$0xf]
    %v1710 = vld [vmem:[%s5 + $0x70] sm:$0xf]
    %v1711 = vld [vmem:[%s5 + $0x74] sm:$0xf]
    %v1712 = vld [vmem:[%s5 + $0x78] sm:$0xf]
    %v1713 = vld [vmem:[%s5 + $0x7c] sm:$0xf]
    %v1714 = vpack.c.bf16 %v1680, %v1678
    %v1715 = vpack.c.bf16 %v1681, %v1679
    %v1748 = vunpack.c.l.b16 %v1682
    %v1749 = vunpack.c.l.b16 %v1683
    %v1750 = vunpack.c.l.b16 %v1684
    %v1751 = vunpack.c.l.b16 %v1685
    %v1752 = vunpack.c.l.b16 %v1686
    %v1753 = vunpack.c.l.b16 %v1687
    %v1754 = vunpack.c.l.b16 %v1688
    %v1755 = vunpack.c.l.b16 %v1689
    %v1756 = vunpack.c.l.b16 %v1690
    %v1757 = vunpack.c.l.b16 %v1691
    %v1758 = vunpack.c.l.b16 %v1692
    %v1759 = vunpack.c.l.b16 %v1693
    %v1760 = vunpack.c.l.b16 %v1694
    %v1761 = vunpack.c.l.b16 %v1695
    %v1762 = vunpack.c.l.b16 %v1696
    %v1763 = vunpack.c.l.b16 %v1697
    %v1764 = vunpack.c.l.b16 %v1698
    %v1765 = vunpack.c.l.b16 %v1699
    %v1766 = vunpack.c.l.b16 %v1700
    %v1767 = vunpack.c.l.b16 %v1701
    %v1768 = vunpack.c.l.b16 %v1702
    %v1769 = vunpack.c.l.b16 %v1703
    %v1770 = vunpack.c.l.b16 %v1704
    %v1771 = vunpack.c.l.b16 %v1705
    %v1772 = vunpack.c.l.b16 %v1706
    %v1773 = vunpack.c.l.b16 %v1707
    %v1774 = vunpack.c.l.b16 %v1708
    %v1775 = vunpack.c.l.b16 %v1709
    %v1776 = vunpack.c.l.b16 %v1710
    %v1777 = vunpack.c.l.b16 %v1711
    %v1778 = vunpack.c.l.b16 %v1712
    %v1779 = vunpack.c.l.b16 %v1713
    %v1780 = vpack.c.b16 %v1749, %v1748
    %v1781 = vpack.c.b16 %v1751, %v1750
    %v1782 = vpack.c.b16 %v1753, %v1752
    %v1783 = vpack.c.b16 %v1755, %v1754
    %v1784 = vpack.c.b16 %v1757, %v1756
    %v1785 = vpack.c.b16 %v1759, %v1758
    %v1786 = vpack.c.b16 %v1761, %v1760
    %v1787 = vpack.c.b16 %v1763, %v1762
    %v1788 = vpack.c.b16 %v1765, %v1764
    %v1789 = vpack.c.b16 %v1767, %v1766
    %v1790 = vpack.c.b16 %v1769, %v1768
    %v1791 = vpack.c.b16 %v1771, %v1770
    %v1792 = vpack.c.b16 %v1773, %v1772
    %v1793 = vpack.c.b16 %v1775, %v1774
    %v1794 = vpack.c.b16 %v1777, %v1776
    %v1795 = vpack.c.b16 %v1779, %v1778
    %1812 = vmatprep.subr.bf16.mxu0 0
    %1813 = vmatpush1.bf16.msra.mxu0 %v1787
    %1814 = vmatprep.subr.bf16.mxu0 0
    %1815 = vmatpush1.bf16.msra.mxu0 %v1786
    %1816 = vmatprep.subr.bf16.mxu0 0
    %1817 = vmatpush1.bf16.msra.mxu0 %v1785
    %1818 = vmatprep.subr.bf16.mxu0 0
    %1819 = vmatpush1.bf16.msra.mxu0 %v1784
    %1820 = vmatprep.subr.bf16.mxu0 0
    %1821 = vmatpush1.bf16.msra.mxu0 %v1783
    %1822 = vmatprep.subr.bf16.mxu0 0
    %1823 = vmatpush1.bf16.msra.mxu0 %v1782
    %1824 = vmatprep.subr.bf16.mxu0 0
    %1825 = vmatpush1.bf16.msra.mxu0 %v1781
    %1826 = vmatprep.subr.bf16.mxu0 0
    %1827 = vmatpush1.bf16.msra.mxu0 %v1780
    %1828 = vmatprep.subr.bf16.mxu0 0
    %1829 = vmatpush2.bf16.msra.mxu0 %v1795
    %1830 = vmatprep.subr.bf16.mxu0 0
    %1831 = vmatpush2.bf16.msra.mxu0 %v1794
    %1832 = vmatprep.subr.bf16.mxu0 0
    %1833 = vmatpush2.bf16.msra.mxu0 %v1793
    %1834 = vmatprep.subr.bf16.mxu0 0
    %1835 = vmatpush2.bf16.msra.mxu0 %v1792
    %1836 = vmatprep.subr.bf16.mxu0 0
    %1837 = vmatpush2.bf16.msra.mxu0 %v1791
    %1838 = vmatprep.subr.bf16.mxu0 0
    %1839 = vmatpush2.bf16.msra.mxu0 %v1790
    %1840 = vmatprep.subr.bf16.mxu0 0
    %1841 = vmatpush2.bf16.msra.mxu0 %v1789
    %1842 = vmatprep.subr.bf16.mxu0 0
    %1843 = vmatpush2.bf16.msra.mxu0 %v1788
    %1844 = vmatprep.mubr.bf16.mxu0 %v1715
    %1845 = vmatmul.mubr.bf16.gmra.mxu0 %v1714
    %v1846 = vpop.f32.mrf.mxu0
    %v1847 = vadd.f32 0.0, %v1846
    %v1848 = vpop.f32.mrf.mxu0
    %v1849 = vpop.f32.mrf.mxu0
    %v1850 = vadd.f32 0.0, %v1849
    %v1851 = vpop.f32.mrf.mxu0
    %1852 = vdwg.mxu0
    %v1853 = vadd.f32 %v1498, %v1847
    %v1854 = vadd.f32 %v1501, %v1850
    %s1855 = scalar_lea.vmem %s4, 192
    %v1856 = vld [vmem:[%s1855] sm:$0xff]
    %v1857 = vld [vmem:[%s1855 + $0x8] sm:$0xff]
    %v1858 = vld [vmem:[%s1855 + $0x10] sm:$0xff]
    %v1859 = vld [vmem:[%s1855 + $0x18] sm:$0xff]
    %v1860 = vld [vmem:[%s1855 + $0x20] sm:$0xff]
    %v1861 = vld [vmem:[%s1855 + $0x28] sm:$0xff]
    %v1862 = vld [vmem:[%s1855 + $0x30] sm:$0xff]
    %v1863 = vld [vmem:[%s1855 + $0x38] sm:$0xff]
    %v1864 = vld [vmem:[%s1855 + $0x40] sm:$0xff]
    %v1865 = vld [vmem:[%s1855 + $0x48] sm:$0xff]
    %v1866 = vld [vmem:[%s1855 + $0x50] sm:$0xff]
    %v1867 = vld [vmem:[%s1855 + $0x58] sm:$0xff]
    %v1868 = vld [vmem:[%s1855 + $0x60] sm:$0xff]
    %v1869 = vld [vmem:[%s1855 + $0x68] sm:$0xff]
    %v1870 = vld [vmem:[%s1855 + $0x70] sm:$0xff]
    %v1871 = vld [vmem:[%s1855 + $0x78] sm:$0xff]
    %v1872 = vld [vmem:[%s1855 + $0x80] sm:$0xff]
    %v1873 = vld [vmem:[%s1855 + $0x88] sm:$0xff]
    %v1874 = vld [vmem:[%s1855 + $0x90] sm:$0xff]
    %v1875 = vld [vmem:[%s1855 + $0x98] sm:$0xff]
    %v1876 = vld [vmem:[%s1855 + $0xa0] sm:$0xff]
    %v1877 = vld [vmem:[%s1855 + $0xa8] sm:$0xff]
    %v1878 = vld [vmem:[%s1855 + $0xb0] sm:$0xff]
    %v1879 = vld [vmem:[%s1855 + $0xb8] sm:$0xff]
    %v1888 = vunpack.c.l.b16 %v1858
    %v1889 = vunpack.c.h.b16 %v1858
    %v1890 = vunpack.c.l.b16 %v1861
    %v1891 = vunpack.c.h.b16 %v1861
    %v1892 = vunpack.c.l.b16 %v1864
    %v1893 = vunpack.c.h.b16 %v1864
    %v1894 = vunpack.c.l.b16 %v1867
    %v1895 = vunpack.c.h.b16 %v1867
    %v1896 = vunpack.c.l.b16 %v1870
    %v1897 = vunpack.c.h.b16 %v1870
    %v1898 = vunpack.c.l.b16 %v1873
    %v1899 = vunpack.c.h.b16 %v1873
    %v1900 = vunpack.c.l.b16 %v1876
    %v1901 = vunpack.c.h.b16 %v1876
    %v1902 = vunpack.c.l.b16 %v1879
    %v1903 = vunpack.c.h.b16 %v1879
    %v1904 = vpack.c.b16 %v1890, %v1888
    %v1905 = vpack.c.b16 %v1891, %v1889
    %v1906 = vpack.c.b16 %v1894, %v1892
    %v1907 = vpack.c.b16 %v1895, %v1893
    %v1908 = vpack.c.b16 %v1898, %v1896
    %v1909 = vpack.c.b16 %v1899, %v1897
    %v1910 = vpack.c.b16 %v1902, %v1900
    %v1911 = vpack.c.b16 %v1903, %v1901
    %1920 = vmatprep.subr.bf16.mxu0 0
    %1921 = vmatpush1.bf16.msra.mxu0 0
    %1922 = vmatprep.subr.bf16.mxu0 0
    %1923 = vmatpush1.bf16.msra.mxu0 0
    %1924 = vmatprep.subr.bf16.mxu0 0
    %1925 = vmatpush1.bf16.msra.mxu0 0
    %1926 = vmatprep.subr.bf16.mxu0 0
    %1927 = vmatpush1.bf16.msra.mxu0 0
    %1928 = vmatprep.subr.bf16.mxu0 %v1911
    %1929 = vmatpush1.bf16.msra.mxu0 %v1910
    %1930 = vmatprep.subr.bf16.mxu0 %v1909
    %1931 = vmatpush1.bf16.msra.mxu0 %v1908
    %1932 = vmatprep.subr.bf16.mxu0 %v1907
    %1933 = vmatpush1.bf16.msra.mxu0 %v1906
    %1934 = vmatprep.subr.bf16.mxu0 %v1905
    %1935 = vmatpush1.bf16.msra.mxu0 %v1904
    %1936 = vmatprep.subr.bf16.mxu0 0
    %1937 = vmatpush2.bf16.msra.mxu0 0
    %1938 = vmatprep.subr.bf16.mxu0 0
    %1939 = vmatpush2.bf16.msra.mxu0 0
    %1940 = vmatprep.subr.bf16.mxu0 0
    %1941 = vmatpush2.bf16.msra.mxu0 0
    %1942 = vmatprep.subr.bf16.mxu0 0
    %1943 = vmatpush2.bf16.msra.mxu0 0
    %1944 = vmatprep.subr.bf16.mxu0 0
    %1945 = vmatpush2.bf16.msra.mxu0 0
    %1946 = vmatprep.subr.bf16.mxu0 0
    %1947 = vmatpush2.bf16.msra.mxu0 0
    %1948 = vmatprep.subr.bf16.mxu0 0
    %1949 = vmatpush2.bf16.msra.mxu0 0
    %1950 = vmatprep.subr.bf16.mxu0 0
    %1951 = vmatpush2.bf16.msra.mxu0 0
    %1952 = vmatprep.mubr.bf16.mxu0 0
    %1953 = vmatmul.mubr.bf16.gmra.mxu0 %v629
    %v1954 = vpop.f32.mrf.mxu0
    %v1955 = vadd.f32 0.0, %v1954
    %v1956 = vpop.f32.mrf.mxu0
    %v1957 = vadd.f32 0.0, %v1956
    %v1958 = vpop.f32.mrf.mxu0
    %v1959 = vpop.f32.mrf.mxu0
    %1960 = vdwg.mxu0
    %v1962 = vrot.slane %v62, 6
    %v1964 = vadd.f32 %v1955, %v1962
    %v1965 = vrot.slane %v62, 7
    %1966 = vrot.lane.b32.xlu0 %v1965, 64
    %v1967 = vpop.permute.xlu0 %1966
    %v1969 = vadd.f32 %v1955, %v1967
    %v1970 = vadd.f32 %v1957, %v63
    %v1972 = vrot.slane %v63, 1
    %1973 = vrot.lane.b32.xlu0 %v1972, 64
    %v1974 = vpop.permute.xlu0 %1973
    %v1976 = vadd.f32 %v1957, %v1974
    %v1977 = vlaneseq
    %v1978 = vshrl.u32 %v1977, 7
    %v1979 = vsub.s32 0, %v1978
    %v1980 = vrot.slane %v62, %v1979
    %v1981 = vmul.f32 %v714, %v1980
    %v1982 = vmul.f32 %v715, %v1980
    %v1983 = vlaneseq
    %v1984 = vshrl.u32 %v1983, 7
    %v1985 = vsub.s32 1, %v1984
    %v1986 = vrot.slane %v62, %v1985
    %v1987 = vadd.f32 %v1981, %v1986
    %v1988 = vadd.f32 %v1982, %v1986
    %v1989 = vsel %vm402, %v1853, 0.0
    %1990 = vadd.xlane.f32.xlu0 %v1989
    %v1991 = vpop.xlane.xlu0 %1990
    %v1992 = vsel %vm402, %v1854, 0.0
    %1993 = vadd.xlane.f32.xlu0 %v1992
    %v1994 = vpop.xlane.xlu0 %1993
    %v1995 = vmul.f32 %v1991, %v695
    %v1996 = vmul.f32 %v1994, %v695
    %v1997 = vsub.f32 %v1853, %v1995
    %v1998 = vsub.f32 %v1854, %v1996
    %v1999 = vmul.f32 %v1997, %v1997
    %v2000 = vmul.f32 %v1998, %v1998
    %v2001 = vsel %vm402, %v1999, 0.0
    %2002 = vadd.xlane.f32.xlu0 %v2001
    %v2003 = vpop.xlane.xlu0 %2002
    %v2004 = vsel %vm402, %v2000, 0.0
    %2005 = vadd.xlane.f32.xlu0 %v2004
    %v2006 = vpop.xlane.xlu0 %2005
    %v2007 = vmul.f32 %v2003, %v695
    %v2008 = vmul.f32 %v2006, %v695
    %v2009 = vadd.f32 %v2007, 1e-05
    %v2010 = vadd.f32 %v2008, 1e-05
    %v2011 = vrsqrt.pop %v2009
    %v2012 = vrsqrt.pop %v2010
    %v2013 = vmul.f32 %v1997, %v2011
    %v2014 = vmul.f32 %v1998, %v2012
    %v2015 = vlaneseq
    %v2016 = vshrl.u32 %v2015, 7
    %v2017 = vsub.s32 2, %v2016
    %v2018 = vrot.slane %v62, %v2017
    %v2019 = vmul.f32 %v2013, %v2018
    %v2020 = vmul.f32 %v2014, %v2018
    %v2021 = vlaneseq
    %v2022 = vshrl.u32 %v2021, 7
    %v2023 = vsub.s32 3, %v2022
    %v2024 = vrot.slane %v62, %v2023
    %v2025 = vadd.f32 %v2019, %v2024
    %v2026 = vadd.f32 %v2020, %v2024
    %v2027 = vadd.f32 %v1969, 1.0
    %v2028 = vlaneseq
    %v2029 = vshrl.u32 %v2028, 7
    %v2030 = vsub.s32 0, %v2029
    %v2031 = vrot.slane %v2027, %v2030
    %2033 = vrot.lane.b32.xlu0 %v2031, 64
    %v2034 = vpop.permute.xlu0 %2033
    %v2036 = vmul.f32 %v2025, %v2034
    %v2037 = vmul.f32 %v2026, %v2034
    %v2038 = vlaneseq
    %v2039 = vshrl.u32 %v2038, 7
    %v2040 = vsub.s32 0, %v2039
    %v2041 = vrot.slane %v1964, %v2040
    %v2042 = vadd.f32 %v2036, %v2041
    %v2043 = vadd.f32 %v2037, %v2041
    %v2044 = vpack.c.bf16 %v1988, %v1987
    %v2045 = vpack.c.bf16 %v2043, %v2042
    %v2054 = vunpack.c.l.b16 %v1856
    %v2055 = vunpack.c.h.b16 %v1856
    %v2056 = vunpack.c.l.b16 %v1859
    %v2057 = vunpack.c.h.b16 %v1859
    %v2058 = vunpack.c.l.b16 %v1862
    %v2059 = vunpack.c.h.b16 %v1862
    %v2060 = vunpack.c.l.b16 %v1865
    %v2061 = vunpack.c.h.b16 %v1865
    %v2062 = vunpack.c.l.b16 %v1868
    %v2063 = vunpack.c.h.b16 %v1868
    %v2064 = vunpack.c.l.b16 %v1871
    %v2065 = vunpack.c.h.b16 %v1871
    %v2066 = vunpack.c.l.b16 %v1874
    %v2067 = vunpack.c.h.b16 %v1874
    %v2068 = vunpack.c.l.b16 %v1877
    %v2069 = vunpack.c.h.b16 %v1877
    %v2070 = vpack.c.b16 %v2056, %v2054
    %v2071 = vpack.c.b16 %v2057, %v2055
    %v2072 = vpack.c.b16 %v2060, %v2058
    %v2073 = vpack.c.b16 %v2061, %v2059
    %v2074 = vpack.c.b16 %v2064, %v2062
    %v2075 = vpack.c.b16 %v2065, %v2063
    %v2076 = vpack.c.b16 %v2068, %v2066
    %v2077 = vpack.c.b16 %v2069, %v2067
    %v2087 = vsel %vm402, %v2044, 0
    %v2090 = vsel %vm402, %v2045, 0
    %2092 = vmatprep.subr.bf16.mxu0 0
    %2093 = vmatpush1.bf16.msra.mxu0 0
    %2094 = vmatprep.subr.bf16.mxu0 0
    %2095 = vmatpush1.bf16.msra.mxu0 0
    %2096 = vmatprep.subr.bf16.mxu0 0
    %2097 = vmatpush1.bf16.msra.mxu0 0
    %2098 = vmatprep.subr.bf16.mxu0 0
    %2099 = vmatpush1.bf16.msra.mxu0 0
    %2100 = vmatprep.subr.bf16.mxu0 %v2077
    %2101 = vmatpush1.bf16.msra.mxu0 %v2076
    %2102 = vmatprep.subr.bf16.mxu0 %v2075
    %2103 = vmatpush1.bf16.msra.mxu0 %v2074
    %2104 = vmatprep.subr.bf16.mxu0 %v2073
    %2105 = vmatpush1.bf16.msra.mxu0 %v2072
    %2106 = vmatprep.subr.bf16.mxu0 %v2071
    %2107 = vmatpush1.bf16.msra.mxu0 %v2070
    %2108 = vmatprep.subr.bf16.mxu0 0
    %2109 = vmatpush2.bf16.msra.mxu0 0
    %2110 = vmatprep.subr.bf16.mxu0 0
    %2111 = vmatpush2.bf16.msra.mxu0 0
    %2112 = vmatprep.subr.bf16.mxu0 0
    %2113 = vmatpush2.bf16.msra.mxu0 0
    %2114 = vmatprep.subr.bf16.mxu0 0
    %2115 = vmatpush2.bf16.msra.mxu0 0
    %2116 = vmatprep.subr.bf16.mxu0 0
    %2117 = vmatpush2.bf16.msra.mxu0 0
    %2118 = vmatprep.subr.bf16.mxu0 0
    %2119 = vmatpush2.bf16.msra.mxu0 0
    %2120 = vmatprep.subr.bf16.mxu0 0
    %2121 = vmatpush2.bf16.msra.mxu0 0
    %2122 = vmatprep.subr.bf16.mxu0 0
    %2123 = vmatpush2.bf16.msra.mxu0 0
    %2124 = vmatprep.mubr.bf16.mxu0 0
    %2125 = vmatmul.mubr.bf16.gmra.mxu0 %v2087
    %v2126 = vpop.f32.mrf.mxu0
    %v2127 = vadd.f32 0.0, %v2126
    %v2128 = vpop.f32.mrf.mxu0
    %v2129 = vadd.f32 0.0, %v2128
    %v2130 = vpop.f32.mrf.mxu0
    %v2131 = vadd.f32 0.0, %v2130
    %v2132 = vpop.f32.mrf.mxu0
    %v2133 = vadd.f32 0.0, %v2132
    %2134 = vmatprep.mubr.bf16.mxu0 0
    %2135 = vmatmul.mubr.bf16.gmra.mxu0 %v2090
    %v2136 = vpop.f32.mrf.mxu0
    %v2137 = vadd.f32 0.0, %v2136
    %v2138 = vpop.f32.mrf.mxu0
    %v2139 = vadd.f32 0.0, %v2138
    %v2140 = vpop.f32.mrf.mxu0
    %v2141 = vadd.f32 0.0, %v2140
    %v2142 = vpop.f32.mrf.mxu0
    %v2143 = vadd.f32 0.0, %v2142
    %2144 = vdwg.mxu0
    %v2145 = vpack.c.bf16 %v2141, %v2137
    %v2146 = vpack.c.bf16 %v2131, %v2127
    %v2147 = vpack.c.bf16 %v2133, %v2129
    %v2148 = vpack.c.bf16 %v2143, %v2139
    %2151 = vrot.lane.b32.xlu0 %v2146, 64
    %v2152 = vpop.permute.xlu0 %2151
    %2153 = vrot.lane.b32.xlu0 %v2145, 64
    %v2154 = vpop.permute.xlu0 %2153
    %v2156 = vsel %vm308, %v2145, 0
    %v2159 = vsel %vm308, %v2152, 0
    %v2162 = vsel %vm308, %v2154, 0
    %2164 = vmatprep.subr.bf16.mxu0 0
    %2165 = vmatpush1.bf16.xpose.msra.mxu0 0
    %2166 = vmatprep.subr.bf16.mxu0 0
    %2167 = vmatpush1.bf16.xpose.msra.mxu0 0
    %2168 = vmatprep.subr.bf16.mxu0 0
    %2169 = vmatpush1.bf16.xpose.msra.mxu0 0
    %2170 = vmatprep.subr.bf16.mxu0 0
    %2171 = vmatpush1.bf16.xpose.msra.mxu0 0
    %2172 = vmatprep.subr.bf16.mxu0 0
    %2173 = vmatpush1.bf16.xpose.msra.mxu0 0
    %2174 = vmatprep.subr.bf16.mxu0 0
    %2175 = vmatpush1.bf16.xpose.msra.mxu0 0
    %2176 = vmatprep.subr.bf16.mxu0 0
    %2177 = vmatpush1.bf16.xpose.msra.mxu0 %v2162
    %2178 = vmatprep.subr.bf16.mxu0 0
    %2179 = vmatpush1.bf16.xpose.msra.mxu0 %v2159
    %2180 = vmatprep.subr.bf16.mxu0 0
    %2181 = vmatpush2.bf16.xpose.msra.mxu0 0
    %2182 = vmatprep.subr.bf16.mxu0 0
    %2183 = vmatpush2.bf16.xpose.msra.mxu0 0
    %2184 = vmatprep.subr.bf16.mxu0 0
    %2185 = vmatpush2.bf16.xpose.msra.mxu0 0
    %2186 = vmatprep.subr.bf16.mxu0 0
    %2187 = vmatpush2.bf16.xpose.msra.mxu0 0
    %2188 = vmatprep.subr.bf16.mxu0 0
    %2189 = vmatpush2.bf16.xpose.msra.mxu0 0
    %2190 = vmatprep.subr.bf16.mxu0 0
    %2191 = vmatpush2.bf16.xpose.msra.mxu0 0
    %2192 = vmatprep.subr.bf16.mxu0 0
    %2193 = vmatpush2.bf16.xpose.msra.mxu0 0
    %2194 = vmatprep.subr.bf16.mxu0 0
    %2195 = vmatpush2.bf16.xpose.msra.mxu0 0
    %2196 = vmatprep.mubr.bf16.mxu0 0
    %2197 = vmatmul.mubr.bf16.gmra.mxu0 %v2156
    %v2198 = vpop.f32.mrf.mxu0
    %v2199 = vadd.f32 0.0, %v2198
    %v2200 = vpop.f32.mrf.mxu0
    %v2201 = vpop.f32.mrf.mxu0
    %v2202 = vadd.f32 0.0, %v2201
    %v2203 = vpop.f32.mrf.mxu0
    %2204 = vdwg.mxu0
    %v2205 = vmul.f32 %v2199, 0.25
    %v2206 = vmul.f32 %v2202, 0.25
    %v2207 = vadd.f32 %v2205, %v554
    %v2208 = vadd.f32 %v2206, %v555
    %v2209 = vsel %vm323, %v2207, -inf
    %2210 = vmax.xlane.f32.xlu0 %v2209
    %v2211 = vpop.xlane.xlu0 %2210
    %v2212 = vsel %vm323, %v2208, -inf
    %2213 = vmax.xlane.f32.xlu0 %v2212
    %v2214 = vpop.xlane.xlu0 %2213
    %v2215 = vsub.f32 %v2207, %v2211
    %v2216 = vsub.f32 %v2208, %v2214
    %v2217 = vmul.f32 %v2215, 1.442695
    %v2218 = vpow.pop %v2217
    %v2219 = vmul.f32 %v2216, 1.442695
    %v2220 = vpow.pop %v2219
    %v2221 = vsel %vm323, %v2218, 0.0
    %2222 = vadd.xlane.f32.xlu0 %v2221
    %v2223 = vpop.xlane.xlu0 %2222
    %v2224 = vsel %vm323, %v2220, 0.0
    %2225 = vadd.xlane.f32.xlu0 %v2224
    %v2226 = vpop.xlane.xlu0 %2225
    %v2227 = vrcp.pop %v2223
    %v2228 = vrcp.pop %v2226
    %v2229 = vmul.f32 %v2218, %v2227
    %v2230 = vmul.f32 %v2220, %v2228
    %v2231 = vpack.c.bf16 %v2230, %v2229
    %v2233 = vsel %vm323, %v2231, 0
    %2235 = vmatprep.subr.bf16.mxu0 0
    %2236 = vmatpush1.bf16.msra.mxu0 0
    %2237 = vmatprep.subr.bf16.mxu0 0
    %2238 = vmatpush1.bf16.msra.mxu0 0
    %2239 = vmatprep.subr.bf16.mxu0 0
    %2240 = vmatpush1.bf16.msra.mxu0 0
    %2241 = vmatprep.subr.bf16.mxu0 0
    %2242 = vmatpush1.bf16.msra.mxu0 0
    %2243 = vmatprep.subr.bf16.mxu0 0
    %2244 = vmatpush1.bf16.msra.mxu0 0
    %2245 = vmatprep.subr.bf16.mxu0 0
    %2246 = vmatpush1.bf16.msra.mxu0 0
    %2247 = vmatprep.subr.bf16.mxu0 0
    %2248 = vmatpush1.bf16.msra.mxu0 %v2148
    %2249 = vmatprep.subr.bf16.mxu0 0
    %2250 = vmatpush1.bf16.msra.mxu0 %v2147
    %2251 = vmatprep.subr.bf16.mxu0 0
    %2252 = vmatpush2.bf16.msra.mxu0 0
    %2253 = vmatprep.subr.bf16.mxu0 0
    %2254 = vmatpush2.bf16.msra.mxu0 0
    %2255 = vmatprep.subr.bf16.mxu0 0
    %2256 = vmatpush2.bf16.msra.mxu0 0
    %2257 = vmatprep.subr.bf16.mxu0 0
    %2258 = vmatpush2.bf16.msra.mxu0 0
    %2259 = vmatprep.subr.bf16.mxu0 0
    %2260 = vmatpush2.bf16.msra.mxu0 0
    %2261 = vmatprep.subr.bf16.mxu0 0
    %2262 = vmatpush2.bf16.msra.mxu0 0
    %2263 = vmatprep.subr.bf16.mxu0 0
    %2264 = vmatpush2.bf16.msra.mxu0 0
    %2265 = vmatprep.subr.bf16.mxu0 0
    %2266 = vmatpush2.bf16.msra.mxu0 0
    %2267 = vmatprep.mubr.bf16.mxu0 0
    %2268 = vmatmul.mubr.bf16.gmra.mxu0 %v2233
    %v2269 = vpop.f32.mrf.mxu0
    %v2270 = vadd.f32 0.0, %v2269
    %v2271 = vpop.f32.mrf.mxu0
    %v2272 = vpop.f32.mrf.mxu0
    %v2273 = vadd.f32 0.0, %v2272
    %v2274 = vpop.f32.mrf.mxu0
    %2275 = vdwg.mxu0
    %2276 = vrot.lane.b32.xlu0 %v2145, 112
    %v2277 = vpop.permute.xlu0 %2276
    %2278 = vrot.lane.b32.xlu0 %v2146, 48
    %v2279 = vpop.permute.xlu0 %2278
    %2280 = vrot.lane.b32.xlu0 %v2145, 48
    %v2281 = vpop.permute.xlu0 %2280
    %v2283 = vsel %vm308, %v2277, 0
    %v2286 = vsel %vm308, %v2279, 0
    %v2289 = vsel %vm308, %v2281, 0
    %2291 = vmatprep.subr.bf16.mxu0 0
    %2292 = vmatpush1.bf16.xpose.msra.mxu0 0
    %2293 = vmatprep.subr.bf16.mxu0 0
    %2294 = vmatpush1.bf16.xpose.msra.mxu0 0
    %2295 = vmatprep.subr.bf16.mxu0 0
    %2296 = vmatpush1.bf16.xpose.msra.mxu0 0
    %2297 = vmatprep.subr.bf16.mxu0 0
    %2298 = vmatpush1.bf16.xpose.msra.mxu0 0
    %2299 = vmatprep.subr.bf16.mxu0 0
    %2300 = vmatpush1.bf16.xpose.msra.mxu0 0
    %2301 = vmatprep.subr.bf16.mxu0 0
    %2302 = vmatpush1.bf16.xpose.msra.mxu0 0
    %2303 = vmatprep.subr.bf16.mxu0 0
    %2304 = vmatpush1.bf16.xpose.msra.mxu0 %v2289
    %2305 = vmatprep.subr.bf16.mxu0 0
    %2306 = vmatpush1.bf16.xpose.msra.mxu0 %v2286
    %2307 = vmatprep.subr.bf16.mxu0 0
    %2308 = vmatpush2.bf16.xpose.msra.mxu0 0
    %2309 = vmatprep.subr.bf16.mxu0 0
    %2310 = vmatpush2.bf16.xpose.msra.mxu0 0
    %2311 = vmatprep.subr.bf16.mxu0 0
    %2312 = vmatpush2.bf16.xpose.msra.mxu0 0
    %2313 = vmatprep.subr.bf16.mxu0 0
    %2314 = vmatpush2.bf16.xpose.msra.mxu0 0
    %2315 = vmatprep.subr.bf16.mxu0 0
    %2316 = vmatpush2.bf16.xpose.msra.mxu0 0
    %2317 = vmatprep.subr.bf16.mxu0 0
    %2318 = vmatpush2.bf16.xpose.msra.mxu0 0
    %2319 = vmatprep.subr.bf16.mxu0 0
    %2320 = vmatpush2.bf16.xpose.msra.mxu0 0
    %2321 = vmatprep.subr.bf16.mxu0 0
    %2322 = vmatpush2.bf16.xpose.msra.mxu0 0
    %2323 = vmatprep.mubr.bf16.mxu0 0
    %2324 = vmatmul.mubr.bf16.gmra.mxu0 %v2283
    %v2325 = vpop.f32.mrf.mxu0
    %v2326 = vadd.f32 0.0, %v2325
    %v2327 = vpop.f32.mrf.mxu0
    %v2328 = vpop.f32.mrf.mxu0
    %v2329 = vadd.f32 0.0, %v2328
    %v2330 = vpop.f32.mrf.mxu0
    %2331 = vdwg.mxu0
    %v2332 = vmul.f32 %v2326, 0.25
    %v2333 = vmul.f32 %v2329, 0.25
    %v2334 = vadd.f32 %v2332, %v554
    %v2335 = vadd.f32 %v2333, %v555
    %v2336 = vsel %vm323, %v2334, -inf
    %2337 = vmax.xlane.f32.xlu0 %v2336
    %v2338 = vpop.xlane.xlu0 %2337
    %v2339 = vsel %vm323, %v2335, -inf
    %2340 = vmax.xlane.f32.xlu0 %v2339
    %v2341 = vpop.xlane.xlu0 %2340
    %v2342 = vsub.f32 %v2334, %v2338
    %v2343 = vsub.f32 %v2335, %v2341
    %v2344 = vmul.f32 %v2342, 1.442695
    %v2345 = vpow.pop %v2344
    %v2346 = vmul.f32 %v2343, 1.442695
    %v2347 = vpow.pop %v2346
    %v2348 = vsel %vm323, %v2345, 0.0
    %2349 = vadd.xlane.f32.xlu0 %v2348
    %v2350 = vpop.xlane.xlu0 %2349
    %v2351 = vsel %vm323, %v2347, 0.0
    %2352 = vadd.xlane.f32.xlu0 %v2351
    %v2353 = vpop.xlane.xlu0 %2352
    %v2354 = vrcp.pop %v2350
    %v2355 = vrcp.pop %v2353
    %v2356 = vmul.f32 %v2345, %v2354
    %v2357 = vmul.f32 %v2347, %v2355
    %v2358 = vpack.c.bf16 %v2357, %v2356
    %2361 = vrot.lane.b32.xlu0 %v2147, 112
    %v2362 = vpop.permute.xlu0 %2361
    %2363 = vrot.lane.b32.xlu0 %v2148, 112
    %v2364 = vpop.permute.xlu0 %2363
    %v2368 = vsel %vm323, %v2358, 0
    %2370 = vmatprep.subr.bf16.mxu0 0
    %2371 = vmatpush1.bf16.msra.mxu0 0
    %2372 = vmatprep.subr.bf16.mxu0 0
    %2373 = vmatpush1.bf16.msra.mxu0 0
    %2374 = vmatprep.subr.bf16.mxu0 0
    %2375 = vmatpush1.bf16.msra.mxu0 0
    %2376 = vmatprep.subr.bf16.mxu0 0
    %2377 = vmatpush1.bf16.msra.mxu0 0
    %2378 = vmatprep.subr.bf16.mxu0 0
    %2379 = vmatpush1.bf16.msra.mxu0 0
    %2380 = vmatprep.subr.bf16.mxu0 0
    %2381 = vmatpush1.bf16.msra.mxu0 0
    %2382 = vmatprep.subr.bf16.mxu0 0
    %2383 = vmatpush1.bf16.msra.mxu0 %v2364
    %2384 = vmatprep.subr.bf16.mxu0 0
    %2385 = vmatpush1.bf16.msra.mxu0 %v2362
    %2386 = vmatprep.subr.bf16.mxu0 0
    %2387 = vmatpush2.bf16.msra.mxu0 0
    %2388 = vmatprep.subr.bf16.mxu0 0
    %2389 = vmatpush2.bf16.msra.mxu0 0
    %2390 = vmatprep.subr.bf16.mxu0 0
    %2391 = vmatpush2.bf16.msra.mxu0 0
    %2392 = vmatprep.subr.bf16.mxu0 0
    %2393 = vmatpush2.bf16.msra.mxu0 0
    %2394 = vmatprep.subr.bf16.mxu0 0
    %2395 = vmatpush2.bf16.msra.mxu0 0
    %2396 = vmatprep.subr.bf16.mxu0 0
    %2397 = vmatpush2.bf16.msra.mxu0 0
    %2398 = vmatprep.subr.bf16.mxu0 0
    %2399 = vmatpush2.bf16.msra.mxu0 0
    %2400 = vmatprep.subr.bf16.mxu0 0
    %2401 = vmatpush2.bf16.msra.mxu0 0
    %2402 = vmatprep.mubr.bf16.mxu0 0
    %2403 = vmatmul.mubr.bf16.gmra.mxu0 %v2368
    %v2404 = vpop.f32.mrf.mxu0
    %v2405 = vadd.f32 0.0, %v2404
    %v2406 = vpop.f32.mrf.mxu0
    %v2407 = vpop.f32.mrf.mxu0
    %v2408 = vadd.f32 0.0, %v2407
    %v2409 = vpop.f32.mrf.mxu0
    %2410 = vdwg.mxu0
    %2411 = vrot.lane.b32.xlu0 %v2145, 96
    %v2412 = vpop.permute.xlu0 %2411
    %2413 = vrot.lane.b32.xlu0 %v2146, 32
    %v2414 = vpop.permute.xlu0 %2413
    %2415 = vrot.lane.b32.xlu0 %v2145, 32
    %v2416 = vpop.permute.xlu0 %2415
    %v2418 = vsel %vm308, %v2412, 0
    %v2421 = vsel %vm308, %v2414, 0
    %v2424 = vsel %vm308, %v2416, 0
    %2426 = vmatprep.subr.bf16.mxu0 0
    %2427 = vmatpush1.bf16.xpose.msra.mxu0 0
    %2428 = vmatprep.subr.bf16.mxu0 0
    %2429 = vmatpush1.bf16.xpose.msra.mxu0 0
    %2430 = vmatprep.subr.bf16.mxu0 0
    %2431 = vmatpush1.bf16.xpose.msra.mxu0 0
    %2432 = vmatprep.subr.bf16.mxu0 0
    %2433 = vmatpush1.bf16.xpose.msra.mxu0 0
    %2434 = vmatprep.subr.bf16.mxu0 0
    %2435 = vmatpush1.bf16.xpose.msra.mxu0 0
    %2436 = vmatprep.subr.bf16.mxu0 0
    %2437 = vmatpush1.bf16.xpose.msra.mxu0 0
    %2438 = vmatprep.subr.bf16.mxu0 0
    %2439 = vmatpush1.bf16.xpose.msra.mxu0 %v2424
    %2440 = vmatprep.subr.bf16.mxu0 0
    %2441 = vmatpush1.bf16.xpose.msra.mxu0 %v2421
    %2442 = vmatprep.subr.bf16.mxu0 0
    %2443 = vmatpush2.bf16.xpose.msra.mxu0 0
    %2444 = vmatprep.subr.bf16.mxu0 0
    %2445 = vmatpush2.bf16.xpose.msra.mxu0 0
    %2446 = vmatprep.subr.bf16.mxu0 0
    %2447 = vmatpush2.bf16.xpose.msra.mxu0 0
    %2448 = vmatprep.subr.bf16.mxu0 0
    %2449 = vmatpush2.bf16.xpose.msra.mxu0 0
    %2450 = vmatprep.subr.bf16.mxu0 0
    %2451 = vmatpush2.bf16.xpose.msra.mxu0 0
    %2452 = vmatprep.subr.bf16.mxu0 0
    %2453 = vmatpush2.bf16.xpose.msra.mxu0 0
    %2454 = vmatprep.subr.bf16.mxu0 0
    %2455 = vmatpush2.bf16.xpose.msra.mxu0 0
    %2456 = vmatprep.subr.bf16.mxu0 0
    %2457 = vmatpush2.bf16.xpose.msra.mxu0 0
    %2458 = vmatprep.mubr.bf16.mxu0 0
    %2459 = vmatmul.mubr.bf16.gmra.mxu0 %v2418
    %v2460 = vpop.f32.mrf.mxu0
    %v2461 = vadd.f32 0.0, %v2460
    %v2462 = vpop.f32.mrf.mxu0
    %v2463 = vpop.f32.mrf.mxu0
    %v2464 = vadd.f32 0.0, %v2463
    %v2465 = vpop.f32.mrf.mxu0
    %2466 = vdwg.mxu0
    %v2467 = vmul.f32 %v2461, 0.25
    %v2468 = vmul.f32 %v2464, 0.25
    %v2469 = vadd.f32 %v2467, %v554
    %v2470 = vadd.f32 %v2468, %v555
    %v2471 = vsel %vm323, %v2469, -inf
    %2472 = vmax.xlane.f32.xlu0 %v2471
    %v2473 = vpop.xlane.xlu0 %2472
    %v2474 = vsel %vm323, %v2470, -inf
    %2475 = vmax.xlane.f32.xlu0 %v2474
    %v2476 = vpop.xlane.xlu0 %2475
    %v2477 = vsub.f32 %v2469, %v2473
    %v2478 = vsub.f32 %v2470, %v2476
    %v2479 = vmul.f32 %v2477, 1.442695
    %v2480 = vpow.pop %v2479
    %v2481 = vmul.f32 %v2478, 1.442695
    %v2482 = vpow.pop %v2481
    %v2483 = vsel %vm323, %v2480, 0.0
    %2484 = vadd.xlane.f32.xlu0 %v2483
    %v2485 = vpop.xlane.xlu0 %2484
    %v2486 = vsel %vm323, %v2482, 0.0
    %2487 = vadd.xlane.f32.xlu0 %v2486
    %v2488 = vpop.xlane.xlu0 %2487
    %v2489 = vrcp.pop %v2485
    %v2490 = vrcp.pop %v2488
    %v2491 = vmul.f32 %v2480, %v2489
    %v2492 = vmul.f32 %v2482, %v2490
    %v2493 = vpack.c.bf16 %v2492, %v2491
    %2494 = vrot.lane.b32.xlu0 %v2147, 96
    %v2495 = vpop.permute.xlu0 %2494
    %2496 = vrot.lane.b32.xlu0 %v2148, 96
    %v2497 = vpop.permute.xlu0 %2496
    %v2501 = vsel %vm323, %v2493, 0
    %2503 = vmatprep.subr.bf16.mxu0 0
    %2504 = vmatpush1.bf16.msra.mxu0 0
    %2505 = vmatprep.subr.bf16.mxu0 0
    %2506 = vmatpush1.bf16.msra.mxu0 0
    %2507 = vmatprep.subr.bf16.mxu0 0
    %2508 = vmatpush1.bf16.msra.mxu0 0
    %2509 = vmatprep.subr.bf16.mxu0 0
    %2510 = vmatpush1.bf16.msra.mxu0 0
    %2511 = vmatprep.subr.bf16.mxu0 0
    %2512 = vmatpush1.bf16.msra.mxu0 0
    %2513 = vmatprep.subr.bf16.mxu0 0
    %2514 = vmatpush1.bf16.msra.mxu0 0
    %2515 = vmatprep.subr.bf16.mxu0 0
    %2516 = vmatpush1.bf16.msra.mxu0 %v2497
    %2517 = vmatprep.subr.bf16.mxu0 0
    %2518 = vmatpush1.bf16.msra.mxu0 %v2495
    %2519 = vmatprep.subr.bf16.mxu0 0
    %2520 = vmatpush2.bf16.msra.mxu0 0
    %2521 = vmatprep.subr.bf16.mxu0 0
    %2522 = vmatpush2.bf16.msra.mxu0 0
    %2523 = vmatprep.subr.bf16.mxu0 0
    %2524 = vmatpush2.bf16.msra.mxu0 0
    %2525 = vmatprep.subr.bf16.mxu0 0
    %2526 = vmatpush2.bf16.msra.mxu0 0
    %2527 = vmatprep.subr.bf16.mxu0 0
    %2528 = vmatpush2.bf16.msra.mxu0 0
    %2529 = vmatprep.subr.bf16.mxu0 0
    %2530 = vmatpush2.bf16.msra.mxu0 0
    %2531 = vmatprep.subr.bf16.mxu0 0
    %2532 = vmatpush2.bf16.msra.mxu0 0
    %2533 = vmatprep.subr.bf16.mxu0 0
    %2534 = vmatpush2.bf16.msra.mxu0 0
    %2535 = vmatprep.mubr.bf16.mxu0 0
    %2536 = vmatmul.mubr.bf16.gmra.mxu0 %v2501
    %v2537 = vpop.f32.mrf.mxu0
    %v2538 = vadd.f32 0.0, %v2537
    %v2539 = vpop.f32.mrf.mxu0
    %v2540 = vpop.f32.mrf.mxu0
    %v2541 = vadd.f32 0.0, %v2540
    %v2542 = vpop.f32.mrf.mxu0
    %2543 = vdwg.mxu0
    %2544 = vrot.lane.b32.xlu0 %v2145, 80
    %v2545 = vpop.permute.xlu0 %2544
    %2546 = vrot.lane.b32.xlu0 %v2146, 16
    %v2547 = vpop.permute.xlu0 %2546
    %2548 = vrot.lane.b32.xlu0 %v2145, 16
    %v2549 = vpop.permute.xlu0 %2548
    %v2551 = vsel %vm308, %v2545, 0
    %v2554 = vsel %vm308, %v2547, 0
    %v2557 = vsel %vm308, %v2549, 0
    %2559 = vmatprep.subr.bf16.mxu0 0
    %2560 = vmatpush1.bf16.xpose.msra.mxu0 0
    %2561 = vmatprep.subr.bf16.mxu0 0
    %2562 = vmatpush1.bf16.xpose.msra.mxu0 0
    %2563 = vmatprep.subr.bf16.mxu0 0
    %2564 = vmatpush1.bf16.xpose.msra.mxu0 0
    %2565 = vmatprep.subr.bf16.mxu0 0
    %2566 = vmatpush1.bf16.xpose.msra.mxu0 0
    %2567 = vmatprep.subr.bf16.mxu0 0
    %2568 = vmatpush1.bf16.xpose.msra.mxu0 0
    %2569 = vmatprep.subr.bf16.mxu0 0
    %2570 = vmatpush1.bf16.xpose.msra.mxu0 0
    %2571 = vmatprep.subr.bf16.mxu0 0
    %2572 = vmatpush1.bf16.xpose.msra.mxu0 %v2557
    %2573 = vmatprep.subr.bf16.mxu0 0
    %2574 = vmatpush1.bf16.xpose.msra.mxu0 %v2554
    %2575 = vmatprep.subr.bf16.mxu0 0
    %2576 = vmatpush2.bf16.xpose.msra.mxu0 0
    %2577 = vmatprep.subr.bf16.mxu0 0
    %2578 = vmatpush2.bf16.xpose.msra.mxu0 0
    %2579 = vmatprep.subr.bf16.mxu0 0
    %2580 = vmatpush2.bf16.xpose.msra.mxu0 0
    %2581 = vmatprep.subr.bf16.mxu0 0
    %2582 = vmatpush2.bf16.xpose.msra.mxu0 0
    %2583 = vmatprep.subr.bf16.mxu0 0
    %2584 = vmatpush2.bf16.xpose.msra.mxu0 0
    %2585 = vmatprep.subr.bf16.mxu0 0
    %2586 = vmatpush2.bf16.xpose.msra.mxu0 0
    %2587 = vmatprep.subr.bf16.mxu0 0
    %2588 = vmatpush2.bf16.xpose.msra.mxu0 0
    %2589 = vmatprep.subr.bf16.mxu0 0
    %2590 = vmatpush2.bf16.xpose.msra.mxu0 0
    %2591 = vmatprep.mubr.bf16.mxu0 0
    %2592 = vmatmul.mubr.bf16.gmra.mxu0 %v2551
    %v2593 = vpop.f32.mrf.mxu0
    %v2594 = vadd.f32 0.0, %v2593
    %v2595 = vpop.f32.mrf.mxu0
    %v2596 = vpop.f32.mrf.mxu0
    %v2597 = vadd.f32 0.0, %v2596
    %v2598 = vpop.f32.mrf.mxu0
    %2599 = vdwg.mxu0
    %v2600 = vmul.f32 %v2594, 0.25
    %v2601 = vmul.f32 %v2597, 0.25
    %v2602 = vadd.f32 %v2600, %v554
    %v2603 = vadd.f32 %v2601, %v555
    %v2604 = vsel %vm323, %v2602, -inf
    %2605 = vmax.xlane.f32.xlu0 %v2604
    %v2606 = vpop.xlane.xlu0 %2605
    %v2607 = vsel %vm323, %v2603, -inf
    %2608 = vmax.xlane.f32.xlu0 %v2607
    %v2609 = vpop.xlane.xlu0 %2608
    %v2610 = vsub.f32 %v2602, %v2606
    %v2611 = vsub.f32 %v2603, %v2609
    %v2612 = vmul.f32 %v2610, 1.442695
    %v2613 = vpow.pop %v2612
    %v2614 = vmul.f32 %v2611, 1.442695
    %v2615 = vpow.pop %v2614
    %v2616 = vsel %vm323, %v2613, 0.0
    %2617 = vadd.xlane.f32.xlu0 %v2616
    %v2618 = vpop.xlane.xlu0 %2617
    %v2619 = vsel %vm323, %v2615, 0.0
    %2620 = vadd.xlane.f32.xlu0 %v2619
    %v2621 = vpop.xlane.xlu0 %2620
    %v2622 = vrcp.pop %v2618
    %v2623 = vrcp.pop %v2621
    %v2624 = vmul.f32 %v2613, %v2622
    %v2625 = vmul.f32 %v2615, %v2623
    %v2626 = vpack.c.bf16 %v2625, %v2624
    %2627 = vrot.lane.b32.xlu0 %v2147, 80
    %v2628 = vpop.permute.xlu0 %2627
    %2629 = vrot.lane.b32.xlu0 %v2148, 80
    %v2630 = vpop.permute.xlu0 %2629
    %v2634 = vsel %vm323, %v2626, 0
    %2636 = vmatprep.subr.bf16.mxu0 0
    %2637 = vmatpush1.bf16.msra.mxu0 0
    %2638 = vmatprep.subr.bf16.mxu0 0
    %2639 = vmatpush1.bf16.msra.mxu0 0
    %2640 = vmatprep.subr.bf16.mxu0 0
    %2641 = vmatpush1.bf16.msra.mxu0 0
    %2642 = vmatprep.subr.bf16.mxu0 0
    %2643 = vmatpush1.bf16.msra.mxu0 0
    %2644 = vmatprep.subr.bf16.mxu0 0
    %2645 = vmatpush1.bf16.msra.mxu0 0
    %2646 = vmatprep.subr.bf16.mxu0 0
    %2647 = vmatpush1.bf16.msra.mxu0 0
    %2648 = vmatprep.subr.bf16.mxu0 0
    %2649 = vmatpush1.bf16.msra.mxu0 %v2630
    %2650 = vmatprep.subr.bf16.mxu0 0
    %2651 = vmatpush1.bf16.msra.mxu0 %v2628
    %2652 = vmatprep.subr.bf16.mxu0 0
    %2653 = vmatpush2.bf16.msra.mxu0 0
    %2654 = vmatprep.subr.bf16.mxu0 0
    %2655 = vmatpush2.bf16.msra.mxu0 0
    %2656 = vmatprep.subr.bf16.mxu0 0
    %2657 = vmatpush2.bf16.msra.mxu0 0
    %2658 = vmatprep.subr.bf16.mxu0 0
    %2659 = vmatpush2.bf16.msra.mxu0 0
    %2660 = vmatprep.subr.bf16.mxu0 0
    %2661 = vmatpush2.bf16.msra.mxu0 0
    %2662 = vmatprep.subr.bf16.mxu0 0
    %2663 = vmatpush2.bf16.msra.mxu0 0
    %2664 = vmatprep.subr.bf16.mxu0 0
    %2665 = vmatpush2.bf16.msra.mxu0 0
    %2666 = vmatprep.subr.bf16.mxu0 0
    %2667 = vmatpush2.bf16.msra.mxu0 0
    %2668 = vmatprep.mubr.bf16.mxu0 0
    %2669 = vmatmul.mubr.bf16.gmra.mxu0 %v2634
    %v2670 = vpop.f32.mrf.mxu0
    %v2671 = vadd.f32 0.0, %v2670
    %v2672 = vpop.f32.mrf.mxu0
    %v2673 = vpop.f32.mrf.mxu0
    %v2674 = vadd.f32 0.0, %v2673
    %v2675 = vpop.f32.mrf.mxu0
    %2676 = vdwg.mxu0
    %2679 = vrot.lane.b32.xlu0 %v2405, 16
    %v2680 = vpop.permute.xlu0 %2679
    %2681 = vrot.lane.b32.xlu0 %v2408, 16
    %v2682 = vpop.permute.xlu0 %2681
    %2687 = vrot.lane.b32.xlu0 %v2538, 32
    %v2688 = vpop.permute.xlu0 %2687
    %2689 = vrot.lane.b32.xlu0 %v2541, 32
    %v2690 = vpop.permute.xlu0 %2689
    %2695 = vrot.lane.b32.xlu0 %v2671, 48
    %v2696 = vpop.permute.xlu0 %2695
    %2697 = vrot.lane.b32.xlu0 %v2674, 48
    %v2698 = vpop.permute.xlu0 %2697
    %v2701 = vsel %vm308, %v2270, %v2680
    %v2702 = vsel %vm308, %v2273, %v2682
    %v2703 = vsel %vm323, %v2701, %v2688
    %v2704 = vsel %vm323, %v2702, %v2690
    %v2705 = vsel %vm1444, %v2703, %v2696
    %v2706 = vsel %vm1444, %v2704, %v2698
    %v2707 = vpack.c.bf16 %v2706, %v2705
    %2708 = vrot.lane.b32.xlu0 %v2071, 64
    %v2709 = vpop.permute.xlu0 %2708
    %2710 = vrot.lane.b32.xlu0 %v2073, 64
    %v2711 = vpop.permute.xlu0 %2710
    %2712 = vrot.lane.b32.xlu0 %v2075, 64
    %v2713 = vpop.permute.xlu0 %2712
    %2714 = vrot.lane.b32.xlu0 %v2077, 64
    %v2715 = vpop.permute.xlu0 %2714
    %v2721 = vsel %vm402, %v2707, 0
    %2723 = vmatprep.subr.bf16.mxu0 0
    %2724 = vmatpush1.bf16.msra.mxu0 0
    %2725 = vmatprep.subr.bf16.mxu0 0
    %2726 = vmatpush1.bf16.msra.mxu0 0
    %2727 = vmatprep.subr.bf16.mxu0 0
    %2728 = vmatpush1.bf16.msra.mxu0 0
    %2729 = vmatprep.subr.bf16.mxu0 0
    %2730 = vmatpush1.bf16.msra.mxu0 0
    %2731 = vmatprep.subr.bf16.mxu0 0
    %2732 = vmatpush1.bf16.msra.mxu0 %v2715
    %2733 = vmatprep.subr.bf16.mxu0 0
    %2734 = vmatpush1.bf16.msra.mxu0 %v2713
    %2735 = vmatprep.subr.bf16.mxu0 0
    %2736 = vmatpush1.bf16.msra.mxu0 %v2711
    %2737 = vmatprep.subr.bf16.mxu0 0
    %2738 = vmatpush1.bf16.msra.mxu0 %v2709
    %2739 = vmatprep.subr.bf16.mxu0 0
    %2740 = vmatpush2.bf16.msra.mxu0 0
    %2741 = vmatprep.subr.bf16.mxu0 0
    %2742 = vmatpush2.bf16.msra.mxu0 0
    %2743 = vmatprep.subr.bf16.mxu0 0
    %2744 = vmatpush2.bf16.msra.mxu0 0
    %2745 = vmatprep.subr.bf16.mxu0 0
    %2746 = vmatpush2.bf16.msra.mxu0 0
    %2747 = vmatprep.subr.bf16.mxu0 0
    %2748 = vmatpush2.bf16.msra.mxu0 0
    %2749 = vmatprep.subr.bf16.mxu0 0
    %2750 = vmatpush2.bf16.msra.mxu0 0
    %2751 = vmatprep.subr.bf16.mxu0 0
    %2752 = vmatpush2.bf16.msra.mxu0 0
    %2753 = vmatprep.subr.bf16.mxu0 0
    %2754 = vmatpush2.bf16.msra.mxu0 0
    %2755 = vmatprep.mubr.bf16.mxu0 0
    %2756 = vmatmul.mubr.bf16.gmra.mxu0 %v2721
    %v2757 = vpop.f32.mrf.mxu0
    %v2758 = vadd.f32 %v1853, %v2757
    %v2759 = vpop.f32.mrf.mxu0
    %v2760 = vpop.f32.mrf.mxu0
    %v2761 = vadd.f32 %v1854, %v2760
    %v2762 = vpop.f32.mrf.mxu0
    %2763 = vdwg.mxu0
    %v2764 = vsel %vm402, %v2758, 0.0
    %2765 = vadd.xlane.f32.xlu0 %v2764
    %v2766 = vpop.xlane.xlu0 %2765
    %v2767 = vsel %vm402, %v2761, 0.0
    %2768 = vadd.xlane.f32.xlu0 %v2767
    %v2769 = vpop.xlane.xlu0 %2768
    %v2770 = vmul.f32 %v2766, %v695
    %v2771 = vmul.f32 %v2769, %v695
    %v2772 = vsub.f32 %v2758, %v2770
    %v2773 = vsub.f32 %v2761, %v2771
    %v2774 = vmul.f32 %v2772, %v2772
    %v2775 = vmul.f32 %v2773, %v2773
    %v2776 = vsel %vm402, %v2774, 0.0
    %2777 = vadd.xlane.f32.xlu0 %v2776
    %v2778 = vpop.xlane.xlu0 %2777
    %v2779 = vsel %vm402, %v2775, 0.0
    %2780 = vadd.xlane.f32.xlu0 %v2779
    %v2781 = vpop.xlane.xlu0 %2780
    %v2782 = vmul.f32 %v2778, %v695
    %v2783 = vmul.f32 %v2781, %v695
    %v2784 = vadd.f32 %v2782, 1e-05
    %v2785 = vadd.f32 %v2783, 1e-05
    %v2786 = vrsqrt.pop %v2784
    %v2787 = vrsqrt.pop %v2785
    %v2788 = vmul.f32 %v2772, %v2786
    %v2789 = vmul.f32 %v2773, %v2787
    %v2790 = vlaneseq
    %v2791 = vshrl.u32 %v2790, 7
    %v2792 = vsub.s32 4, %v2791
    %v2793 = vrot.slane %v62, %v2792
    %v2794 = vmul.f32 %v2788, %v2793
    %v2795 = vmul.f32 %v2789, %v2793
    %v2796 = vlaneseq
    %v2797 = vshrl.u32 %v2796, 7
    %v2798 = vsub.s32 5, %v2797
    %v2799 = vrot.slane %v62, %v2798
    %v2800 = vadd.f32 %v2794, %v2799
    %v2801 = vadd.f32 %v2795, %v2799
    %v2802 = vadd.f32 %v1976, 1.0
    %v2803 = vlaneseq
    %v2804 = vshrl.u32 %v2803, 7
    %v2805 = vsub.s32 0, %v2804
    %v2806 = vrot.slane %v2802, %v2805
    %2808 = vrot.lane.b32.xlu0 %v2806, 64
    %v2809 = vpop.permute.xlu0 %2808
    %v2811 = vmul.f32 %v2800, %v2809
    %v2812 = vmul.f32 %v2801, %v2809
    %v2813 = vlaneseq
    %v2814 = vshrl.u32 %v2813, 7
    %v2815 = vsub.s32 0, %v2814
    %v2816 = vrot.slane %v1970, %v2815
    %v2817 = vadd.f32 %v2811, %v2816
    %v2818 = vadd.f32 %v2812, %v2816
    %v2819 = vpack.c.bf16 %v2818, %v2817
    %v2828 = vunpack.c.l.b16 %v1857
    %v2829 = vunpack.c.h.b16 %v1857
    %v2830 = vunpack.c.l.b16 %v1860
    %v2831 = vunpack.c.h.b16 %v1860
    %v2832 = vunpack.c.l.b16 %v1863
    %v2833 = vunpack.c.h.b16 %v1863
    %v2834 = vunpack.c.l.b16 %v1866
    %v2835 = vunpack.c.h.b16 %v1866
    %v2836 = vunpack.c.l.b16 %v1869
    %v2837 = vunpack.c.h.b16 %v1869
    %v2838 = vunpack.c.l.b16 %v1872
    %v2839 = vunpack.c.h.b16 %v1872
    %v2840 = vunpack.c.l.b16 %v1875
    %v2841 = vunpack.c.h.b16 %v1875
    %v2842 = vunpack.c.l.b16 %v1878
    %v2843 = vunpack.c.h.b16 %v1878
    %v2844 = vpack.c.b16 %v2830, %v2828
    %v2845 = vpack.c.b16 %v2831, %v2829
    %v2846 = vpack.c.b16 %v2834, %v2832
    %v2847 = vpack.c.b16 %v2835, %v2833
    %v2848 = vpack.c.b16 %v2838, %v2836
    %v2849 = vpack.c.b16 %v2839, %v2837
    %v2850 = vpack.c.b16 %v2842, %v2840
    %v2851 = vpack.c.b16 %v2843, %v2841
    %v2861 = vsel %vm402, %v2819, 0
    %2863 = vmatprep.subr.bf16.mxu0 0
    %2864 = vmatpush1.bf16.msra.mxu0 0
    %2865 = vmatprep.subr.bf16.mxu0 0
    %2866 = vmatpush1.bf16.msra.mxu0 0
    %2867 = vmatprep.subr.bf16.mxu0 0
    %2868 = vmatpush1.bf16.msra.mxu0 0
    %2869 = vmatprep.subr.bf16.mxu0 0
    %2870 = vmatpush1.bf16.msra.mxu0 0
    %2871 = vmatprep.subr.bf16.mxu0 %v2851
    %2872 = vmatpush1.bf16.msra.mxu0 %v2850
    %2873 = vmatprep.subr.bf16.mxu0 %v2849
    %2874 = vmatpush1.bf16.msra.mxu0 %v2848
    %2875 = vmatprep.subr.bf16.mxu0 %v2847
    %2876 = vmatpush1.bf16.msra.mxu0 %v2846
    %2877 = vmatprep.subr.bf16.mxu0 %v2845
    %2878 = vmatpush1.bf16.msra.mxu0 %v2844
    %2879 = vmatprep.subr.bf16.mxu0 0
    %2880 = vmatpush2.bf16.msra.mxu0 0
    %2881 = vmatprep.subr.bf16.mxu0 0
    %2882 = vmatpush2.bf16.msra.mxu0 0
    %2883 = vmatprep.subr.bf16.mxu0 0
    %2884 = vmatpush2.bf16.msra.mxu0 0
    %2885 = vmatprep.subr.bf16.mxu0 0
    %2886 = vmatpush2.bf16.msra.mxu0 0
    %2887 = vmatprep.subr.bf16.mxu0 0
    %2888 = vmatpush2.bf16.msra.mxu0 0
    %2889 = vmatprep.subr.bf16.mxu0 0
    %2890 = vmatpush2.bf16.msra.mxu0 0
    %2891 = vmatprep.subr.bf16.mxu0 0
    %2892 = vmatpush2.bf16.msra.mxu0 0
    %2893 = vmatprep.subr.bf16.mxu0 0
    %2894 = vmatpush2.bf16.msra.mxu0 0
    %2895 = vmatprep.mubr.bf16.mxu0 0
    %2896 = vmatmul.mubr.bf16.gmra.mxu0 %v2861
    %v2897 = vpop.f32.mrf.mxu0
    %v2898 = vadd.f32 0.0, %v2897
    %v2899 = vpop.f32.mrf.mxu0
    %v2900 = vadd.f32 0.0, %v2899
    %v2901 = vpop.f32.mrf.mxu0
    %v2902 = vadd.f32 0.0, %v2901
    %v2903 = vpop.f32.mrf.mxu0
    %v2904 = vadd.f32 0.0, %v2903
    %2905 = vdwg.mxu0
    %v2906 = vmul.f32 %v2898, %v2898
    %v2907 = vmul.f32 %v2900, %v2900
    %v2908 = vmul.f32 %v2902, %v2902
    %v2909 = vmul.f32 %v2904, %v2904
    %v2910 = vmul.f32 %v2898, %v2906
    %v2911 = vmul.f32 %v2900, %v2907
    %v2912 = vmul.f32 %v2902, %v2908
    %v2913 = vmul.f32 %v2904, %v2909
    %v2914 = vmul.f32 %v2910, 0.044715
    %v2915 = vmul.f32 %v2911, 0.044715
    %v2916 = vmul.f32 %v2912, 0.044715
    %v2917 = vmul.f32 %v2913, 0.044715
    %v2918 = vadd.f32 %v2898, %v2914
    %v2919 = vadd.f32 %v2900, %v2915
    %v2920 = vadd.f32 %v2902, %v2916
    %v2921 = vadd.f32 %v2904, %v2917
    %v2922 = vmul.f32 %v2918, 0.7978846
    %v2923 = vmul.f32 %v2919, 0.7978846
    %v2924 = vmul.f32 %v2920, 0.7978846
    %v2925 = vmul.f32 %v2921, 0.7978846
    %v2926 = vtanh.pop %v2922
    %v2927 = vtanh.pop %v2923
    %v2928 = vtanh.pop %v2924
    %v2929 = vtanh.pop %v2925
    %v2930 = vadd.f32 %v2926, 1.0
    %v2931 = vadd.f32 %v2927, 1.0
    %v2932 = vadd.f32 %v2928, 1.0
    %v2933 = vadd.f32 %v2929, 1.0
    %v2934 = vmul.f32 %v2930, 0.5
    %v2935 = vmul.f32 %v2931, 0.5
    %v2936 = vmul.f32 %v2932, 0.5
    %v2937 = vmul.f32 %v2933, 0.5
    %v2938 = vmul.f32 %v2898, %v2934
    %v2939 = vmul.f32 %v2900, %v2935
    %v2940 = vmul.f32 %v2902, %v2936
    %v2941 = vmul.f32 %v2904, %v2937
    %s2942 = scalar_lea.vmem %s5, 128
    %v2943 = vld [vmem:[%s2942] sm:$0xf]
    %v2944 = vld [vmem:[%s2942 + $0x4] sm:$0xf]
    %v2945 = vld [vmem:[%s2942 + $0x8] sm:$0xf]
    %v2946 = vld [vmem:[%s2942 + $0xc] sm:$0xf]
    %v2947 = vld [vmem:[%s2942 + $0x10] sm:$0xf]
    %v2948 = vld [vmem:[%s2942 + $0x14] sm:$0xf]
    %v2949 = vld [vmem:[%s2942 + $0x18] sm:$0xf]
    %v2950 = vld [vmem:[%s2942 + $0x1c] sm:$0xf]
    %v2951 = vld [vmem:[%s2942 + $0x20] sm:$0xf]
    %v2952 = vld [vmem:[%s2942 + $0x24] sm:$0xf]
    %v2953 = vld [vmem:[%s2942 + $0x28] sm:$0xf]
    %v2954 = vld [vmem:[%s2942 + $0x2c] sm:$0xf]
    %v2955 = vld [vmem:[%s2942 + $0x30] sm:$0xf]
    %v2956 = vld [vmem:[%s2942 + $0x34] sm:$0xf]
    %v2957 = vld [vmem:[%s2942 + $0x38] sm:$0xf]
    %v2958 = vld [vmem:[%s2942 + $0x3c] sm:$0xf]
    %v2959 = vld [vmem:[%s2942 + $0x40] sm:$0xf]
    %v2960 = vld [vmem:[%s2942 + $0x44] sm:$0xf]
    %v2961 = vld [vmem:[%s2942 + $0x48] sm:$0xf]
    %v2962 = vld [vmem:[%s2942 + $0x4c] sm:$0xf]
    %v2963 = vld [vmem:[%s2942 + $0x50] sm:$0xf]
    %v2964 = vld [vmem:[%s2942 + $0x54] sm:$0xf]
    %v2965 = vld [vmem:[%s2942 + $0x58] sm:$0xf]
    %v2966 = vld [vmem:[%s2942 + $0x5c] sm:$0xf]
    %v2967 = vld [vmem:[%s2942 + $0x60] sm:$0xf]
    %v2968 = vld [vmem:[%s2942 + $0x64] sm:$0xf]
    %v2969 = vld [vmem:[%s2942 + $0x68] sm:$0xf]
    %v2970 = vld [vmem:[%s2942 + $0x6c] sm:$0xf]
    %v2971 = vld [vmem:[%s2942 + $0x70] sm:$0xf]
    %v2972 = vld [vmem:[%s2942 + $0x74] sm:$0xf]
    %v2973 = vld [vmem:[%s2942 + $0x78] sm:$0xf]
    %v2974 = vld [vmem:[%s2942 + $0x7c] sm:$0xf]
    %v2975 = vpack.c.bf16 %v2940, %v2938
    %v2976 = vpack.c.bf16 %v2941, %v2939
    %v3009 = vunpack.c.l.b16 %v2943
    %v3010 = vunpack.c.l.b16 %v2944
    %v3011 = vunpack.c.l.b16 %v2945
    %v3012 = vunpack.c.l.b16 %v2946
    %v3013 = vunpack.c.l.b16 %v2947
    %v3014 = vunpack.c.l.b16 %v2948
    %v3015 = vunpack.c.l.b16 %v2949
    %v3016 = vunpack.c.l.b16 %v2950
    %v3017 = vunpack.c.l.b16 %v2951
    %v3018 = vunpack.c.l.b16 %v2952
    %v3019 = vunpack.c.l.b16 %v2953
    %v3020 = vunpack.c.l.b16 %v2954
    %v3021 = vunpack.c.l.b16 %v2955
    %v3022 = vunpack.c.l.b16 %v2956
    %v3023 = vunpack.c.l.b16 %v2957
    %v3024 = vunpack.c.l.b16 %v2958
    %v3025 = vunpack.c.l.b16 %v2959
    %v3026 = vunpack.c.l.b16 %v2960
    %v3027 = vunpack.c.l.b16 %v2961
    %v3028 = vunpack.c.l.b16 %v2962
    %v3029 = vunpack.c.l.b16 %v2963
    %v3030 = vunpack.c.l.b16 %v2964
    %v3031 = vunpack.c.l.b16 %v2965
    %v3032 = vunpack.c.l.b16 %v2966
    %v3033 = vunpack.c.l.b16 %v2967
    %v3034 = vunpack.c.l.b16 %v2968
    %v3035 = vunpack.c.l.b16 %v2969
    %v3036 = vunpack.c.l.b16 %v2970
    %v3037 = vunpack.c.l.b16 %v2971
    %v3038 = vunpack.c.l.b16 %v2972
    %v3039 = vunpack.c.l.b16 %v2973
    %v3040 = vunpack.c.l.b16 %v2974
    %v3041 = vpack.c.b16 %v3010, %v3009
    %v3042 = vpack.c.b16 %v3012, %v3011
    %v3043 = vpack.c.b16 %v3014, %v3013
    %v3044 = vpack.c.b16 %v3016, %v3015
    %v3045 = vpack.c.b16 %v3018, %v3017
    %v3046 = vpack.c.b16 %v3020, %v3019
    %v3047 = vpack.c.b16 %v3022, %v3021
    %v3048 = vpack.c.b16 %v3024, %v3023
    %v3049 = vpack.c.b16 %v3026, %v3025
    %v3050 = vpack.c.b16 %v3028, %v3027
    %v3051 = vpack.c.b16 %v3030, %v3029
    %v3052 = vpack.c.b16 %v3032, %v3031
    %v3053 = vpack.c.b16 %v3034, %v3033
    %v3054 = vpack.c.b16 %v3036, %v3035
    %v3055 = vpack.c.b16 %v3038, %v3037
    %v3056 = vpack.c.b16 %v3040, %v3039
    %3073 = vmatprep.subr.bf16.mxu0 0
    %3074 = vmatpush1.bf16.msra.mxu0 %v3048
    %3075 = vmatprep.subr.bf16.mxu0 0
    %3076 = vmatpush1.bf16.msra.mxu0 %v3047
    %3077 = vmatprep.subr.bf16.mxu0 0
    %3078 = vmatpush1.bf16.msra.mxu0 %v3046
    %3079 = vmatprep.subr.bf16.mxu0 0
    %3080 = vmatpush1.bf16.msra.mxu0 %v3045
    %3081 = vmatprep.subr.bf16.mxu0 0
    %3082 = vmatpush1.bf16.msra.mxu0 %v3044
    %3083 = vmatprep.subr.bf16.mxu0 0
    %3084 = vmatpush1.bf16.msra.mxu0 %v3043
    %3085 = vmatprep.subr.bf16.mxu0 0
    %3086 = vmatpush1.bf16.msra.mxu0 %v3042
    %3087 = vmatprep.subr.bf16.mxu0 0
    %3088 = vmatpush1.bf16.msra.mxu0 %v3041
    %3089 = vmatprep.subr.bf16.mxu0 0
    %3090 = vmatpush2.bf16.msra.mxu0 %v3056
    %3091 = vmatprep.subr.bf16.mxu0 0
    %3092 = vmatpush2.bf16.msra.mxu0 %v3055
    %3093 = vmatprep.subr.bf16.mxu0 0
    %3094 = vmatpush2.bf16.msra.mxu0 %v3054
    %3095 = vmatprep.subr.bf16.mxu0 0
    %3096 = vmatpush2.bf16.msra.mxu0 %v3053
    %3097 = vmatprep.subr.bf16.mxu0 0
    %3098 = vmatpush2.bf16.msra.mxu0 %v3052
    %3099 = vmatprep.subr.bf16.mxu0 0
    %3100 = vmatpush2.bf16.msra.mxu0 %v3051
    %3101 = vmatprep.subr.bf16.mxu0 0
    %3102 = vmatpush2.bf16.msra.mxu0 %v3050
    %3103 = vmatprep.subr.bf16.mxu0 0
    %3104 = vmatpush2.bf16.msra.mxu0 %v3049
    %3105 = vmatprep.mubr.bf16.mxu0 %v2976
    %3106 = vmatmul.mubr.bf16.gmra.mxu0 %v2975
    %v3107 = vpop.f32.mrf.mxu0
    %v3108 = vadd.f32 0.0, %v3107
    %v3109 = vpop.f32.mrf.mxu0
    %v3110 = vpop.f32.mrf.mxu0
    %v3111 = vadd.f32 0.0, %v3110
    %v3112 = vpop.f32.mrf.mxu0
    %3113 = vdwg.mxu0
    %v3114 = vadd.f32 %v2758, %v3108
    %v3115 = vadd.f32 %v2761, %v3111
    %v3116 = vpack.c.bf16 %v3115, %v3114
    %v3117 = vlaneseq
    %v3118 = vshrl.u32 %v3117, 7
    %v3119 = vsub.s32 3, %v3118
    %v3120 = vrot.slane %v60, %v3119
    %v3129 = vunpack.c.l.b16 %v80
    %v3130 = vunpack.c.l.b16 %v81
    %v3131 = vunpack.c.l.b16 %v82
    %v3132 = vunpack.c.l.b16 %v83
    %v3133 = vunpack.c.l.b16 %v84
    %v3134 = vunpack.c.l.b16 %v85
    %v3135 = vunpack.c.l.b16 %v86
    %v3136 = vunpack.c.l.b16 %v87
    %v3137 = vpack.c.b16 %v3130, %v3129
    %v3138 = vpack.c.b16 %v3132, %v3131
    %v3139 = vpack.c.b16 %v3134, %v3133
    %v3140 = vpack.c.b16 %v3136, %v3135
    %v3146 = vsel %vm402, %v3116, 0
    %3148 = vmatprep.subr.bf16.mxu0 0
    %3149 = vmatpush1.bf16.msra.mxu0 0
    %3150 = vmatprep.subr.bf16.mxu0 0
    %3151 = vmatpush1.bf16.msra.mxu0 0
    %3152 = vmatprep.subr.bf16.mxu0 0
    %3153 = vmatpush1.bf16.msra.mxu0 0
    %3154 = vmatprep.subr.bf16.mxu0 0
    %3155 = vmatpush1.bf16.msra.mxu0 0
    %3156 = vmatprep.subr.bf16.mxu0 0
    %3157 = vmatpush1.bf16.msra.mxu0 %v3140
    %3158 = vmatprep.subr.bf16.mxu0 0
    %3159 = vmatpush1.bf16.msra.mxu0 %v3139
    %3160 = vmatprep.subr.bf16.mxu0 0
    %3161 = vmatpush1.bf16.msra.mxu0 %v3138
    %3162 = vmatprep.subr.bf16.mxu0 0
    %3163 = vmatpush1.bf16.msra.mxu0 %v3137
    %3164 = vmatprep.subr.bf16.mxu0 0
    %3165 = vmatpush2.bf16.msra.mxu0 0
    %3166 = vmatprep.subr.bf16.mxu0 0
    %3167 = vmatpush2.bf16.msra.mxu0 0
    %3168 = vmatprep.subr.bf16.mxu0 0
    %3169 = vmatpush2.bf16.msra.mxu0 0
    %3170 = vmatprep.subr.bf16.mxu0 0
    %3171 = vmatpush2.bf16.msra.mxu0 0
    %3172 = vmatprep.subr.bf16.mxu0 0
    %3173 = vmatpush2.bf16.msra.mxu0 0
    %3174 = vmatprep.subr.bf16.mxu0 0
    %3175 = vmatpush2.bf16.msra.mxu0 0
    %3176 = vmatprep.subr.bf16.mxu0 0
    %3177 = vmatpush2.bf16.msra.mxu0 0
    %3178 = vmatprep.subr.bf16.mxu0 0
    %3179 = vmatpush2.bf16.msra.mxu0 0
    %3180 = vmatprep.mubr.bf16.mxu0 0
    %3181 = vmatmul.mubr.bf16.gmra.mxu0 %v3146
    %v3182 = vpop.f32.mrf.mxu0
    %v3183 = vadd.f32 %v3120, %v3182
    %v3184 = vpop.f32.mrf.mxu0
    %v3185 = vpop.f32.mrf.mxu0
    %v3186 = vadd.f32 %v3120, %v3185
    %v3187 = vpop.f32.mrf.mxu0
    %3188 = vdwg.mxu0
    %v3189 = vsel %vm402, %v3183, 0.0
    %3190 = vadd.xlane.f32.xlu0 %v3189
    %v3191 = vpop.xlane.xlu0 %3190
    %v3192 = vsel %vm402, %v3186, 0.0
    %3193 = vadd.xlane.f32.xlu0 %v3192
    %v3194 = vpop.xlane.xlu0 %3193
    %v3195 = vmul.f32 %v3191, %v695
    %v3196 = vmul.f32 %v3194, %v695
    %v3197 = vsub.f32 %v3183, %v3195
    %v3198 = vsub.f32 %v3186, %v3196
    %v3199 = vmul.f32 %v3197, %v3197
    %v3200 = vmul.f32 %v3198, %v3198
    %v3201 = vsel %vm402, %v3199, 0.0
    %3202 = vadd.xlane.f32.xlu0 %v3201
    %v3203 = vpop.xlane.xlu0 %3202
    %v3204 = vsel %vm402, %v3200, 0.0
    %3205 = vadd.xlane.f32.xlu0 %v3204
    %v3206 = vpop.xlane.xlu0 %3205
    %v3207 = vmul.f32 %v3203, %v695
    %v3208 = vmul.f32 %v3206, %v695
    %v3209 = vadd.f32 %v3207, 1e-05
    %v3210 = vadd.f32 %v3208, 1e-05
    %v3211 = vrsqrt.pop %v3209
    %v3212 = vrsqrt.pop %v3210
    %v3213 = vmul.f32 %v3197, %v3211
    %v3214 = vmul.f32 %v3198, %v3212
    %v3215 = vlaneseq
    %v3216 = vshrl.u32 %v3215, 7
    %v3217 = vsub.s32 4, %v3216
    %v3218 = vrot.slane %v60, %v3217
    %v3219 = vmul.f32 %v3213, %v3218
    %v3220 = vmul.f32 %v3214, %v3218
    %v3221 = vlaneseq
    %v3222 = vshrl.u32 %v3221, 7
    %v3223 = vsub.s32 5, %v3222
    %v3224 = vrot.slane %v60, %v3223
    %v3225 = vadd.f32 %v3219, %v3224
    %v3226 = vadd.f32 %v3220, %v3224
    %3227 = vst.msk [vmem:[#allocation8] sm:$0xff] %vm402, %v3225
    %3228 = vst.msk [vmem:[#allocation8 + $0x8] sm:$0xff] %vm402, %v3226
    // Predicated region
    $region38: #{tpu_custom_call.1} parent=1 // pred_check
      _
    $region39: #{tpu_custom_call.1} parent=1 // pred_check_branch
      %3230 = sbr.rel (0) target = $region41
    $region40: #{tpu_custom_call.1} parent=1 // pred_region
      %s3232 = ssub.s32 256, 256
      %3233 = vsyncadd [#allocation5], %s3232
      %s3234 = sshll.u32 [#allocation8], 4
      %s3235 = int_to_ptr.vmem [resolvable:$true] %s3234
      %3240 = dma.vmem_to_hbm [thread:$0]  %s3235, 256, %s7, [#allocation5], 128, 128, 8
    $region41: #{tpu_custom_call.1} parent=1 // pred_fallthru
      _
    // Predicated region
    $region42: #{tpu_custom_call.1} parent=1 // pred_check
      _
    $region43: #{tpu_custom_call.1} parent=1 // pred_check_branch
      %3242 = sbr.rel (0) target = $region45
    $region44: #{tpu_custom_call.1} parent=1 // pred_region
      %s3244 = ssub.s32 16, 16
      %3245 = vsyncadd [#allocation10], %s3244
      %s3247 = sshll.u32 [#allocation9], 4
      %s3248 = int_to_ptr.vmem [resolvable:$true] %s3247
      %3250 = dma.vmem_to_hbm [thread:$0]  %s3248, 16, %s8, [#allocation10]
    $region45: #{tpu_custom_call.1} parent=1 // pred_fallthru
      _
    // Predicated region
    $region46: #{tpu_custom_call.1} parent=1 // pred_check
      _
    $region47: #{tpu_custom_call.1} parent=1 // pred_check_branch
      %3252 = sbr.rel (0) target = $region49
    $region48: #{tpu_custom_call.1} parent=1 // pred_region
      %3253 = dma.done [#allocation5], 256
    $region49: #{tpu_custom_call.1} parent=1 // pred_fallthru
      _
    // Predicated region
    $region50: #{tpu_custom_call.1} parent=1 // pred_check
      _
    $region51: #{tpu_custom_call.1} parent=1 // pred_check_branch
      %3255 = sbr.rel (0) target = $region53
    $region52: #{tpu_custom_call.1} parent=1 // pred_region
      %3256 = dma.done [#allocation10], 16
    $region53: #{tpu_custom_call.1} parent=1 // pred_fallthru
      _
    %3257 = vsyncpa [#allocation4], 1
    %3258 = vsyncpa [#allocation7], 1
    %3259 = vsyncpa [#allocation5], 1
    %3260 = vsyncpa [#allocation10], 1

</llo_original>
